<compile_context>
chip_gen: v7x
topology: tpu7x:2x2x1
jax: 0.10.0
libtpu: 0.0.40
codegen_flags: <defaults>
</compile_context>

<pallas_src>
import jax
import jax.numpy as jnp
from jax.experimental import pallas as pl
from jax.experimental.pallas import tpu as pltpu

_LANE = 128


def _vcritic_kernel(s_ref, a_ref,
                    w1s_ref, w1a_ref, b1_ref,
                    w2_ref, b2_ref,
                    w3_ref, b3_ref,
                    w4_ref, b4_ref,
                    o_ref):
    """One batch tile: s (TB,S) bf16, a (TB,A) bf16; per-critic weights; out (E, TB) f32."""
    s = s_ref[...]                      # bf16
    a = a_ref[...]                      # bf16
    num_critics = o_ref.shape[0]
    hidden = b1_ref.shape[-1]

    # Fused first layer across all critics: two wide-N MXU pushes -> (TB, E*H) f32.
    h_all = (jnp.dot(s, w1s_ref[...], preferred_element_type=jnp.float32)
             + jnp.dot(a, w1a_ref[...], preferred_element_type=jnp.float32))

    # Static unroll over the (small) critic ensemble.  For E >> 8 prefer
    # lax.fori_loop with dynamic w_ref[e] indexing to bound live ranges.
    for e in range(num_critics):
        h = h_all[:, e * hidden:(e + 1) * hidden] + b1_ref[e]       # f32
        h = jnp.maximum(h, 0.0)
        h = jnp.dot(h.astype(jnp.bfloat16), w2_ref[e],
                    preferred_element_type=jnp.float32) + b2_ref[e]
        h = jnp.maximum(h, 0.0)
        h = jnp.dot(h.astype(jnp.bfloat16), w3_ref[e],
                    preferred_element_type=jnp.float32) + b3_ref[e]
        h = jnp.maximum(h, 0.0)
        # Final (H -> 1) layer as f32 multiply + lane reduce: lane-dense (TB,) row,
        # no N=1 matmul and no lane-width-1 store.
        q = jnp.sum(h * w4_ref[e], axis=-1) + b4_ref[e]
        o_ref[e, :] = q.astype(o_ref.dtype)


def _choose_tiling(batch, tile_b):
    """Lane-aligned batch tiling; >=2 grid steps when the padded batch allows it."""
    tile_b = max(_LANE, (tile_b // _LANE) * _LANE)
    b_pad128 = ((batch + _LANE - 1) // _LANE) * _LANE
    if b_pad128 <= tile_b:
        if b_pad128 >= 2 * _LANE:
            # ~half the padded batch, rounded up to a lane multiple -> 2 grid steps
            # so both v7x TensorCores get work on the "parallel" axis.
            tb = ((b_pad128 // 2 + _LANE - 1) // _LANE) * _LANE
        else:
            tb = b_pad128
    else:
        tb = tile_b
    b_pad = ((batch + tb - 1) // tb) * tb
    return tb, b_pad


def vectorized_critic_forward(state, action, params, *, tile_b=2048):
    """VectorizedCritic.forward: returns (num_critics, B) float32 q-values."""
    w1, b1, w2, b2, w3, b3, w4, b4 = params
    E, D, H = w1.shape
    S = state.shape[-1]
    A = action.shape[-1]
    assert S + A == D, (S, A, D)
    B = state.shape[0]

    # --- weight prep (tiny, one-off) ----------------------------------------
    # Fused first layer: (E, D, H) -> (D, E*H), split into state/action halves so
    # the inputs never need a concat.  MXU operands in bf16, accumulation in f32.
    w1_big = jnp.transpose(w1, (1, 0, 2)).reshape(D, E * H).astype(jnp.bfloat16)
    w1s_big = w1_big[:S, :]                              # (S, E*H) bf16
    w1a_big = w1_big[S:, :]                              # (A, E*H) bf16
    b1_2d = b1[:, 0, :].astype(jnp.float32)              # (E, H)
    w2_bf = w2.astype(jnp.bfloat16)                      # (E, H, H)
    b2_2d = b2[:, 0, :].astype(jnp.float32)
    w3_bf = w3.astype(jnp.bfloat16)
    b3_2d = b3[:, 0, :].astype(jnp.float32)
    w4_2d = w4[:, :, 0].astype(jnp.float32)              # (E, H)  f32 (VPU mul+reduce)
    b4_2d = b4[:, :, 0].astype(jnp.float32)              # (E, 1)

    # --- input prep: bf16 + lane-aligned batch padding ----------------------
    state_bf = state.astype(jnp.bfloat16)
    action_bf = action.astype(jnp.bfloat16)
    TB, B_pad = _choose_tiling(B, tile_b)
    pad = B_pad - B
    if pad:
        state_bf = jnp.pad(state_bf, ((0, pad), (0, 0)))
        action_bf = jnp.pad(action_bf, ((0, pad), (0, 0)))
    grid = (B_pad // TB,)

    weights = (w1s_big, w1a_big, b1_2d, w2_bf, b2_2d, w3_bf, b3_2d, w4_2d, b4_2d)

    def build_call(weight_pipeline_mode):
        def batch_spec(ncols):
            return pl.BlockSpec((TB, ncols), lambda i: (i, 0))

        def const_spec(shape):
            nd = len(shape)
            if weight_pipeline_mode is None:
                return pl.BlockSpec(shape, lambda i, _nd=nd: (0,) * _nd)
            return pl.BlockSpec(shape, lambda i, _nd=nd: (0,) * _nd,
                                pipeline_mode=weight_pipeline_mode)

        return pl.pallas_call(
            _vcritic_kernel,
            out_shape=jax.ShapeDtypeStruct((E, B_pad), jnp.float32),
            grid=grid,
            in_specs=[batch_spec(S), batch_spec(A)]
                     + [const_spec(w.shape) for w in weights],
            out_specs=pl.BlockSpec((E, TB), lambda i: (0, i)),
            compiler_params=pltpu.CompilerParams(
                dimension_semantics=("parallel",)),
        )

    try:
        # Constant-index weight blocks: single-buffer them (their block index never
        # changes), halving resident-weight VMEM.
        out = build_call(pl.Buffered(1))(state_bf, action_bf, *weights)
    except Exception:
        # Fallback if this JAX build rejects pipeline_mode on these specs.
        out = build_call(None)(state_bf, action_bf, *weights)

    return out[:, :B]


def init_vectorized_critic_params(key, state_dim, action_dim, hidden_dim, num_critics):
    """Deterministic synthetic weights in VectorizedLinear layout:
       W (E, in, out), b (E, 1, out)."""
    D = state_dim + action_dim
    dims = [(D, hidden_dim), (hidden_dim, hidden_dim),
            (hidden_dim, hidden_dim), (hidden_dim, 1)]
    params = []
    for fan_in, fan_out in dims:
        key, kw, kb = jax.random.split(key, 3)
        bound = 1.0 / (fan_in ** 0.5)
        w = jax.random.uniform(kw, (num_critics, fan_in, fan_out),
                               jnp.float32, -bound, bound)
        b = jax.random.uniform(kb, (num_critics, 1, fan_out),
                               jnp.float32, -bound, bound)
        params += [w, b]
    return tuple(params)


def vectorized_critic_reference(state, action, params):
    """Pure-JAX reference mirroring the PyTorch module (bf16 MXU operands / f32 accum,
       matching the kernel's precision choices)."""
    w1, b1, w2, b2, w3, b3, w4, b4 = params
    x = jnp.concatenate([state, action], axis=-1).astype(jnp.bfloat16)   # (B, D)
    h = jnp.einsum('bd,edh->ebh', x, w1.astype(jnp.bfloat16),
                   preferred_element_type=jnp.float32) + b1
    h = jnp.maximum(h, 0.0)
    h = jnp.einsum('ebh,ehk->ebk', h.astype(jnp.bfloat16), w2.astype(jnp.bfloat16),
                   preferred_element_type=jnp.float32) + b2
    h = jnp.maximum(h, 0.0)
    h = jnp.einsum('ebh,ehk->ebk', h.astype(jnp.bfloat16), w3.astype(jnp.bfloat16),
                   preferred_element_type=jnp.float32) + b3
    h = jnp.maximum(h, 0.0)
    q = jnp.einsum('ebh,ehk->ebk', h, w4) + b4                            # f32 last layer
    return q[..., 0]                                                      # (E, B)


if __name__ == "__main__":
    batch, state_dim, action_dim, hidden_dim, num_critics = 2, 10, 6, 32, 4

    key = jax.random.PRNGKey(0)
    k_s, k_a, k_p = jax.random.split(key, 3)
    state = jax.random.normal(k_s, (batch, state_dim), jnp.float32)
    action = jax.random.normal(k_a, (batch, action_dim), jnp.float32)
    params = init_vectorized_critic_params(k_p, state_dim, action_dim,
                                           hidden_dim, num_critics)

    out = vectorized_critic_forward(state, action, params)
    out = jax.block_until_ready(out)

    ref = vectorized_critic_reference(state, action, params)
    assert out.shape == (num_critics, batch), out.shape
    # bf16 MXU operands (both kernel and reference) -> compare at bf16-level tolerance.
    assert jnp.allclose(out, ref, atol=1e-2, rtol=1e-2), float(jnp.max(jnp.abs(out - ref)))

    print("KERNEL_OK")
</pallas_src>

<mosaic_0001>
module attributes {stable_mosaic.version = 11 : i64} {
  func.func @_vcritic_kernel(%arg0: i32, %arg1: memref<128x10xbf16, #tpu.memory_space<vmem>>, %arg2: memref<128x6xbf16, #tpu.memory_space<vmem>>, %arg3: memref<10x128xbf16, #tpu.memory_space<vmem>>, %arg4: memref<6x128xbf16, #tpu.memory_space<vmem>>, %arg5: memref<4x32xf32, #tpu.memory_space<vmem>>, %arg6: memref<4x32x32xbf16, #tpu.memory_space<vmem>>, %arg7: memref<4x32xf32, #tpu.memory_space<vmem>>, %arg8: memref<4x32x32xbf16, #tpu.memory_space<vmem>>, %arg9: memref<4x32xf32, #tpu.memory_space<vmem>>, %arg10: memref<4x32xf32, #tpu.memory_space<vmem>>, %arg11: memref<4x1xf32, #tpu.memory_space<vmem>>, %arg12: memref<4x128xf32, #tpu.memory_space<vmem>>) attributes {dimension_semantics = [#tpu.dimension_semantics<parallel>], iteration_bounds = array<i64: 1>, scalar_prefetch = 0 : i64, scratch_operands = 0 : i64, tpu.core_type = #tpu.core_type<tc>, window_params = [{transform_indices = @transform_0, window_bounds = array<i64: 128, 10>}, {transform_indices = @transform_1, window_bounds = array<i64: 128, 6>}, {pipeline_mode = #tpu.pipeline_mode<synchronous>, transform_indices = @transform_2, window_bounds = array<i64: 10, 128>}, {pipeline_mode = #tpu.pipeline_mode<synchronous>, transform_indices = @transform_3, window_bounds = array<i64: 6, 128>}, {pipeline_mode = #tpu.pipeline_mode<synchronous>, transform_indices = @transform_4, window_bounds = array<i64: 4, 32>}, {pipeline_mode = #tpu.pipeline_mode<synchronous>, transform_indices = @transform_5, window_bounds = array<i64: 4, 32, 32>}, {pipeline_mode = #tpu.pipeline_mode<synchronous>, transform_indices = @transform_6, window_bounds = array<i64: 4, 32>}, {pipeline_mode = #tpu.pipeline_mode<synchronous>, transform_indices = @transform_7, window_bounds = array<i64: 4, 32, 32>}, {pipeline_mode = #tpu.pipeline_mode<synchronous>, transform_indices = @transform_8, window_bounds = array<i64: 4, 32>}, {pipeline_mode = #tpu.pipeline_mode<synchronous>, transform_indices = @transform_9, window_bounds = array<i64: 4, 32>}, {pipeline_mode = #tpu.pipeline_mode<synchronous>, transform_indices = @transform_10, window_bounds = array<i64: 4, 1>}, {transform_indices = @transform_11, window_bounds = array<i64: 4, 128>}]} {
    %c0 = arith.constant 0 : index
    %c0_0 = arith.constant 0 : index
    %0 = vector.load %arg1[%c0, %c0_0] : memref<128x10xbf16, #tpu.memory_space<vmem>>, vector<128x10xbf16>
    %c0_1 = arith.constant 0 : index
    %c0_2 = arith.constant 0 : index
    %1 = vector.load %arg2[%c0_1, %c0_2] : memref<128x6xbf16, #tpu.memory_space<vmem>>, vector<128x6xbf16>
    %c0_3 = arith.constant 0 : index
    %c0_4 = arith.constant 0 : index
    %2 = vector.load %arg3[%c0_3, %c0_4] : memref<10x128xbf16, #tpu.memory_space<vmem>>, vector<10x128xbf16>
    %cst = arith.constant dense<0.000000e+00> : vector<128x128xf32>
    %3 = tpu.matmul %0, %2, %cst {dimension_numbers = #tpu.dot_dimension_numbers<[1], [0], [0], [1], [0, 0, 1, 1], [], []>} : vector<128x10xbf16>, vector<10x128xbf16>, vector<128x128xf32> -> vector<128x128xf32>
    %c0_5 = arith.constant 0 : index
    %c0_6 = arith.constant 0 : index
    %4 = vector.load %arg4[%c0_5, %c0_6] : memref<6x128xbf16, #tpu.memory_space<vmem>>, vector<6x128xbf16>
    %cst_7 = arith.constant dense<0.000000e+00> : vector<128x128xf32>
    %5 = tpu.matmul %1, %4, %cst_7 {dimension_numbers = #tpu.dot_dimension_numbers<[1], [0], [0], [1], [0, 0, 1, 1], [], []>} : vector<128x6xbf16>, vector<6x128xbf16>, vector<128x128xf32> -> vector<128x128xf32>
    %6 = arith.addf %3, %5 : vector<128x128xf32>
    %7 = vector.extract_strided_slice %6 {offsets = [0, 0], sizes = [128, 32], strides = [1, 1]} : vector<128x128xf32> to vector<128x32xf32>
    %c0_8 = arith.constant 0 : index
    %c0_9 = arith.constant 0 : index
    %8 = vector.load %arg5[%c0_8, %c0_9] : memref<4x32xf32, #tpu.memory_space<vmem>>, vector<1x32xf32>
    %9 = vector.shape_cast %8 : vector<1x32xf32> to vector<32xf32>
    %10 = vector.shape_cast %9 : vector<32xf32> to vector<1x32xf32>
    %11 = vector.broadcast %10 : vector<1x32xf32> to vector<128x32xf32>
    %12 = arith.addf %7, %11 : vector<128x32xf32>
    %cst_10 = arith.constant 0.000000e+00 : f32
    %13 = vector.broadcast %cst_10 : f32 to vector<128x32xf32>
    %14 = arith.maximumf %12, %13 : vector<128x32xf32>
    %15 = arith.truncf %14 : vector<128x32xf32> to vector<128x32xbf16>
    %c0_11 = arith.constant 0 : index
    %c0_12 = arith.constant 0 : index
    %c0_13 = arith.constant 0 : index
    %16 = vector.load %arg6[%c0_11, %c0_12, %c0_13] : memref<4x32x32xbf16, #tpu.memory_space<vmem>>, vector<1x32x32xbf16>
    %17 = vector.shape_cast %16 : vector<1x32x32xbf16> to vector<32x32xbf16>
    %cst_14 = arith.constant dense<0.000000e+00> : vector<128x32xf32>
    %18 = tpu.matmul %15, %17, %cst_14 {dimension_numbers = #tpu.dot_dimension_numbers<[1], [0], [0], [1], [0, 0, 1, 1], [], []>} : vector<128x32xbf16>, vector<32x32xbf16>, vector<128x32xf32> -> vector<128x32xf32>
    %c0_15 = arith.constant 0 : index
    %c0_16 = arith.constant 0 : index
    %19 = vector.load %arg7[%c0_15, %c0_16] : memref<4x32xf32, #tpu.memory_space<vmem>>, vector<1x32xf32>
    %20 = vector.shape_cast %19 : vector<1x32xf32> to vector<32xf32>
    %21 = vector.shape_cast %20 : vector<32xf32> to vector<1x32xf32>
    %22 = vector.broadcast %21 : vector<1x32xf32> to vector<128x32xf32>
    %23 = arith.addf %18, %22 : vector<128x32xf32>
    %cst_17 = arith.constant 0.000000e+00 : f32
    %24 = vector.broadcast %cst_17 : f32 to vector<128x32xf32>
    %25 = arith.maximumf %23, %24 : vector<128x32xf32>
    %26 = arith.truncf %25 : vector<128x32xf32> to vector<128x32xbf16>
    %c0_18 = arith.constant 0 : index
    %c0_19 = arith.constant 0 : index
    %c0_20 = arith.constant 0 : index
    %27 = vector.load %arg8[%c0_18, %c0_19, %c0_20] : memref<4x32x32xbf16, #tpu.memory_space<vmem>>, vector<1x32x32xbf16>
    %28 = vector.shape_cast %27 : vector<1x32x32xbf16> to vector<32x32xbf16>
    %cst_21 = arith.constant dense<0.000000e+00> : vector<128x32xf32>
    %29 = tpu.matmul %26, %28, %cst_21 {dimension_numbers = #tpu.dot_dimension_numbers<[1], [0], [0], [1], [0, 0, 1, 1], [], []>} : vector<128x32xbf16>, vector<32x32xbf16>, vector<128x32xf32> -> vector<128x32xf32>
    %c0_22 = arith.constant 0 : index
    %c0_23 = arith.constant 0 : index
    %30 = vector.load %arg9[%c0_22, %c0_23] : memref<4x32xf32, #tpu.memory_space<vmem>>, vector<1x32xf32>
    %31 = vector.shape_cast %30 : vector<1x32xf32> to vector<32xf32>
    %32 = vector.shape_cast %31 : vector<32xf32> to vector<1x32xf32>
    %33 = vector.broadcast %32 : vector<1x32xf32> to vector<128x32xf32>
    %34 = arith.addf %29, %33 : vector<128x32xf32>
    %cst_24 = arith.constant 0.000000e+00 : f32
    %35 = vector.broadcast %cst_24 : f32 to vector<128x32xf32>
    %36 = arith.maximumf %34, %35 : vector<128x32xf32>
    %c0_25 = arith.constant 0 : index
    %c0_26 = arith.constant 0 : index
    %37 = vector.load %arg10[%c0_25, %c0_26] : memref<4x32xf32, #tpu.memory_space<vmem>>, vector<1x32xf32>
    %38 = vector.shape_cast %37 : vector<1x32xf32> to vector<32xf32>
    %39 = vector.shape_cast %38 : vector<32xf32> to vector<1x32xf32>
    %40 = vector.broadcast %39 : vector<1x32xf32> to vector<128x32xf32>
    %41 = arith.mulf %36, %40 : vector<128x32xf32>
    %cst_27 = arith.constant dense<0.000000e+00> : vector<128xf32>
    %42 = vector.multi_reduction <add>, %41, %cst_27 [1] : vector<128x32xf32> to vector<128xf32>
    %c0_28 = arith.constant 0 : index
    %c0_29 = arith.constant 0 : index
    %43 = vector.load %arg11[%c0_28, %c0_29] : memref<4x1xf32, #tpu.memory_space<vmem>>, vector<1x1xf32>
    %44 = vector.shape_cast %43 : vector<1x1xf32> to vector<1xf32>
    %45 = vector.broadcast %44 : vector<1xf32> to vector<128xf32>
    %46 = arith.addf %42, %45 : vector<128xf32>
    %c0_30 = arith.constant 0 : index
    %c0_31 = arith.constant 0 : index
    %47 = vector.load %arg12[%c0_30, %c0_31] : memref<4x128xf32, #tpu.memory_space<vmem>>, vector<1x128xf32>
    %48 = vector.shape_cast %47 : vector<1x128xf32> to vector<128xf32>
    %49 = vector.shape_cast %46 : vector<128xf32> to vector<1x128xf32>
    tpu.vector_store %arg12[%c0_30, %c0_31], %49 {strides = array<i32>} : memref<4x128xf32, #tpu.memory_space<vmem>>, vector<1x128xf32>,
    %50 = vector.extract_strided_slice %6 {offsets = [0, 32], sizes = [128, 32], strides = [1, 1]} : vector<128x128xf32> to vector<128x32xf32>
    %c1 = arith.constant 1 : index
    %c0_32 = arith.constant 0 : index
    %51 = vector.load %arg5[%c1, %c0_32] : memref<4x32xf32, #tpu.memory_space<vmem>>, vector<1x32xf32>
    %52 = vector.shape_cast %51 : vector<1x32xf32> to vector<32xf32>
    %53 = vector.shape_cast %52 : vector<32xf32> to vector<1x32xf32>
    %54 = vector.broadcast %53 : vector<1x32xf32> to vector<128x32xf32>
    %55 = arith.addf %50, %54 : vector<128x32xf32>
    %cst_33 = arith.constant 0.000000e+00 : f32
    %56 = vector.broadcast %cst_33 : f32 to vector<128x32xf32>
    %57 = arith.maximumf %55, %56 : vector<128x32xf32>
    %58 = arith.truncf %57 : vector<128x32xf32> to vector<128x32xbf16>
    %c1_34 = arith.constant 1 : index
    %c0_35 = arith.constant 0 : index
    %c0_36 = arith.constant 0 : index
    %59 = vector.load %arg6[%c1_34, %c0_35, %c0_36] : memref<4x32x32xbf16, #tpu.memory_space<vmem>>, vector<1x32x32xbf16>
    %60 = vector.shape_cast %59 : vector<1x32x32xbf16> to vector<32x32xbf16>
    %cst_37 = arith.constant dense<0.000000e+00> : vector<128x32xf32>
    %61 = tpu.matmul %58, %60, %cst_37 {dimension_numbers = #tpu.dot_dimension_numbers<[1], [0], [0], [1], [0, 0, 1, 1], [], []>} : vector<128x32xbf16>, vector<32x32xbf16>, vector<128x32xf32> -> vector<128x32xf32>
    %c1_38 = arith.constant 1 : index
    %c0_39 = arith.constant 0 : index
    %62 = vector.load %arg7[%c1_38, %c0_39] : memref<4x32xf32, #tpu.memory_space<vmem>>, vector<1x32xf32>
    %63 = vector.shape_cast %62 : vector<1x32xf32> to vector<32xf32>
    %64 = vector.shape_cast %63 : vector<32xf32> to vector<1x32xf32>
    %65 = vector.broadcast %64 : vector<1x32xf32> to vector<128x32xf32>
    %66 = arith.addf %61, %65 : vector<128x32xf32>
    %cst_40 = arith.constant 0.000000e+00 : f32
    %67 = vector.broadcast %cst_40 : f32 to vector<128x32xf32>
    %68 = arith.maximumf %66, %67 : vector<128x32xf32>
    %69 = arith.truncf %68 : vector<128x32xf32> to vector<128x32xbf16>
    %c1_41 = arith.constant 1 : index
    %c0_42 = arith.constant 0 : index
    %c0_43 = arith.constant 0 : index
    %70 = vector.load %arg8[%c1_41, %c0_42, %c0_43] : memref<4x32x32xbf16, #tpu.memory_space<vmem>>, vector<1x32x32xbf16>
    %71 = vector.shape_cast %70 : vector<1x32x32xbf16> to vector<32x32xbf16>
    %cst_44 = arith.constant dense<0.000000e+00> : vector<128x32xf32>
    %72 = tpu.matmul %69, %71, %cst_44 {dimension_numbers = #tpu.dot_dimension_numbers<[1], [0], [0], [1], [0, 0, 1, 1], [], []>} : vector<128x32xbf16>, vector<32x32xbf16>, vector<128x32xf32> -> vector<128x32xf32>
    %c1_45 = arith.constant 1 : index
    %c0_46 = arith.constant 0 : index
    %73 = vector.load %arg9[%c1_45, %c0_46] : memref<4x32xf32, #tpu.memory_space<vmem>>, vector<1x32xf32>
    %74 = vector.shape_cast %73 : vector<1x32xf32> to vector<32xf32>
    %75 = vector.shape_cast %74 : vector<32xf32> to vector<1x32xf32>
    %76 = vector.broadcast %75 : vector<1x32xf32> to vector<128x32xf32>
    %77 = arith.addf %72, %76 : vector<128x32xf32>
    %cst_47 = arith.constant 0.000000e+00 : f32
    %78 = vector.broadcast %cst_47 : f32 to vector<128x32xf32>
    %79 = arith.maximumf %77, %78 : vector<128x32xf32>
    %c1_48 = arith.constant 1 : index
    %c0_49 = arith.constant 0 : index
    %80 = vector.load %arg10[%c1_48, %c0_49] : memref<4x32xf32, #tpu.memory_space<vmem>>, vector<1x32xf32>
    %81 = vector.shape_cast %80 : vector<1x32xf32> to vector<32xf32>
    %82 = vector.shape_cast %81 : vector<32xf32> to vector<1x32xf32>
    %83 = vector.broadcast %82 : vector<1x32xf32> to vector<128x32xf32>
    %84 = arith.mulf %79, %83 : vector<128x32xf32>
    %cst_50 = arith.constant dense<0.000000e+00> : vector<128xf32>
    %85 = vector.multi_reduction <add>, %84, %cst_50 [1] : vector<128x32xf32> to vector<128xf32>
    %c1_51 = arith.constant 1 : index
    %c0_52 = arith.constant 0 : index
    %86 = vector.load %arg11[%c1_51, %c0_52] : memref<4x1xf32, #tpu.memory_space<vmem>>, vector<1x1xf32>
    %87 = vector.shape_cast %86 : vector<1x1xf32> to vector<1xf32>
    %88 = vector.broadcast %87 : vector<1xf32> to vector<128xf32>
    %89 = arith.addf %85, %88 : vector<128xf32>
    %c1_53 = arith.constant 1 : index
    %c0_54 = arith.constant 0 : index
    %90 = vector.load %arg12[%c1_53, %c0_54] : memref<4x128xf32, #tpu.memory_space<vmem>>, vector<1x128xf32>
    %91 = vector.shape_cast %90 : vector<1x128xf32> to vector<128xf32>
    %92 = vector.shape_cast %89 : vector<128xf32> to vector<1x128xf32>
    tpu.vector_store %arg12[%c1_53, %c0_54], %92 {strides = array<i32>} : memref<4x128xf32, #tpu.memory_space<vmem>>, vector<1x128xf32>,
    %93 = vector.extract_strided_slice %6 {offsets = [0, 64], sizes = [128, 32], strides = [1, 1]} : vector<128x128xf32> to vector<128x32xf32>
    %c2 = arith.constant 2 : index
    %c0_55 = arith.constant 0 : index
    %94 = vector.load %arg5[%c2, %c0_55] : memref<4x32xf32, #tpu.memory_space<vmem>>, vector<1x32xf32>
    %95 = vector.shape_cast %94 : vector<1x32xf32> to vector<32xf32>
    %96 = vector.shape_cast %95 : vector<32xf32> to vector<1x32xf32>
    %97 = vector.broadcast %96 : vector<1x32xf32> to vector<128x32xf32>
    %98 = arith.addf %93, %97 : vector<128x32xf32>
    %cst_56 = arith.constant 0.000000e+00 : f32
    %99 = vector.broadcast %cst_56 : f32 to vector<128x32xf32>
    %100 = arith.maximumf %98, %99 : vector<128x32xf32>
    %101 = arith.truncf %100 : vector<128x32xf32> to vector<128x32xbf16>
    %c2_57 = arith.constant 2 : index
    %c0_58 = arith.constant 0 : index
    %c0_59 = arith.constant 0 : index
    %102 = vector.load %arg6[%c2_57, %c0_58, %c0_59] : memref<4x32x32xbf16, #tpu.memory_space<vmem>>, vector<1x32x32xbf16>
    %103 = vector.shape_cast %102 : vector<1x32x32xbf16> to vector<32x32xbf16>
    %cst_60 = arith.constant dense<0.000000e+00> : vector<128x32xf32>
    %104 = tpu.matmul %101, %103, %cst_60 {dimension_numbers = #tpu.dot_dimension_numbers<[1], [0], [0], [1], [0, 0, 1, 1], [], []>} : vector<128x32xbf16>, vector<32x32xbf16>, vector<128x32xf32> -> vector<128x32xf32>
    %c2_61 = arith.constant 2 : index
    %c0_62 = arith.constant 0 : index
    %105 = vector.load %arg7[%c2_61, %c0_62] : memref<4x32xf32, #tpu.memory_space<vmem>>, vector<1x32xf32>
    %106 = vector.shape_cast %105 : vector<1x32xf32> to vector<32xf32>
    %107 = vector.shape_cast %106 : vector<32xf32> to vector<1x32xf32>
    %108 = vector.broadcast %107 : vector<1x32xf32> to vector<128x32xf32>
    %109 = arith.addf %104, %108 : vector<128x32xf32>
    %cst_63 = arith.constant 0.000000e+00 : f32
    %110 = vector.broadcast %cst_63 : f32 to vector<128x32xf32>
    %111 = arith.maximumf %109, %110 : vector<128x32xf32>
    %112 = arith.truncf %111 : vector<128x32xf32> to vector<128x32xbf16>
    %c2_64 = arith.constant 2 : index
    %c0_65 = arith.constant 0 : index
    %c0_66 = arith.constant 0 : index
    %113 = vector.load %arg8[%c2_64, %c0_65, %c0_66] : memref<4x32x32xbf16, #tpu.memory_space<vmem>>, vector<1x32x32xbf16>
    %114 = vector.shape_cast %113 : vector<1x32x32xbf16> to vector<32x32xbf16>
    %cst_67 = arith.constant dense<0.000000e+00> : vector<128x32xf32>
    %115 = tpu.matmul %112, %114, %cst_67 {dimension_numbers = #tpu.dot_dimension_numbers<[1], [0], [0], [1], [0, 0, 1, 1], [], []>} : vector<128x32xbf16>, vector<32x32xbf16>, vector<128x32xf32> -> vector<128x32xf32>
    %c2_68 = arith.constant 2 : index
    %c0_69 = arith.constant 0 : index
    %116 = vector.load %arg9[%c2_68, %c0_69] : memref<4x32xf32, #tpu.memory_space<vmem>>, vector<1x32xf32>
    %117 = vector.shape_cast %116 : vector<1x32xf32> to vector<32xf32>
    %118 = vector.shape_cast %117 : vector<32xf32> to vector<1x32xf32>
    %119 = vector.broadcast %118 : vector<1x32xf32> to vector<128x32xf32>
    %120 = arith.addf %115, %119 : vector<128x32xf32>
    %cst_70 = arith.constant 0.000000e+00 : f32
    %121 = vector.broadcast %cst_70 : f32 to vector<128x32xf32>
    %122 = arith.maximumf %120, %121 : vector<128x32xf32>
    %c2_71 = arith.constant 2 : index
    %c0_72 = arith.constant 0 : index
    %123 = vector.load %arg10[%c2_71, %c0_72] : memref<4x32xf32, #tpu.memory_space<vmem>>, vector<1x32xf32>
    %124 = vector.shape_cast %123 : vector<1x32xf32> to vector<32xf32>
    %125 = vector.shape_cast %124 : vector<32xf32> to vector<1x32xf32>
    %126 = vector.broadcast %125 : vector<1x32xf32> to vector<128x32xf32>
    %127 = arith.mulf %122, %126 : vector<128x32xf32>
    %cst_73 = arith.constant dense<0.000000e+00> : vector<128xf32>
    %128 = vector.multi_reduction <add>, %127, %cst_73 [1] : vector<128x32xf32> to vector<128xf32>
    %c2_74 = arith.constant 2 : index
    %c0_75 = arith.constant 0 : index
    %129 = vector.load %arg11[%c2_74, %c0_75] : memref<4x1xf32, #tpu.memory_space<vmem>>, vector<1x1xf32>
    %130 = vector.shape_cast %129 : vector<1x1xf32> to vector<1xf32>
    %131 = vector.broadcast %130 : vector<1xf32> to vector<128xf32>
    %132 = arith.addf %128, %131 : vector<128xf32>
    %c2_76 = arith.constant 2 : index
    %c0_77 = arith.constant 0 : index
    %133 = vector.load %arg12[%c2_76, %c0_77] : memref<4x128xf32, #tpu.memory_space<vmem>>, vector<1x128xf32>
    %134 = vector.shape_cast %133 : vector<1x128xf32> to vector<128xf32>
    %135 = vector.shape_cast %132 : vector<128xf32> to vector<1x128xf32>
    tpu.vector_store %arg12[%c2_76, %c0_77], %135 {strides = array<i32>} : memref<4x128xf32, #tpu.memory_space<vmem>>, vector<1x128xf32>,
    %136 = vector.extract_strided_slice %6 {offsets = [0, 96], sizes = [128, 32], strides = [1, 1]} : vector<128x128xf32> to vector<128x32xf32>
    %c3 = arith.constant 3 : index
    %c0_78 = arith.constant 0 : index
    %137 = vector.load %arg5[%c3, %c0_78] : memref<4x32xf32, #tpu.memory_space<vmem>>, vector<1x32xf32>
    %138 = vector.shape_cast %137 : vector<1x32xf32> to vector<32xf32>
    %139 = vector.shape_cast %138 : vector<32xf32> to vector<1x32xf32>
    %140 = vector.broadcast %139 : vector<1x32xf32> to vector<128x32xf32>
    %141 = arith.addf %136, %140 : vector<128x32xf32>
    %cst_79 = arith.constant 0.000000e+00 : f32
    %142 = vector.broadcast %cst_79 : f32 to vector<128x32xf32>
    %143 = arith.maximumf %141, %142 : vector<128x32xf32>
    %144 = arith.truncf %143 : vector<128x32xf32> to vector<128x32xbf16>
    %c3_80 = arith.constant 3 : index
    %c0_81 = arith.constant 0 : index
    %c0_82 = arith.constant 0 : index
    %145 = vector.load %arg6[%c3_80, %c0_81, %c0_82] : memref<4x32x32xbf16, #tpu.memory_space<vmem>>, vector<1x32x32xbf16>
    %146 = vector.shape_cast %145 : vector<1x32x32xbf16> to vector<32x32xbf16>
    %cst_83 = arith.constant dense<0.000000e+00> : vector<128x32xf32>
    %147 = tpu.matmul %144, %146, %cst_83 {dimension_numbers = #tpu.dot_dimension_numbers<[1], [0], [0], [1], [0, 0, 1, 1], [], []>} : vector<128x32xbf16>, vector<32x32xbf16>, vector<128x32xf32> -> vector<128x32xf32>
    %c3_84 = arith.constant 3 : index
    %c0_85 = arith.constant 0 : index
    %148 = vector.load %arg7[%c3_84, %c0_85] : memref<4x32xf32, #tpu.memory_space<vmem>>, vector<1x32xf32>
    %149 = vector.shape_cast %148 : vector<1x32xf32> to vector<32xf32>
    %150 = vector.shape_cast %149 : vector<32xf32> to vector<1x32xf32>
    %151 = vector.broadcast %150 : vector<1x32xf32> to vector<128x32xf32>
    %152 = arith.addf %147, %151 : vector<128x32xf32>
    %cst_86 = arith.constant 0.000000e+00 : f32
    %153 = vector.broadcast %cst_86 : f32 to vector<128x32xf32>
    %154 = arith.maximumf %152, %153 : vector<128x32xf32>
    %155 = arith.truncf %154 : vector<128x32xf32> to vector<128x32xbf16>
    %c3_87 = arith.constant 3 : index
    %c0_88 = arith.constant 0 : index
    %c0_89 = arith.constant 0 : index
    %156 = vector.load %arg8[%c3_87, %c0_88, %c0_89] : memref<4x32x32xbf16, #tpu.memory_space<vmem>>, vector<1x32x32xbf16>
    %157 = vector.shape_cast %156 : vector<1x32x32xbf16> to vector<32x32xbf16>
    %cst_90 = arith.constant dense<0.000000e+00> : vector<128x32xf32>
    %158 = tpu.matmul %155, %157, %cst_90 {dimension_numbers = #tpu.dot_dimension_numbers<[1], [0], [0], [1], [0, 0, 1, 1], [], []>} : vector<128x32xbf16>, vector<32x32xbf16>, vector<128x32xf32> -> vector<128x32xf32>
    %c3_91 = arith.constant 3 : index
    %c0_92 = arith.constant 0 : index
    %159 = vector.load %arg9[%c3_91, %c0_92] : memref<4x32xf32, #tpu.memory_space<vmem>>, vector<1x32xf32>
    %160 = vector.shape_cast %159 : vector<1x32xf32> to vector<32xf32>
    %161 = vector.shape_cast %160 : vector<32xf32> to vector<1x32xf32>
    %162 = vector.broadcast %161 : vector<1x32xf32> to vector<128x32xf32>
    %163 = arith.addf %158, %162 : vector<128x32xf32>
    %cst_93 = arith.constant 0.000000e+00 : f32
    %164 = vector.broadcast %cst_93 : f32 to vector<128x32xf32>
    %165 = arith.maximumf %163, %164 : vector<128x32xf32>
    %c3_94 = arith.constant 3 : index
    %c0_95 = arith.constant 0 : index
    %166 = vector.load %arg10[%c3_94, %c0_95] : memref<4x32xf32, #tpu.memory_space<vmem>>, vector<1x32xf32>
    %167 = vector.shape_cast %166 : vector<1x32xf32> to vector<32xf32>
    %168 = vector.shape_cast %167 : vector<32xf32> to vector<1x32xf32>
    %169 = vector.broadcast %168 : vector<1x32xf32> to vector<128x32xf32>
    %170 = arith.mulf %165, %169 : vector<128x32xf32>
    %cst_96 = arith.constant dense<0.000000e+00> : vector<128xf32>
    %171 = vector.multi_reduction <add>, %170, %cst_96 [1] : vector<128x32xf32> to vector<128xf32>
    %c3_97 = arith.constant 3 : index
    %c0_98 = arith.constant 0 : index
    %172 = vector.load %arg11[%c3_97, %c0_98] : memref<4x1xf32, #tpu.memory_space<vmem>>, vector<1x1xf32>
    %173 = vector.shape_cast %172 : vector<1x1xf32> to vector<1xf32>
    %174 = vector.broadcast %173 : vector<1xf32> to vector<128xf32>
    %175 = arith.addf %171, %174 : vector<128xf32>
    %c3_99 = arith.constant 3 : index
    %c0_100 = arith.constant 0 : index
    %176 = vector.load %arg12[%c3_99, %c0_100] : memref<4x128xf32, #tpu.memory_space<vmem>>, vector<1x128xf32>
    %177 = vector.shape_cast %176 : vector<1x128xf32> to vector<128xf32>
    %178 = vector.shape_cast %175 : vector<128xf32> to vector<1x128xf32>
    tpu.vector_store %arg12[%c3_99, %c0_100], %178 {strides = array<i32>} : memref<4x128xf32, #tpu.memory_space<vmem>>, vector<1x128xf32>,
    return
  }
  func.func @transform_0(%arg0: i32) -> (i32, i32) {
    %c0_i32 = arith.constant 0 : i32
    %c0_i32_0 = arith.constant 0 : i32
    return %arg0, %c0_i32 : i32, i32
  }
  func.func @transform_1(%arg0: i32) -> (i32, i32) {
    %c0_i32 = arith.constant 0 : i32
    %c0_i32_0 = arith.constant 0 : i32
    return %arg0, %c0_i32 : i32, i32
  }
  func.func @transform_2(%arg0: i32) -> (i32, i32) {
    %c0_i32 = arith.constant 0 : i32
    %c0_i32_0 = arith.constant 0 : i32
    %c0_i32_1 = arith.constant 0 : i32
    return %c0_i32, %c0_i32_0 : i32, i32
  }
  func.func @transform_3(%arg0: i32) -> (i32, i32) {
    %c0_i32 = arith.constant 0 : i32
    %c0_i32_0 = arith.constant 0 : i32
    %c0_i32_1 = arith.constant 0 : i32
    return %c0_i32, %c0_i32_0 : i32, i32
  }
  func.func @transform_4(%arg0: i32) -> (i32, i32) {
    %c0_i32 = arith.constant 0 : i32
    %c0_i32_0 = arith.constant 0 : i32
    %c0_i32_1 = arith.constant 0 : i32
    return %c0_i32, %c0_i32_0 : i32, i32
  }
  func.func @transform_5(%arg0: i32) -> (i32, i32, i32) {
    %c0_i32 = arith.constant 0 : i32
    %c0_i32_0 = arith.constant 0 : i32
    %c0_i32_1 = arith.constant 0 : i32
    %c0_i32_2 = arith.constant 0 : i32
    return %c0_i32, %c0_i32_0, %c0_i32_1 : i32, i32, i32
  }
  func.func @transform_6(%arg0: i32) -> (i32, i32) {
    %c0_i32 = arith.constant 0 : i32
    %c0_i32_0 = arith.constant 0 : i32
    %c0_i32_1 = arith.constant 0 : i32
    return %c0_i32, %c0_i32_0 : i32, i32
  }
  func.func @transform_7(%arg0: i32) -> (i32, i32, i32) {
    %c0_i32 = arith.constant 0 : i32
    %c0_i32_0 = arith.constant 0 : i32
    %c0_i32_1 = arith.constant 0 : i32
    %c0_i32_2 = arith.constant 0 : i32
    return %c0_i32, %c0_i32_0, %c0_i32_1 : i32, i32, i32
  }
  func.func @transform_8(%arg0: i32) -> (i32, i32) {
    %c0_i32 = arith.constant 0 : i32
    %c0_i32_0 = arith.constant 0 : i32
    %c0_i32_1 = arith.constant 0 : i32
    return %c0_i32, %c0_i32_0 : i32, i32
  }
  func.func @transform_9(%arg0: i32) -> (i32, i32) {
    %c0_i32 = arith.constant 0 : i32
    %c0_i32_0 = arith.constant 0 : i32
    %c0_i32_1 = arith.constant 0 : i32
    return %c0_i32, %c0_i32_0 : i32, i32
  }
  func.func @transform_10(%arg0: i32) -> (i32, i32) {
    %c0_i32 = arith.constant 0 : i32
    %c0_i32_0 = arith.constant 0 : i32
    %c0_i32_1 = arith.constant 0 : i32
    return %c0_i32, %c0_i32_0 : i32, i32
  }
  func.func @transform_11(%arg0: i32) -> (i32, i32) {
    %c0_i32 = arith.constant 0 : i32
    %c0_i32_0 = arith.constant 0 : i32
    return %c0_i32, %arg0 : i32, i32
  }
}

module attributes {stable_mosaic.version = 11 : i64} {
  func.func @_vcritic_kernel(%arg0: i32, %arg1: memref<128x10xbf16, #tpu.memory_space<vmem>>, %arg2: memref<128x6xbf16, #tpu.memory_space<vmem>>, %arg3: memref<10x128xbf16, #tpu.memory_space<vmem>>, %arg4: memref<6x128xbf16, #tpu.memory_space<vmem>>, %arg5: memref<4x32xf32, #tpu.memory_space<vmem>>, %arg6: memref<4x32x32xbf16, #tpu.memory_space<vmem>>, %arg7: memref<4x32xf32, #tpu.memory_space<vmem>>, %arg8: memref<4x32x32xbf16, #tpu.memory_space<vmem>>, %arg9: memref<4x32xf32, #tpu.memory_space<vmem>>, %arg10: memref<4x32xf32, #tpu.memory_space<vmem>>, %arg11: memref<4x1xf32, #tpu.memory_space<vmem>>, %arg12: memref<4x128xf32, #tpu.memory_space<vmem>>) attributes {dimension_semantics = [#tpu.dimension_semantics<parallel>], iteration_bounds = array<i64: 1>, scalar_prefetch = 0 : i64, scratch_operands = 0 : i64, tpu.core_type = #tpu.core_type<tc>, window_params = [{transform_indices = @transform_0, window_bounds = array<i64: 128, 10>}, {transform_indices = @transform_1, window_bounds = array<i64: 128, 6>}, {pipeline_mode = #tpu.pipeline_mode<synchronous>, transform_indices = @transform_2, window_bounds = array<i64: 10, 128>}, {pipeline_mode = #tpu.pipeline_mode<synchronous>, transform_indices = @transform_3, window_bounds = array<i64: 6, 128>}, {pipeline_mode = #tpu.pipeline_mode<synchronous>, transform_indices = @transform_4, window_bounds = array<i64: 4, 32>}, {pipeline_mode = #tpu.pipeline_mode<synchronous>, transform_indices = @transform_5, window_bounds = array<i64: 4, 32, 32>}, {pipeline_mode = #tpu.pipeline_mode<synchronous>, transform_indices = @transform_6, window_bounds = array<i64: 4, 32>}, {pipeline_mode = #tpu.pipeline_mode<synchronous>, transform_indices = @transform_7, window_bounds = array<i64: 4, 32, 32>}, {pipeline_mode = #tpu.pipeline_mode<synchronous>, transform_indices = @transform_8, window_bounds = array<i64: 4, 32>}, {pipeline_mode = #tpu.pipeline_mode<synchronous>, transform_indices = @transform_9, window_bounds = array<i64: 4, 32>}, {pipeline_mode = #tpu.pipeline_mode<synchronous>, transform_indices = @transform_10, window_bounds = array<i64: 4, 1>}, {transform_indices = @transform_11, window_bounds = array<i64: 4, 128>}]} {
    %c0 = arith.constant 0 : index
    %c0_0 = arith.constant 0 : index
    %0 = vector.load %arg1[%c0, %c0_0] : memref<128x10xbf16, #tpu.memory_space<vmem>>, vector<128x10xbf16>
    %c0_1 = arith.constant 0 : index
    %c0_2 = arith.constant 0 : index
    %1 = vector.load %arg2[%c0_1, %c0_2] : memref<128x6xbf16, #tpu.memory_space<vmem>>, vector<128x6xbf16>
    %c0_3 = arith.constant 0 : index
    %c0_4 = arith.constant 0 : index
    %2 = vector.load %arg3[%c0_3, %c0_4] : memref<10x128xbf16, #tpu.memory_space<vmem>>, vector<10x128xbf16>
    %cst = arith.constant dense<0.000000e+00> : vector<128x128xf32>
    %3 = tpu.matmul %0, %2, %cst {dimension_numbers = #tpu.dot_dimension_numbers<[1], [0], [0], [1], [0, 0, 1, 1], [], []>} : vector<128x10xbf16>, vector<10x128xbf16>, vector<128x128xf32> -> vector<128x128xf32>
    %c0_5 = arith.constant 0 : index
    %c0_6 = arith.constant 0 : index
    %4 = vector.load %arg4[%c0_5, %c0_6] : memref<6x128xbf16, #tpu.memory_space<vmem>>, vector<6x128xbf16>
    %cst_7 = arith.constant dense<0.000000e+00> : vector<128x128xf32>
    %5 = tpu.matmul %1, %4, %cst_7 {dimension_numbers = #tpu.dot_dimension_numbers<[1], [0], [0], [1], [0, 0, 1, 1], [], []>} : vector<128x6xbf16>, vector<6x128xbf16>, vector<128x128xf32> -> vector<128x128xf32>
    %6 = arith.addf %3, %5 : vector<128x128xf32>
    %7 = vector.extract_strided_slice %6 {offsets = [0, 0], sizes = [128, 32], strides = [1, 1]} : vector<128x128xf32> to vector<128x32xf32>
    %c0_8 = arith.constant 0 : index
    %c0_9 = arith.constant 0 : index
    %8 = vector.load %arg5[%c0_8, %c0_9] : memref<4x32xf32, #tpu.memory_space<vmem>>, vector<1x32xf32>
    %9 = vector.shape_cast %8 : vector<1x32xf32> to vector<32xf32>
    %10 = vector.shape_cast %9 : vector<32xf32> to vector<1x32xf32>
    %11 = vector.broadcast %10 : vector<1x32xf32> to vector<128x32xf32>
    %12 = arith.addf %7, %11 : vector<128x32xf32>
    %cst_10 = arith.constant 0.000000e+00 : f32
    %13 = vector.broadcast %cst_10 : f32 to vector<128x32xf32>
    %14 = arith.maximumf %12, %13 : vector<128x32xf32>
    %15 = arith.truncf %14 : vector<128x32xf32> to vector<128x32xbf16>
    %c0_11 = arith.constant 0 : index
    %c0_12 = arith.constant 0 : index
    %c0_13 = arith.constant 0 : index
    %16 = vector.load %arg6[%c0_11, %c0_12, %c0_13] : memref<4x32x32xbf16, #tpu.memory_space<vmem>>, vector<1x32x32xbf16>
    %17 = vector.shape_cast %16 : vector<1x32x32xbf16> to vector<32x32xbf16>
    %cst_14 = arith.constant dense<0.000000e+00> : vector<128x32xf32>
    %18 = tpu.matmul %15, %17, %cst_14 {dimension_numbers = #tpu.dot_dimension_numbers<[1], [0], [0], [1], [0, 0, 1, 1], [], []>} : vector<128x32xbf16>, vector<32x32xbf16>, vector<128x32xf32> -> vector<128x32xf32>
    %c0_15 = arith.constant 0 : index
    %c0_16 = arith.constant 0 : index
    %19 = vector.load %arg7[%c0_15, %c0_16] : memref<4x32xf32, #tpu.memory_space<vmem>>, vector<1x32xf32>
    %20 = vector.shape_cast %19 : vector<1x32xf32> to vector<32xf32>
    %21 = vector.shape_cast %20 : vector<32xf32> to vector<1x32xf32>
    %22 = vector.broadcast %21 : vector<1x32xf32> to vector<128x32xf32>
    %23 = arith.addf %18, %22 : vector<128x32xf32>
    %cst_17 = arith.constant 0.000000e+00 : f32
    %24 = vector.broadcast %cst_17 : f32 to vector<128x32xf32>
    %25 = arith.maximumf %23, %24 : vector<128x32xf32>
    %26 = arith.truncf %25 : vector<128x32xf32> to vector<128x32xbf16>
    %c0_18 = arith.constant 0 : index
    %c0_19 = arith.constant 0 : index
    %c0_20 = arith.constant 0 : index
    %27 = vector.load %arg8[%c0_18, %c0_19, %c0_20] : memref<4x32x32xbf16, #tpu.memory_space<vmem>>, vector<1x32x32xbf16>
    %28 = vector.shape_cast %27 : vector<1x32x32xbf16> to vector<32x32xbf16>
    %cst_21 = arith.constant dense<0.000000e+00> : vector<128x32xf32>
    %29 = tpu.matmul %26, %28, %cst_21 {dimension_numbers = #tpu.dot_dimension_numbers<[1], [0], [0], [1], [0, 0, 1, 1], [], []>} : vector<128x32xbf16>, vector<32x32xbf16>, vector<128x32xf32> -> vector<128x32xf32>
    %c0_22 = arith.constant 0 : index
    %c0_23 = arith.constant 0 : index
    %30 = vector.load %arg9[%c0_22, %c0_23] : memref<4x32xf32, #tpu.memory_space<vmem>>, vector<1x32xf32>
    %31 = vector.shape_cast %30 : vector<1x32xf32> to vector<32xf32>
    %32 = vector.shape_cast %31 : vector<32xf32> to vector<1x32xf32>
    %33 = vector.broadcast %32 : vector<1x32xf32> to vector<128x32xf32>
    %34 = arith.addf %29, %33 : vector<128x32xf32>
    %cst_24 = arith.constant 0.000000e+00 : f32
    %35 = vector.broadcast %cst_24 : f32 to vector<128x32xf32>
    %36 = arith.maximumf %34, %35 : vector<128x32xf32>
    %c0_25 = arith.constant 0 : index
    %c0_26 = arith.constant 0 : index
    %37 = vector.load %arg10[%c0_25, %c0_26] : memref<4x32xf32, #tpu.memory_space<vmem>>, vector<1x32xf32>
    %38 = vector.shape_cast %37 : vector<1x32xf32> to vector<32xf32>
    %39 = vector.shape_cast %38 : vector<32xf32> to vector<1x32xf32>
    %40 = vector.broadcast %39 : vector<1x32xf32> to vector<128x32xf32>
    %41 = arith.mulf %36, %40 : vector<128x32xf32>
    %cst_27 = arith.constant dense<0.000000e+00> : vector<128xf32>
    %42 = vector.multi_reduction <add>, %41, %cst_27 [1] : vector<128x32xf32> to vector<128xf32>
    %c0_28 = arith.constant 0 : index
    %c0_29 = arith.constant 0 : index
    %43 = vector.load %arg11[%c0_28, %c0_29] : memref<4x1xf32, #tpu.memory_space<vmem>>, vector<1x1xf32>
    %44 = vector.shape_cast %43 : vector<1x1xf32> to vector<1xf32>
    %45 = vector.broadcast %44 : vector<1xf32> to vector<128xf32>
    %46 = arith.addf %42, %45 : vector<128xf32>
    %c0_30 = arith.constant 0 : index
    %c0_31 = arith.constant 0 : index
    %47 = vector.load %arg12[%c0_30, %c0_31] : memref<4x128xf32, #tpu.memory_space<vmem>>, vector<1x128xf32>
    %48 = vector.shape_cast %47 : vector<1x128xf32> to vector<128xf32>
    %49 = vector.shape_cast %46 : vector<128xf32> to vector<1x128xf32>
    tpu.vector_store %arg12[%c0_30, %c0_31], %49 {strides = array<i32>} : memref<4x128xf32, #tpu.memory_space<vmem>>, vector<1x128xf32>,
    %50 = vector.extract_strided_slice %6 {offsets = [0, 32], sizes = [128, 32], strides = [1, 1]} : vector<128x128xf32> to vector<128x32xf32>
    %c1 = arith.constant 1 : index
    %c0_32 = arith.constant 0 : index
    %51 = vector.load %arg5[%c1, %c0_32] : memref<4x32xf32, #tpu.memory_space<vmem>>, vector<1x32xf32>
    %52 = vector.shape_cast %51 : vector<1x32xf32> to vector<32xf32>
    %53 = vector.shape_cast %52 : vector<32xf32> to vector<1x32xf32>
    %54 = vector.broadcast %53 : vector<1x32xf32> to vector<128x32xf32>
    %55 = arith.addf %50, %54 : vector<128x32xf32>
    %cst_33 = arith.constant 0.000000e+00 : f32
    %56 = vector.broadcast %cst_33 : f32 to vector<128x32xf32>
    %57 = arith.maximumf %55, %56 : vector<128x32xf32>
    %58 = arith.truncf %57 : vector<128x32xf32> to vector<128x32xbf16>
    %c1_34 = arith.constant 1 : index
    %c0_35 = arith.constant 0 : index
    %c0_36 = arith.constant 0 : index
    %59 = vector.load %arg6[%c1_34, %c0_35, %c0_36] : memref<4x32x32xbf16, #tpu.memory_space<vmem>>, vector<1x32x32xbf16>
    %60 = vector.shape_cast %59 : vector<1x32x32xbf16> to vector<32x32xbf16>
    %cst_37 = arith.constant dense<0.000000e+00> : vector<128x32xf32>
    %61 = tpu.matmul %58, %60, %cst_37 {dimension_numbers = #tpu.dot_dimension_numbers<[1], [0], [0], [1], [0, 0, 1, 1], [], []>} : vector<128x32xbf16>, vector<32x32xbf16>, vector<128x32xf32> -> vector<128x32xf32>
    %c1_38 = arith.constant 1 : index
    %c0_39 = arith.constant 0 : index
    %62 = vector.load %arg7[%c1_38, %c0_39] : memref<4x32xf32, #tpu.memory_space<vmem>>, vector<1x32xf32>
    %63 = vector.shape_cast %62 : vector<1x32xf32> to vector<32xf32>
    %64 = vector.shape_cast %63 : vector<32xf32> to vector<1x32xf32>
    %65 = vector.broadcast %64 : vector<1x32xf32> to vector<128x32xf32>
    %66 = arith.addf %61, %65 : vector<128x32xf32>
    %cst_40 = arith.constant 0.000000e+00 : f32
    %67 = vector.broadcast %cst_40 : f32 to vector<128x32xf32>
    %68 = arith.maximumf %66, %67 : vector<128x32xf32>
    %69 = arith.truncf %68 : vector<128x32xf32> to vector<128x32xbf16>
    %c1_41 = arith.constant 1 : index
    %c0_42 = arith.constant 0 : index
    %c0_43 = arith.constant 0 : index
    %70 = vector.load %arg8[%c1_41, %c0_42, %c0_43] : memref<4x32x32xbf16, #tpu.memory_space<vmem>>, vector<1x32x32xbf16>
    %71 = vector.shape_cast %70 : vector<1x32x32xbf16> to vector<32x32xbf16>
    %cst_44 = arith.constant dense<0.000000e+00> : vector<128x32xf32>
    %72 = tpu.matmul %69, %71, %cst_44 {dimension_numbers = #tpu.dot_dimension_numbers<[1], [0], [0], [1], [0, 0, 1, 1], [], []>} : vector<128x32xbf16>, vector<32x32xbf16>, vector<128x32xf32> -> vector<128x32xf32>
    %c1_45 = arith.constant 1 : index
    %c0_46 = arith.constant 0 : index
    %73 = vector.load %arg9[%c1_45, %c0_46] : memref<4x32xf32, #tpu.memory_space<vmem>>, vector<1x32xf32>
    %74 = vector.shape_cast %73 : vector<1x32xf32> to vector<32xf32>
    %75 = vector.shape_cast %74 : vector<32xf32> to vector<1x32xf32>
    %76 = vector.broadcast %75 : vector<1x32xf32> to vector<128x32xf32>
    %77 = arith.addf %72, %76 : vector<128x32xf32>
    %cst_47 = arith.constant 0.000000e+00 : f32
    %78 = vector.broadcast %cst_47 : f32 to vector<128x32xf32>
    %79 = arith.maximumf %77, %78 : vector<128x32xf32>
    %c1_48 = arith.constant 1 : index
    %c0_49 = arith.constant 0 : index
    %80 = vector.load %arg10[%c1_48, %c0_49] : memref<4x32xf32, #tpu.memory_space<vmem>>, vector<1x32xf32>
    %81 = vector.shape_cast %80 : vector<1x32xf32> to vector<32xf32>
    %82 = vector.shape_cast %81 : vector<32xf32> to vector<1x32xf32>
    %83 = vector.broadcast %82 : vector<1x32xf32> to vector<128x32xf32>
    %84 = arith.mulf %79, %83 : vector<128x32xf32>
    %cst_50 = arith.constant dense<0.000000e+00> : vector<128xf32>
    %85 = vector.multi_reduction <add>, %84, %cst_50 [1] : vector<128x32xf32> to vector<128xf32>
    %c1_51 = arith.constant 1 : index
    %c0_52 = arith.constant 0 : index
    %86 = vector.load %arg11[%c1_51, %c0_52] : memref<4x1xf32, #tpu.memory_space<vmem>>, vector<1x1xf32>
    %87 = vector.shape_cast %86 : vector<1x1xf32> to vector<1xf32>
    %88 = vector.broadcast %87 : vector<1xf32> to vector<128xf32>
    %89 = arith.addf %85, %88 : vector<128xf32>
    %c1_53 = arith.constant 1 : index
    %c0_54 = arith.constant 0 : index
    %90 = vector.load %arg12[%c1_53, %c0_54] : memref<4x128xf32, #tpu.memory_space<vmem>>, vector<1x128xf32>
    %91 = vector.shape_cast %90 : vector<1x128xf32> to vector<128xf32>
    %92 = vector.shape_cast %89 : vector<128xf32> to vector<1x128xf32>
    tpu.vector_store %arg12[%c1_53, %c0_54], %92 {strides = array<i32>} : memref<4x128xf32, #tpu.memory_space<vmem>>, vector<1x128xf32>,
    %93 = vector.extract_strided_slice %6 {offsets = [0, 64], sizes = [128, 32], strides = [1, 1]} : vector<128x128xf32> to vector<128x32xf32>
    %c2 = arith.constant 2 : index
    %c0_55 = arith.constant 0 : index
    %94 = vector.load %arg5[%c2, %c0_55] : memref<4x32xf32, #tpu.memory_space<vmem>>, vector<1x32xf32>
    %95 = vector.shape_cast %94 : vector<1x32xf32> to vector<32xf32>
    %96 = vector.shape_cast %95 : vector<32xf32> to vector<1x32xf32>
    %97 = vector.broadcast %96 : vector<1x32xf32> to vector<128x32xf32>
    %98 = arith.addf %93, %97 : vector<128x32xf32>
    %cst_56 = arith.constant 0.000000e+00 : f32
    %99 = vector.broadcast %cst_56 : f32 to vector<128x32xf32>
    %100 = arith.maximumf %98, %99 : vector<128x32xf32>
    %101 = arith.truncf %100 : vector<128x32xf32> to vector<128x32xbf16>
    %c2_57 = arith.constant 2 : index
    %c0_58 = arith.constant 0 : index
    %c0_59 = arith.constant 0 : index
    %102 = vector.load %arg6[%c2_57, %c0_58, %c0_59] : memref<4x32x32xbf16, #tpu.memory_space<vmem>>, vector<1x32x32xbf16>
    %103 = vector.shape_cast %102 : vector<1x32x32xbf16> to vector<32x32xbf16>
    %cst_60 = arith.constant dense<0.000000e+00> : vector<128x32xf32>
    %104 = tpu.matmul %101, %103, %cst_60 {dimension_numbers = #tpu.dot_dimension_numbers<[1], [0], [0], [1], [0, 0, 1, 1], [], []>} : vector<128x32xbf16>, vector<32x32xbf16>, vector<128x32xf32> -> vector<128x32xf32>
    %c2_61 = arith.constant 2 : index
    %c0_62 = arith.constant 0 : index
    %105 = vector.load %arg7[%c2_61, %c0_62] : memref<4x32xf32, #tpu.memory_space<vmem>>, vector<1x32xf32>
    %106 = vector.shape_cast %105 : vector<1x32xf32> to vector<32xf32>
    %107 = vector.shape_cast %106 : vector<32xf32> to vector<1x32xf32>
    %108 = vector.broadcast %107 : vector<1x32xf32> to vector<128x32xf32>
    %109 = arith.addf %104, %108 : vector<128x32xf32>
    %cst_63 = arith.constant 0.000000e+00 : f32
    %110 = vector.broadcast %cst_63 : f32 to vector<128x32xf32>
    %111 = arith.maximumf %109, %110 : vector<128x32xf32>
    %112 = arith.truncf %111 : vector<128x32xf32> to vector<128x32xbf16>
    %c2_64 = arith.constant 2 : index
    %c0_65 = arith.constant 0 : index
    %c0_66 = arith.constant 0 : index
    %113 = vector.load %arg8[%c2_64, %c0_65, %c0_66] : memref<4x32x32xbf16, #tpu.memory_space<vmem>>, vector<1x32x32xbf16>
    %114 = vector.shape_cast %113 : vector<1x32x32xbf16> to vector<32x32xbf16>
    %cst_67 = arith.constant dense<0.000000e+00> : vector<128x32xf32>
    %115 = tpu.matmul %112, %114, %cst_67 {dimension_numbers = #tpu.dot_dimension_numbers<[1], [0], [0], [1], [0, 0, 1, 1], [], []>} : vector<128x32xbf16>, vector<32x32xbf16>, vector<128x32xf32> -> vector<128x32xf32>
    %c2_68 = arith.constant 2 : index
    %c0_69 = arith.constant 0 : index
    %116 = vector.load %arg9[%c2_68, %c0_69] : memref<4x32xf32, #tpu.memory_space<vmem>>, vector<1x32xf32>
    %117 = vector.shape_cast %116 : vector<1x32xf32> to vector<32xf32>
    %118 = vector.shape_cast %117 : vector<32xf32> to vector<1x32xf32>
    %119 = vector.broadcast %118 : vector<1x32xf32> to vector<128x32xf32>
    %120 = arith.addf %115, %119 : vector<128x32xf32>
    %cst_70 = arith.constant 0.000000e+00 : f32
    %121 = vector.broadcast %cst_70 : f32 to vector<128x32xf32>
    %122 = arith.maximumf %120, %121 : vector<128x32xf32>
    %c2_71 = arith.constant 2 : index
    %c0_72 = arith.constant 0 : index
    %123 = vector.load %arg10[%c2_71, %c0_72] : memref<4x32xf32, #tpu.memory_space<vmem>>, vector<1x32xf32>
    %124 = vector.shape_cast %123 : vector<1x32xf32> to vector<32xf32>
    %125 = vector.shape_cast %124 : vector<32xf32> to vector<1x32xf32>
    %126 = vector.broadcast %125 : vector<1x32xf32> to vector<128x32xf32>
    %127 = arith.mulf %122, %126 : vector<128x32xf32>
    %cst_73 = arith.constant dense<0.000000e+00> : vector<128xf32>
    %128 = vector.multi_reduction <add>, %127, %cst_73 [1] : vector<128x32xf32> to vector<128xf32>
    %c2_74 = arith.constant 2 : index
    %c0_75 = arith.constant 0 : index
    %129 = vector.load %arg11[%c2_74, %c0_75] : memref<4x1xf32, #tpu.memory_space<vmem>>, vector<1x1xf32>
    %130 = vector.shape_cast %129 : vector<1x1xf32> to vector<1xf32>
    %131 = vector.broadcast %130 : vector<1xf32> to vector<128xf32>
    %132 = arith.addf %128, %131 : vector<128xf32>
    %c2_76 = arith.constant 2 : index
    %c0_77 = arith.constant 0 : index
    %133 = vector.load %arg12[%c2_76, %c0_77] : memref<4x128xf32, #tpu.memory_space<vmem>>, vector<1x128xf32>
    %134 = vector.shape_cast %133 : vector<1x128xf32> to vector<128xf32>
    %135 = vector.shape_cast %132 : vector<128xf32> to vector<1x128xf32>
    tpu.vector_store %arg12[%c2_76, %c0_77], %135 {strides = array<i32>} : memref<4x128xf32, #tpu.memory_space<vmem>>, vector<1x128xf32>,
    %136 = vector.extract_strided_slice %6 {offsets = [0, 96], sizes = [128, 32], strides = [1, 1]} : vector<128x128xf32> to vector<128x32xf32>
    %c3 = arith.constant 3 : index
    %c0_78 = arith.constant 0 : index
    %137 = vector.load %arg5[%c3, %c0_78] : memref<4x32xf32, #tpu.memory_space<vmem>>, vector<1x32xf32>
    %138 = vector.shape_cast %137 : vector<1x32xf32> to vector<32xf32>
    %139 = vector.shape_cast %138 : vector<32xf32> to vector<1x32xf32>
    %140 = vector.broadcast %139 : vector<1x32xf32> to vector<128x32xf32>
    %141 = arith.addf %136, %140 : vector<128x32xf32>
    %cst_79 = arith.constant 0.000000e+00 : f32
    %142 = vector.broadcast %cst_79 : f32 to vector<128x32xf32>
    %143 = arith.maximumf %141, %142 : vector<128x32xf32>
    %144 = arith.truncf %143 : vector<128x32xf32> to vector<128x32xbf16>
    %c3_80 = arith.constant 3 : index
    %c0_81 = arith.constant 0 : index
    %c0_82 = arith.constant 0 : index
    %145 = vector.load %arg6[%c3_80, %c0_81, %c0_82] : memref<4x32x32xbf16, #tpu.memory_space<vmem>>, vector<1x32x32xbf16>
    %146 = vector.shape_cast %145 : vector<1x32x32xbf16> to vector<32x32xbf16>
    %cst_83 = arith.constant dense<0.000000e+00> : vector<128x32xf32>
    %147 = tpu.matmul %144, %146, %cst_83 {dimension_numbers = #tpu.dot_dimension_numbers<[1], [0], [0], [1], [0, 0, 1, 1], [], []>} : vector<128x32xbf16>, vector<32x32xbf16>, vector<128x32xf32> -> vector<128x32xf32>
    %c3_84 = arith.constant 3 : index
    %c0_85 = arith.constant 0 : index
    %148 = vector.load %arg7[%c3_84, %c0_85] : memref<4x32xf32, #tpu.memory_space<vmem>>, vector<1x32xf32>
    %149 = vector.shape_cast %148 : vector<1x32xf32> to vector<32xf32>
    %150 = vector.shape_cast %149 : vector<32xf32> to vector<1x32xf32>
    %151 = vector.broadcast %150 : vector<1x32xf32> to vector<128x32xf32>
    %152 = arith.addf %147, %151 : vector<128x32xf32>
    %cst_86 = arith.constant 0.000000e+00 : f32
    %153 = vector.broadcast %cst_86 : f32 to vector<128x32xf32>
    %154 = arith.maximumf %152, %153 : vector<128x32xf32>
    %155 = arith.truncf %154 : vector<128x32xf32> to vector<128x32xbf16>
    %c3_87 = arith.constant 3 : index
    %c0_88 = arith.constant 0 : index
    %c0_89 = arith.constant 0 : index
    %156 = vector.load %arg8[%c3_87, %c0_88, %c0_89] : memref<4x32x32xbf16, #tpu.memory_space<vmem>>, vector<1x32x32xbf16>
    %157 = vector.shape_cast %156 : vector<1x32x32xbf16> to vector<32x32xbf16>
    %cst_90 = arith.constant dense<0.000000e+00> : vector<128x32xf32>
    %158 = tpu.matmul %155, %157, %cst_90 {dimension_numbers = #tpu.dot_dimension_numbers<[1], [0], [0], [1], [0, 0, 1, 1], [], []>} : vector<128x32xbf16>, vector<32x32xbf16>, vector<128x32xf32> -> vector<128x32xf32>
    %c3_91 = arith.constant 3 : index
    %c0_92 = arith.constant 0 : index
    %159 = vector.load %arg9[%c3_91, %c0_92] : memref<4x32xf32, #tpu.memory_space<vmem>>, vector<1x32xf32>
    %160 = vector.shape_cast %159 : vector<1x32xf32> to vector<32xf32>
    %161 = vector.shape_cast %160 : vector<32xf32> to vector<1x32xf32>
    %162 = vector.broadcast %161 : vector<1x32xf32> to vector<128x32xf32>
    %163 = arith.addf %158, %162 : vector<128x32xf32>
    %cst_93 = arith.constant 0.000000e+00 : f32
    %164 = vector.broadcast %cst_93 : f32 to vector<128x32xf32>
    %165 = arith.maximumf %163, %164 : vector<128x32xf32>
    %c3_94 = arith.constant 3 : index
    %c0_95 = arith.constant 0 : index
    %166 = vector.load %arg10[%c3_94, %c0_95] : memref<4x32xf32, #tpu.memory_space<vmem>>, vector<1x32xf32>
    %167 = vector.shape_cast %166 : vector<1x32xf32> to vector<32xf32>
    %168 = vector.shape_cast %167 : vector<32xf32> to vector<1x32xf32>
    %169 = vector.broadcast %168 : vector<1x32xf32> to vector<128x32xf32>
    %170 = arith.mulf %165, %169 : vector<128x32xf32>
    %cst_96 = arith.constant dense<0.000000e+00> : vector<128xf32>
    %171 = vector.multi_reduction <add>, %170, %cst_96 [1] : vector<128x32xf32> to vector<128xf32>
    %c3_97 = arith.constant 3 : index
    %c0_98 = arith.constant 0 : index
    %172 = vector.load %arg11[%c3_97, %c0_98] : memref<4x1xf32, #tpu.memory_space<vmem>>, vector<1x1xf32>
    %173 = vector.shape_cast %172 : vector<1x1xf32> to vector<1xf32>
    %174 = vector.broadcast %173 : vector<1xf32> to vector<128xf32>
    %175 = arith.addf %171, %174 : vector<128xf32>
    %c3_99 = arith.constant 3 : index
    %c0_100 = arith.constant 0 : index
    %176 = vector.load %arg12[%c3_99, %c0_100] : memref<4x128xf32, #tpu.memory_space<vmem>>, vector<1x128xf32>
    %177 = vector.shape_cast %176 : vector<1x128xf32> to vector<128xf32>
    %178 = vector.shape_cast %175 : vector<128xf32> to vector<1x128xf32>
    tpu.vector_store %arg12[%c3_99, %c0_100], %178 {strides = array<i32>} : memref<4x128xf32, #tpu.memory_space<vmem>>, vector<1x128xf32>,
    return
  }
  func.func @transform_0(%arg0: i32) -> (i32, i32) {
    %c0_i32 = arith.constant 0 : i32
    %c0_i32_0 = arith.constant 0 : i32
    return %arg0, %c0_i32 : i32, i32
  }
  func.func @transform_1(%arg0: i32) -> (i32, i32) {
    %c0_i32 = arith.constant 0 : i32
    %c0_i32_0 = arith.constant 0 : i32
    return %arg0, %c0_i32 : i32, i32
  }
  func.func @transform_2(%arg0: i32) -> (i32, i32) {
    %c0_i32 = arith.constant 0 : i32
    %c0_i32_0 = arith.constant 0 : i32
    %c0_i32_1 = arith.constant 0 : i32
    return %c0_i32, %c0_i32_0 : i32, i32
  }
  func.func @transform_3(%arg0: i32) -> (i32, i32) {
    %c0_i32 = arith.constant 0 : i32
    %c0_i32_0 = arith.constant 0 : i32
    %c0_i32_1 = arith.constant 0 : i32
    return %c0_i32, %c0_i32_0 : i32, i32
  }
  func.func @transform_4(%arg0: i32) -> (i32, i32) {
    %c0_i32 = arith.constant 0 : i32
    %c0_i32_0 = arith.constant 0 : i32
    %c0_i32_1 = arith.constant 0 : i32
    return %c0_i32, %c0_i32_0 : i32, i32
  }
  func.func @transform_5(%arg0: i32) -> (i32, i32, i32) {
    %c0_i32 = arith.constant 0 : i32
    %c0_i32_0 = arith.constant 0 : i32
    %c0_i32_1 = arith.constant 0 : i32
    %c0_i32_2 = arith.constant 0 : i32
    return %c0_i32, %c0_i32_0, %c0_i32_1 : i32, i32, i32
  }
  func.func @transform_6(%arg0: i32) -> (i32, i32) {
    %c0_i32 = arith.constant 0 : i32
    %c0_i32_0 = arith.constant 0 : i32
    %c0_i32_1 = arith.constant 0 : i32
    return %c0_i32, %c0_i32_0 : i32, i32
  }
  func.func @transform_7(%arg0: i32) -> (i32, i32, i32) {
    %c0_i32 = arith.constant 0 : i32
    %c0_i32_0 = arith.constant 0 : i32
    %c0_i32_1 = arith.constant 0 : i32
    %c0_i32_2 = arith.constant 0 : i32
    return %c0_i32, %c0_i32_0, %c0_i32_1 : i32, i32, i32
  }
  func.func @transform_8(%arg0: i32) -> (i32, i32) {
    %c0_i32 = arith.constant 0 : i32
    %c0_i32_0 = arith.constant 0 : i32
    %c0_i32_1 = arith.constant 0 : i32
    return %c0_i32, %c0_i32_0 : i32, i32
  }
  func.func @transform_9(%arg0: i32) -> (i32, i32) {
    %c0_i32 = arith.constant 0 : i32
    %c0_i32_0 = arith.constant 0 : i32
    %c0_i32_1 = arith.constant 0 : i32
    return %c0_i32, %c0_i32_0 : i32, i32
  }
  func.func @transform_10(%arg0: i32) -> (i32, i32) {
    %c0_i32 = arith.constant 0 : i32
    %c0_i32_0 = arith.constant 0 : i32
    %c0_i32_1 = arith.constant 0 : i32
    return %c0_i32, %c0_i32_0 : i32, i32
  }
  func.func @transform_11(%arg0: i32) -> (i32, i32) {
    %c0_i32 = arith.constant 0 : i32
    %c0_i32_0 = arith.constant 0 : i32
    return %c0_i32, %arg0 : i32, i32
  }
}

</mosaic_0001>

<llo_original>
// kernel: tpu_custom_call.1
$region0: #{tpu_custom_call.1}
  #allocation0 [shape = 'u32[]', space=smem, size = 0x4, offset = 0x4, fixed_abs, tag = 'smem constant byte address 0x4 - core index']
  #allocation1 [shape = 'u32[144,128]{1,0:T(1,128)}', space=vmem, size = 0x12000, scoped, tag = 'internal scratch']
  %s0 = inlined_call_operand.vmem [shape: bf16[128,10], index: 0, kind: input, shape index: {}]
  %s1 = inlined_call_operand.vmem [shape: bf16[128,6], index: 1, kind: input, shape index: {}]
  %s2 = inlined_call_operand.vmem [shape: bf16[10,128], index: 2, kind: input, shape index: {}]
  %s3 = inlined_call_operand.vmem [shape: bf16[6,128], index: 3, kind: input, shape index: {}]
  %s4 = inlined_call_operand.vmem [shape: f32[4,32], index: 4, kind: input, shape index: {}]
  %s5 = inlined_call_operand.vmem [shape: bf16[4,32,32], index: 5, kind: input, shape index: {}]
  %s6 = inlined_call_operand.vmem [shape: f32[4,32], index: 6, kind: input, shape index: {}]
  %s7 = inlined_call_operand.vmem [shape: bf16[4,32,32], index: 7, kind: input, shape index: {}]
  %s8 = inlined_call_operand.vmem [shape: f32[4,32], index: 8, kind: input, shape index: {}]
  %s9 = inlined_call_operand.vmem [shape: f32[4,32], index: 9, kind: input, shape index: {}]
  %s10 = inlined_call_operand.vmem [shape: f32[4,1], index: 10, kind: input, shape index: {}]
  %s11 = inlined_call_operand.hbm [shape: f32[4,128], index: 11, kind: output, shape index: {}]
  %s12 = sld [smem:[#allocation0]]
  $region54: #{tpu_custom_call.1} parent=0
    _
  %s14 = ssub.s32 1, %s12
  %s15 = scalar_select 0, %s14, %s12
  $region1: #{tpu_custom_call.1} parent=0
    #allocation2 [shape = 'u8[2048]{0}', space=vmem, size = 0x800, scoped, tag = 'output window, operand 0, single buffered']
    #allocation3 [shape = 's32[1]{0}', space=sflag, size = 0x4, scoped, tag = 'scoped memory for tpu_custom_call.1']
    %16 = vsyncpa [#allocation3], 0
    // Predicated region
    $region2: #{tpu_custom_call.1} parent=1 // pred_check
      _
    $region3: #{tpu_custom_call.1} parent=1 // pred_check_branch
      %18 = sbr.rel (0) target = $region5
    $region4: #{tpu_custom_call.1} parent=1 // pred_region
      _
    $region5: #{tpu_custom_call.1} parent=1 // pred_fallthru
      _
    // Predicated region
    $region6: #{tpu_custom_call.1} parent=1 // pred_check
      _
    $region7: #{tpu_custom_call.1} parent=1 // pred_check_branch
      %20 = sbr.rel (0) target = $region9
    $region8: #{tpu_custom_call.1} parent=1 // pred_region
      _
    $region9: #{tpu_custom_call.1} parent=1 // pred_fallthru
      _
    // Predicated region
    $region10: #{tpu_custom_call.1} parent=1 // pred_check
      _
    $region11: #{tpu_custom_call.1} parent=1 // pred_check_branch
      %22 = sbr.rel (0) target = $region13
    $region12: #{tpu_custom_call.1} parent=1 // pred_region
      _
    $region13: #{tpu_custom_call.1} parent=1 // pred_fallthru
      _
    // Predicated region
    $region14: #{tpu_custom_call.1} parent=1 // pred_check
      _
    $region15: #{tpu_custom_call.1} parent=1 // pred_check_branch
      %24 = sbr.rel (0) target = $region17
    $region16: #{tpu_custom_call.1} parent=1 // pred_region
      _
    $region17: #{tpu_custom_call.1} parent=1 // pred_fallthru
      _
    // Predicated region
    $region18: #{tpu_custom_call.1} parent=1 // pred_check
      _
    $region19: #{tpu_custom_call.1} parent=1 // pred_check_branch
      %26 = sbr.rel (0) target = $region21
    $region20: #{tpu_custom_call.1} parent=1 // pred_region
      _
    $region21: #{tpu_custom_call.1} parent=1 // pred_fallthru
      _
    // Predicated region
    $region22: #{tpu_custom_call.1} parent=1 // pred_check
      _
    $region23: #{tpu_custom_call.1} parent=1 // pred_check_branch
      %28 = sbr.rel (0) target = $region25
    $region24: #{tpu_custom_call.1} parent=1 // pred_region
      _
    $region25: #{tpu_custom_call.1} parent=1 // pred_fallthru
      _
    // Predicated region
    $region26: #{tpu_custom_call.1} parent=1 // pred_check
      _
    $region27: #{tpu_custom_call.1} parent=1 // pred_check_branch
      %30 = sbr.rel (0) target = $region29
    $region28: #{tpu_custom_call.1} parent=1 // pred_region
      _
    $region29: #{tpu_custom_call.1} parent=1 // pred_fallthru
      _
    // Predicated region
    $region30: #{tpu_custom_call.1} parent=1 // pred_check
      _
    $region31: #{tpu_custom_call.1} parent=1 // pred_check_branch
      %32 = sbr.rel (0) target = $region33
    $region32: #{tpu_custom_call.1} parent=1 // pred_region
      _
    $region33: #{tpu_custom_call.1} parent=1 // pred_fallthru
      _
    // Predicated region
    $region34: #{tpu_custom_call.1} parent=1 // pred_check
      _
    $region35: #{tpu_custom_call.1} parent=1 // pred_check_branch
      %34 = sbr.rel (0) target = $region37
    $region36: #{tpu_custom_call.1} parent=1 // pred_region
      _
    $region37: #{tpu_custom_call.1} parent=1 // pred_fallthru
      _
    // Predicated region
    $region38: #{tpu_custom_call.1} parent=1 // pred_check
      _
    $region39: #{tpu_custom_call.1} parent=1 // pred_check_branch
      %36 = sbr.rel (0) target = $region41
    $region40: #{tpu_custom_call.1} parent=1 // pred_region
      _
    $region41: #{tpu_custom_call.1} parent=1 // pred_fallthru
      _
    // Predicated region
    $region42: #{tpu_custom_call.1} parent=1 // pred_check
      _
    $region43: #{tpu_custom_call.1} parent=1 // pred_check_branch
      %38 = sbr.rel (0) target = $region45
    $region44: #{tpu_custom_call.1} parent=1 // pred_region
      _
    $region45: #{tpu_custom_call.1} parent=1 // pred_fallthru
      _
    %v40 = vld [vmem:[%s0] sm:$0xf]
    %v41 = vld [vmem:[%s0 + $0x4] sm:$0xf]
    %v42 = vld [vmem:[%s0 + $0x8] sm:$0xf]
    %v43 = vld [vmem:[%s0 + $0xc] sm:$0xf]
    %v44 = vld [vmem:[%s0 + $0x10] sm:$0xf]
    %v45 = vld [vmem:[%s0 + $0x14] sm:$0xf]
    %v46 = vld [vmem:[%s0 + $0x18] sm:$0xf]
    %v47 = vld [vmem:[%s0 + $0x1c] sm:$0xf]
    %v48 = vld [vmem:[%s0 + $0x20] sm:$0xf]
    %v49 = vld [vmem:[%s0 + $0x24] sm:$0xf]
    %v50 = vld [vmem:[%s0 + $0x28] sm:$0xf]
    %v51 = vld [vmem:[%s0 + $0x2c] sm:$0xf]
    %v52 = vld [vmem:[%s0 + $0x30] sm:$0xf]
    %v53 = vld [vmem:[%s0 + $0x34] sm:$0xf]
    %v54 = vld [vmem:[%s0 + $0x38] sm:$0xf]
    %v55 = vld [vmem:[%s0 + $0x3c] sm:$0xf]
    %v56 = vld [vmem:[%s1] sm:$0xf]
    %v57 = vld [vmem:[%s1 + $0x4] sm:$0xf]
    %v58 = vld [vmem:[%s1 + $0x8] sm:$0xf]
    %v59 = vld [vmem:[%s1 + $0xc] sm:$0xf]
    %v60 = vld [vmem:[%s1 + $0x10] sm:$0xf]
    %v61 = vld [vmem:[%s1 + $0x14] sm:$0xf]
    %v62 = vld [vmem:[%s1 + $0x18] sm:$0xf]
    %v63 = vld [vmem:[%s1 + $0x1c] sm:$0xf]
    %v64 = vld [vmem:[%s1 + $0x20] sm:$0xf]
    %v65 = vld [vmem:[%s1 + $0x24] sm:$0xf]
    %v66 = vld [vmem:[%s1 + $0x28] sm:$0xf]
    %v67 = vld [vmem:[%s1 + $0x2c] sm:$0xf]
    %v68 = vld [vmem:[%s1 + $0x30] sm:$0xf]
    %v69 = vld [vmem:[%s1 + $0x34] sm:$0xf]
    %v70 = vld [vmem:[%s1 + $0x38] sm:$0xf]
    %v71 = vld [vmem:[%s1 + $0x3c] sm:$0xf]
    %v72 = vld [vmem:[%s2] sm:$0xf]
    %v73 = vld [vmem:[%s2 + $0x4] sm:$0x1]
    %v74 = vld [vmem:[%s3] sm:$0x7]
    %v91 = vunpack.c.l.b16 %v56
    %v92 = vunpack.c.l.b16 %v57
    %v93 = vunpack.c.l.b16 %v58
    %v94 = vunpack.c.l.b16 %v59
    %v95 = vunpack.c.l.b16 %v60
    %v96 = vunpack.c.l.b16 %v61
    %v97 = vunpack.c.l.b16 %v62
    %v98 = vunpack.c.l.b16 %v63
    %v99 = vunpack.c.l.b16 %v64
    %v100 = vunpack.c.l.b16 %v65
    %v101 = vunpack.c.l.b16 %v66
    %v102 = vunpack.c.l.b16 %v67
    %v103 = vunpack.c.l.b16 %v68
    %v104 = vunpack.c.l.b16 %v69
    %v105 = vunpack.c.l.b16 %v70
    %v106 = vunpack.c.l.b16 %v71
    %v107 = vpack.c.b16 %v92, %v91
    %v108 = vpack.c.b16 %v94, %v93
    %v109 = vpack.c.b16 %v96, %v95
    %v110 = vpack.c.b16 %v98, %v97
    %v111 = vpack.c.b16 %v100, %v99
    %v112 = vpack.c.b16 %v102, %v101
    %v113 = vpack.c.b16 %v104, %v103
    %v114 = vpack.c.b16 %v106, %v105
    %vm115 = vcmask 48128
    %v117 = vsel %vm115, %v107, 0
    %v120 = vsel %vm115, %v108, 0
    %v123 = vsel %vm115, %v109, 0
    %v126 = vsel %vm115, %v110, 0
    %v129 = vsel %vm115, %v111, 0
    %v132 = vsel %vm115, %v112, 0
    %v135 = vsel %vm115, %v113, 0
    %v138 = vsel %vm115, %v114, 0
    %vm140 = vcmask 1042432
    %v142 = vsel %vm140, %v74, 0
    %144 = vmatprep.subr.bf16.mxu0 0
    %145 = vmatpush1.bf16.msra.mxu0 %v142
    %146 = vmatprep.subr.bf16.mxu0 0
    %147 = vmatpush1.bf16.msra.mxu0 0
    %148 = vmatprep.subr.bf16.mxu0 0
    %149 = vmatpush1.bf16.msra.mxu0 0
    %150 = vmatprep.subr.bf16.mxu0 0
    %151 = vmatpush1.bf16.msra.mxu0 0
    %152 = vmatprep.subr.bf16.mxu0 0
    %153 = vmatpush1.bf16.msra.mxu0 0
    %154 = vmatprep.subr.bf16.mxu0 0
    %155 = vmatpush1.bf16.msra.mxu0 0
    %156 = vmatprep.subr.bf16.mxu0 0
    %157 = vmatpush1.bf16.msra.mxu0 0
    %158 = vmatprep.subr.bf16.mxu0 0
    %159 = vmatpush1.bf16.msra.mxu0 0
    %160 = vmatprep.subr.bf16.mxu0 0
    %161 = vmatpush1.bf16.msra.mxu0 0
    %162 = vmatprep.subr.bf16.mxu0 0
    %163 = vmatpush1.bf16.msra.mxu0 0
    %164 = vmatprep.subr.bf16.mxu0 0
    %165 = vmatpush1.bf16.msra.mxu0 0
    %166 = vmatprep.subr.bf16.mxu0 0
    %167 = vmatpush1.bf16.msra.mxu0 0
    %168 = vmatprep.subr.bf16.mxu0 0
    %169 = vmatpush1.bf16.msra.mxu0 0
    %170 = vmatprep.subr.bf16.mxu0 0
    %171 = vmatpush1.bf16.msra.mxu0 0
    %172 = vmatprep.subr.bf16.mxu0 0
    %173 = vmatpush1.bf16.msra.mxu0 0
    %174 = vmatprep.subr.bf16.mxu0 0
    %175 = vmatpush1.bf16.msra.mxu0 0
    %176 = vmatprep.mubr.bf16.mxu0 0
    %177 = vmatmul.mubr.bf16.gmra.mrb[0].mxu0 %v117
    %v178 = vpop.f32.mrb[0].mxu0
    %v179 = vadd.f32 0.0, %v178
    %v180 = vpop.f32.mrb[0].mxu0
    %v181 = vpop.f32.mrb[0].mxu0
    %v182 = vadd.f32 0.0, %v181
    %v183 = vpop.f32.mrb[0].mxu0
    %184 = vmatprep.mubr.bf16.mxu0 0
    %185 = vmatmul.mubr.bf16.gmra.mrb[0].mxu0 %v120
    %v186 = vpop.f32.mrb[0].mxu0
    %v187 = vadd.f32 0.0, %v186
    %v188 = vpop.f32.mrb[0].mxu0
    %v189 = vpop.f32.mrb[0].mxu0
    %v190 = vadd.f32 0.0, %v189
    %v191 = vpop.f32.mrb[0].mxu0
    %192 = vmatprep.mubr.bf16.mxu0 0
    %193 = vmatmul.mubr.bf16.gmra.mrb[0].mxu0 %v123
    %v194 = vpop.f32.mrb[0].mxu0
    %v195 = vadd.f32 0.0, %v194
    %v196 = vpop.f32.mrb[0].mxu0
    %v197 = vpop.f32.mrb[0].mxu0
    %v198 = vadd.f32 0.0, %v197
    %v199 = vpop.f32.mrb[0].mxu0
    %200 = vmatprep.mubr.bf16.mxu0 0
    %201 = vmatmul.mubr.bf16.gmra.mrb[0].mxu0 %v126
    %v202 = vpop.f32.mrb[0].mxu0
    %v203 = vadd.f32 0.0, %v202
    %v204 = vpop.f32.mrb[0].mxu0
    %v205 = vpop.f32.mrb[0].mxu0
    %v206 = vadd.f32 0.0, %v205
    %v207 = vpop.f32.mrb[0].mxu0
    %208 = vmatprep.mubr.bf16.mxu0 0
    %209 = vmatmul.mubr.bf16.gmra.mrb[0].mxu0 %v129
    %v210 = vpop.f32.mrb[0].mxu0
    %v211 = vadd.f32 0.0, %v210
    %v212 = vpop.f32.mrb[0].mxu0
    %v213 = vpop.f32.mrb[0].mxu0
    %v214 = vadd.f32 0.0, %v213
    %v215 = vpop.f32.mrb[0].mxu0
    %216 = vmatprep.mubr.bf16.mxu0 0
    %217 = vmatmul.mubr.bf16.gmra.mrb[0].mxu0 %v132
    %v218 = vpop.f32.mrb[0].mxu0
    %v219 = vadd.f32 0.0, %v218
    %v220 = vpop.f32.mrb[0].mxu0
    %v221 = vpop.f32.mrb[0].mxu0
    %v222 = vadd.f32 0.0, %v221
    %v223 = vpop.f32.mrb[0].mxu0
    %224 = vmatprep.mubr.bf16.mxu0 0
    %225 = vmatmul.mubr.bf16.gmra.mrb[0].mxu0 %v135
    %v226 = vpop.f32.mrb[0].mxu0
    %v227 = vadd.f32 0.0, %v226
    %v228 = vpop.f32.mrb[0].mxu0
    %v229 = vpop.f32.mrb[0].mxu0
    %v230 = vadd.f32 0.0, %v229
    %v231 = vpop.f32.mrb[0].mxu0
    %232 = vmatprep.mubr.bf16.mxu0 0
    %233 = vmatmul.mubr.bf16.gmra.mrb[0].mxu0 %v138
    %v234 = vpop.f32.mrb[0].mxu0
    %v235 = vadd.f32 0.0, %v234
    %v236 = vpop.f32.mrb[0].mxu0
    %v237 = vpop.f32.mrb[0].mxu0
    %v238 = vadd.f32 0.0, %v237
    %v239 = vpop.f32.mrb[0].mxu0
    %240 = vdwg.mxu0
    %v257 = vunpack.c.l.b16 %v40
    %v258 = vunpack.c.l.b16 %v41
    %v259 = vunpack.c.l.b16 %v42
    %v260 = vunpack.c.l.b16 %v43
    %v261 = vunpack.c.l.b16 %v44
    %v262 = vunpack.c.l.b16 %v45
    %v263 = vunpack.c.l.b16 %v46
    %v264 = vunpack.c.l.b16 %v47
    %v265 = vunpack.c.l.b16 %v48
    %v266 = vunpack.c.l.b16 %v49
    %v267 = vunpack.c.l.b16 %v50
    %v268 = vunpack.c.l.b16 %v51
    %v269 = vunpack.c.l.b16 %v52
    %v270 = vunpack.c.l.b16 %v53
    %v271 = vunpack.c.l.b16 %v54
    %v272 = vunpack.c.l.b16 %v55
    %v273 = vpack.c.b16 %v258, %v257
    %v274 = vpack.c.b16 %v260, %v259
    %v275 = vpack.c.b16 %v262, %v261
    %v276 = vpack.c.b16 %v264, %v263
    %v277 = vpack.c.b16 %v266, %v265
    %v278 = vpack.c.b16 %v268, %v267
    %v279 = vpack.c.b16 %v270, %v269
    %v280 = vpack.c.b16 %v272, %v271
    %v283 = vunpack.c.l.b16 %v72
    %v284 = vunpack.c.l.b16 %v73
    %v285 = vpack.c.b16 %v284, %v283
    %vm286 = vcmask 80896
    %v288 = vsel %vm286, %v273, 0
    %v291 = vsel %vm286, %v274, 0
    %v294 = vsel %vm286, %v275, 0
    %v297 = vsel %vm286, %v276, 0
    %v300 = vsel %vm286, %v277, 0
    %v303 = vsel %vm286, %v278, 0
    %v306 = vsel %vm286, %v279, 0
    %v309 = vsel %vm286, %v280, 0
    %vm311 = vcmask 1044480
    %v313 = vsel %vm311, %v285, 0
    %315 = vmatprep.subr.bf16.mxu0 0
    %316 = vmatpush1.bf16.msra.mxu0 %v313
    %317 = vmatprep.subr.bf16.mxu0 0
    %318 = vmatpush1.bf16.msra.mxu0 0
    %319 = vmatprep.subr.bf16.mxu0 0
    %320 = vmatpush1.bf16.msra.mxu0 0
    %321 = vmatprep.subr.bf16.mxu0 0
    %322 = vmatpush1.bf16.msra.mxu0 0
    %323 = vmatprep.subr.bf16.mxu0 0
    %324 = vmatpush1.bf16.msra.mxu0 0
    %325 = vmatprep.subr.bf16.mxu0 0
    %326 = vmatpush1.bf16.msra.mxu0 0
    %327 = vmatprep.subr.bf16.mxu0 0
    %328 = vmatpush1.bf16.msra.mxu0 0
    %329 = vmatprep.subr.bf16.mxu0 0
    %330 = vmatpush1.bf16.msra.mxu0 0
    %331 = vmatprep.subr.bf16.mxu0 0
    %332 = vmatpush1.bf16.msra.mxu0 0
    %333 = vmatprep.subr.bf16.mxu0 0
    %334 = vmatpush1.bf16.msra.mxu0 0
    %335 = vmatprep.subr.bf16.mxu0 0
    %336 = vmatpush1.bf16.msra.mxu0 0
    %337 = vmatprep.subr.bf16.mxu0 0
    %338 = vmatpush1.bf16.msra.mxu0 0
    %339 = vmatprep.subr.bf16.mxu0 0
    %340 = vmatpush1.bf16.msra.mxu0 0
    %341 = vmatprep.subr.bf16.mxu0 0
    %342 = vmatpush1.bf16.msra.mxu0 0
    %343 = vmatprep.subr.bf16.mxu0 0
    %344 = vmatpush1.bf16.msra.mxu0 0
    %345 = vmatprep.subr.bf16.mxu0 0
    %346 = vmatpush1.bf16.msra.mxu0 0
    %347 = vmatprep.mubr.bf16.mxu0 0
    %348 = vmatmul.mubr.bf16.gmra.mrb[0].mxu0 %v288
    %v349 = vpop.f32.mrb[0].mxu0
    %v350 = vadd.f32 %v179, %v349
    %v351 = vpop.f32.mrb[0].mxu0
    %v352 = vpop.f32.mrb[0].mxu0
    %v353 = vadd.f32 %v182, %v352
    %v354 = vpop.f32.mrb[0].mxu0
    %355 = vmatprep.mubr.bf16.mxu0 0
    %356 = vmatmul.mubr.bf16.gmra.mrb[0].mxu0 %v291
    %v357 = vpop.f32.mrb[0].mxu0
    %v358 = vadd.f32 %v187, %v357
    %v359 = vpop.f32.mrb[0].mxu0
    %v360 = vpop.f32.mrb[0].mxu0
    %v361 = vadd.f32 %v190, %v360
    %v362 = vpop.f32.mrb[0].mxu0
    %363 = vmatprep.mubr.bf16.mxu0 0
    %364 = vmatmul.mubr.bf16.gmra.mrb[0].mxu0 %v294
    %v365 = vpop.f32.mrb[0].mxu0
    %v366 = vadd.f32 %v195, %v365
    %v367 = vpop.f32.mrb[0].mxu0
    %v368 = vpop.f32.mrb[0].mxu0
    %v369 = vadd.f32 %v198, %v368
    %v370 = vpop.f32.mrb[0].mxu0
    %371 = vmatprep.mubr.bf16.mxu0 0
    %372 = vmatmul.mubr.bf16.gmra.mrb[0].mxu0 %v297
    %v373 = vpop.f32.mrb[0].mxu0
    %v374 = vadd.f32 %v203, %v373
    %v375 = vpop.f32.mrb[0].mxu0
    %v376 = vpop.f32.mrb[0].mxu0
    %v377 = vadd.f32 %v206, %v376
    %v378 = vpop.f32.mrb[0].mxu0
    %379 = vmatprep.mubr.bf16.mxu0 0
    %380 = vmatmul.mubr.bf16.gmra.mrb[0].mxu0 %v300
    %v381 = vpop.f32.mrb[0].mxu0
    %v382 = vadd.f32 %v211, %v381
    %v383 = vpop.f32.mrb[0].mxu0
    %v384 = vpop.f32.mrb[0].mxu0
    %v385 = vadd.f32 %v214, %v384
    %v386 = vpop.f32.mrb[0].mxu0
    %387 = vmatprep.mubr.bf16.mxu0 0
    %388 = vmatmul.mubr.bf16.gmra.mrb[0].mxu0 %v303
    %v389 = vpop.f32.mrb[0].mxu0
    %v390 = vadd.f32 %v219, %v389
    %v391 = vpop.f32.mrb[0].mxu0
    %v392 = vpop.f32.mrb[0].mxu0
    %v393 = vadd.f32 %v222, %v392
    %v394 = vpop.f32.mrb[0].mxu0
    %395 = vmatprep.mubr.bf16.mxu0 0
    %396 = vmatmul.mubr.bf16.gmra.mrb[0].mxu0 %v306
    %v397 = vpop.f32.mrb[0].mxu0
    %v398 = vadd.f32 %v227, %v397
    %v399 = vpop.f32.mrb[0].mxu0
    %v400 = vpop.f32.mrb[0].mxu0
    %v401 = vadd.f32 %v230, %v400
    %v402 = vpop.f32.mrb[0].mxu0
    %403 = vmatprep.mubr.bf16.mxu0 0
    %404 = vmatmul.mubr.bf16.gmra.mrb[0].mxu0 %v309
    %v405 = vpop.f32.mrb[0].mxu0
    %v406 = vadd.f32 %v235, %v405
    %v407 = vpop.f32.mrb[0].mxu0
    %v408 = vpop.f32.mrb[0].mxu0
    %v409 = vadd.f32 %v238, %v408
    %v410 = vpop.f32.mrb[0].mxu0
    %411 = vdwg.mxu0
    %v412 = vld [vmem:[%s4] sm:$0x1]
    %v413 = vlaneseq
    %v414 = vshrl.u32 %v413, 7
    %v415 = vsub.s32 0, %v414
    %v416 = vrot.slane %v412, %v415
    %v417 = vadd.f32 %v350, %v416
    %v418 = vadd.f32 %v353, %v416
    %v419 = vadd.f32 %v358, %v416
    %v420 = vadd.f32 %v361, %v416
    %v421 = vadd.f32 %v366, %v416
    %v422 = vadd.f32 %v369, %v416
    %v423 = vadd.f32 %v374, %v416
    %v424 = vadd.f32 %v377, %v416
    %v425 = vadd.f32 %v382, %v416
    %v426 = vadd.f32 %v385, %v416
    %v427 = vadd.f32 %v390, %v416
    %v428 = vadd.f32 %v393, %v416
    %v429 = vadd.f32 %v398, %v416
    %v430 = vadd.f32 %v401, %v416
    %v431 = vadd.f32 %v406, %v416
    %v432 = vadd.f32 %v409, %v416
    %v433 = vmax.f32 %v417, 0.0
    %v434 = vmax.f32 %v418, 0.0
    %v435 = vmax.f32 %v419, 0.0
    %v436 = vmax.f32 %v420, 0.0
    %v437 = vmax.f32 %v421, 0.0
    %v438 = vmax.f32 %v422, 0.0
    %v439 = vmax.f32 %v423, 0.0
    %v440 = vmax.f32 %v424, 0.0
    %v441 = vmax.f32 %v425, 0.0
    %v442 = vmax.f32 %v426, 0.0
    %v443 = vmax.f32 %v427, 0.0
    %v444 = vmax.f32 %v428, 0.0
    %v445 = vmax.f32 %v429, 0.0
    %v446 = vmax.f32 %v430, 0.0
    %v447 = vmax.f32 %v431, 0.0
    %v448 = vmax.f32 %v432, 0.0
    %v449 = vpack.c.bf16 %v434, %v433
    %v450 = vpack.c.bf16 %v436, %v435
    %v451 = vpack.c.bf16 %v438, %v437
    %v452 = vpack.c.bf16 %v440, %v439
    %v453 = vpack.c.bf16 %v442, %v441
    %v454 = vpack.c.bf16 %v444, %v443
    %v455 = vpack.c.bf16 %v446, %v445
    %v456 = vpack.c.bf16 %v448, %v447
    %v457 = vld [vmem:[%s5] sm:$0xf]
    %v458 = vld [vmem:[%s5 + $0x4] sm:$0xf]
    %v459 = vld [vmem:[%s5 + $0x8] sm:$0xf]
    %v460 = vld [vmem:[%s5 + $0xc] sm:$0xf]
    %v461 = vld [vmem:[%s6] sm:$0x1]
    %v462 = vlaneseq
    %v463 = vshrl.u32 %v462, 7
    %v464 = vsub.s32 0, %v463
    %v465 = vrot.slane %v461, %v464
    %v470 = vunpack.c.l.b16 %v457
    %v471 = vunpack.c.l.b16 %v458
    %v472 = vunpack.c.l.b16 %v459
    %v473 = vunpack.c.l.b16 %v460
    %v474 = vpack.c.b16 %v471, %v470
    %v475 = vpack.c.b16 %v473, %v472
    %vm478 = vcmask 261120
    %v480 = vsel %vm478, %v449, 0
    %v483 = vsel %vm478, %v450, 0
    %v486 = vsel %vm478, %v451, 0
    %v489 = vsel %vm478, %v452, 0
    %v492 = vsel %vm478, %v453, 0
    %v495 = vsel %vm478, %v454, 0
    %v498 = vsel %vm478, %v455, 0
    %v501 = vsel %vm478, %v456, 0
    %503 = vmatprep.subr.bf16.mxu0 0
    %504 = vmatpush1.bf16.msra.mxu0 %v474
    %505 = vmatprep.subr.bf16.mxu0 0
    %506 = vmatpush1.bf16.msra.mxu0 %v475
    %507 = vmatprep.subr.bf16.mxu0 0
    %508 = vmatpush1.bf16.msra.mxu0 0
    %509 = vmatprep.subr.bf16.mxu0 0
    %510 = vmatpush1.bf16.msra.mxu0 0
    %511 = vmatprep.subr.bf16.mxu0 0
    %512 = vmatpush1.bf16.msra.mxu0 0
    %513 = vmatprep.subr.bf16.mxu0 0
    %514 = vmatpush1.bf16.msra.mxu0 0
    %515 = vmatprep.subr.bf16.mxu0 0
    %516 = vmatpush1.bf16.msra.mxu0 0
    %517 = vmatprep.subr.bf16.mxu0 0
    %518 = vmatpush1.bf16.msra.mxu0 0
    %519 = vmatprep.subr.bf16.mxu0 0
    %520 = vmatpush1.bf16.msra.mxu0 0
    %521 = vmatprep.subr.bf16.mxu0 0
    %522 = vmatpush1.bf16.msra.mxu0 0
    %523 = vmatprep.subr.bf16.mxu0 0
    %524 = vmatpush1.bf16.msra.mxu0 0
    %525 = vmatprep.subr.bf16.mxu0 0
    %526 = vmatpush1.bf16.msra.mxu0 0
    %527 = vmatprep.subr.bf16.mxu0 0
    %528 = vmatpush1.bf16.msra.mxu0 0
    %529 = vmatprep.subr.bf16.mxu0 0
    %530 = vmatpush1.bf16.msra.mxu0 0
    %531 = vmatprep.subr.bf16.mxu0 0
    %532 = vmatpush1.bf16.msra.mxu0 0
    %533 = vmatprep.subr.bf16.mxu0 0
    %534 = vmatpush1.bf16.msra.mxu0 0
    %535 = vmatprep.mubr.bf16.mxu0 0
    %536 = vmatmul.mubr.bf16.gmra.mrb[0].mxu0 %v480
    %v537 = vpop.f32.mrb[0].mxu0
    %v538 = vadd.f32 %v465, %v537
    %v539 = vpop.f32.mrb[0].mxu0
    %v540 = vpop.f32.mrb[0].mxu0
    %v541 = vadd.f32 %v465, %v540
    %v542 = vpop.f32.mrb[0].mxu0
    %543 = vmatprep.mubr.bf16.mxu0 0
    %544 = vmatmul.mubr.bf16.gmra.mrb[0].mxu0 %v483
    %v545 = vpop.f32.mrb[0].mxu0
    %v546 = vadd.f32 %v465, %v545
    %v547 = vpop.f32.mrb[0].mxu0
    %v548 = vpop.f32.mrb[0].mxu0
    %v549 = vadd.f32 %v465, %v548
    %v550 = vpop.f32.mrb[0].mxu0
    %551 = vmatprep.mubr.bf16.mxu0 0
    %552 = vmatmul.mubr.bf16.gmra.mrb[0].mxu0 %v486
    %v553 = vpop.f32.mrb[0].mxu0
    %v554 = vadd.f32 %v465, %v553
    %v555 = vpop.f32.mrb[0].mxu0
    %v556 = vpop.f32.mrb[0].mxu0
    %v557 = vadd.f32 %v465, %v556
    %v558 = vpop.f32.mrb[0].mxu0
    %559 = vmatprep.mubr.bf16.mxu0 0
    %560 = vmatmul.mubr.bf16.gmra.mrb[0].mxu0 %v489
    %v561 = vpop.f32.mrb[0].mxu0
    %v562 = vadd.f32 %v465, %v561
    %v563 = vpop.f32.mrb[0].mxu0
    %v564 = vpop.f32.mrb[0].mxu0
    %v565 = vadd.f32 %v465, %v564
    %v566 = vpop.f32.mrb[0].mxu0
    %567 = vmatprep.mubr.bf16.mxu0 0
    %568 = vmatmul.mubr.bf16.gmra.mrb[0].mxu0 %v492
    %v569 = vpop.f32.mrb[0].mxu0
    %v570 = vadd.f32 %v465, %v569
    %v571 = vpop.f32.mrb[0].mxu0
    %v572 = vpop.f32.mrb[0].mxu0
    %v573 = vadd.f32 %v465, %v572
    %v574 = vpop.f32.mrb[0].mxu0
    %575 = vmatprep.mubr.bf16.mxu0 0
    %576 = vmatmul.mubr.bf16.gmra.mrb[0].mxu0 %v495
    %v577 = vpop.f32.mrb[0].mxu0
    %v578 = vadd.f32 %v465, %v577
    %v579 = vpop.f32.mrb[0].mxu0
    %v580 = vpop.f32.mrb[0].mxu0
    %v581 = vadd.f32 %v465, %v580
    %v582 = vpop.f32.mrb[0].mxu0
    %583 = vmatprep.mubr.bf16.mxu0 0
    %584 = vmatmul.mubr.bf16.gmra.mrb[0].mxu0 %v498
    %v585 = vpop.f32.mrb[0].mxu0
    %v586 = vadd.f32 %v465, %v585
    %v587 = vpop.f32.mrb[0].mxu0
    %v588 = vpop.f32.mrb[0].mxu0
    %v589 = vadd.f32 %v465, %v588
    %v590 = vpop.f32.mrb[0].mxu0
    %591 = vmatprep.mubr.bf16.mxu0 0
    %592 = vmatmul.mubr.bf16.gmra.mrb[0].mxu0 %v501
    %v593 = vpop.f32.mrb[0].mxu0
    %v594 = vadd.f32 %v465, %v593
    %v595 = vpop.f32.mrb[0].mxu0
    %v596 = vpop.f32.mrb[0].mxu0
    %v597 = vadd.f32 %v465, %v596
    %v598 = vpop.f32.mrb[0].mxu0
    %599 = vdwg.mxu0
    %v600 = vmax.f32 %v538, 0.0
    %v601 = vmax.f32 %v541, 0.0
    %v602 = vmax.f32 %v546, 0.0
    %v603 = vmax.f32 %v549, 0.0
    %v604 = vmax.f32 %v554, 0.0
    %v605 = vmax.f32 %v557, 0.0
    %v606 = vmax.f32 %v562, 0.0
    %v607 = vmax.f32 %v565, 0.0
    %v608 = vmax.f32 %v570, 0.0
    %v609 = vmax.f32 %v573, 0.0
    %v610 = vmax.f32 %v578, 0.0
    %v611 = vmax.f32 %v581, 0.0
    %v612 = vmax.f32 %v586, 0.0
    %v613 = vmax.f32 %v589, 0.0
    %v614 = vmax.f32 %v594, 0.0
    %v615 = vmax.f32 %v597, 0.0
    %v616 = vpack.c.bf16 %v601, %v600
    %v617 = vpack.c.bf16 %v603, %v602
    %v618 = vpack.c.bf16 %v605, %v604
    %v619 = vpack.c.bf16 %v607, %v606
    %v620 = vpack.c.bf16 %v609, %v608
    %v621 = vpack.c.bf16 %v611, %v610
    %v622 = vpack.c.bf16 %v613, %v612
    %v623 = vpack.c.bf16 %v615, %v614
    %v624 = vld [vmem:[%s7] sm:$0xf]
    %v625 = vld [vmem:[%s7 + $0x4] sm:$0xf]
    %v626 = vld [vmem:[%s7 + $0x8] sm:$0xf]
    %v627 = vld [vmem:[%s7 + $0xc] sm:$0xf]
    %v628 = vld [vmem:[%s8] sm:$0x1]
    %v629 = vlaneseq
    %v630 = vshrl.u32 %v629, 7
    %v631 = vsub.s32 0, %v630
    %v632 = vrot.slane %v628, %v631
    %v637 = vunpack.c.l.b16 %v624
    %v638 = vunpack.c.l.b16 %v625
    %v639 = vunpack.c.l.b16 %v626
    %v640 = vunpack.c.l.b16 %v627
    %v641 = vpack.c.b16 %v638, %v637
    %v642 = vpack.c.b16 %v640, %v639
    %v646 = vsel %vm478, %v616, 0
    %v649 = vsel %vm478, %v617, 0
    %v652 = vsel %vm478, %v618, 0
    %v655 = vsel %vm478, %v619, 0
    %v658 = vsel %vm478, %v620, 0
    %v661 = vsel %vm478, %v621, 0
    %v664 = vsel %vm478, %v622, 0
    %v667 = vsel %vm478, %v623, 0
    %669 = vmatprep.subr.bf16.mxu0 0
    %670 = vmatpush1.bf16.msra.mxu0 %v641
    %671 = vmatprep.subr.bf16.mxu0 0
    %672 = vmatpush1.bf16.msra.mxu0 %v642
    %673 = vmatprep.subr.bf16.mxu0 0
    %674 = vmatpush1.bf16.msra.mxu0 0
    %675 = vmatprep.subr.bf16.mxu0 0
    %676 = vmatpush1.bf16.msra.mxu0 0
    %677 = vmatprep.subr.bf16.mxu0 0
    %678 = vmatpush1.bf16.msra.mxu0 0
    %679 = vmatprep.subr.bf16.mxu0 0
    %680 = vmatpush1.bf16.msra.mxu0 0
    %681 = vmatprep.subr.bf16.mxu0 0
    %682 = vmatpush1.bf16.msra.mxu0 0
    %683 = vmatprep.subr.bf16.mxu0 0
    %684 = vmatpush1.bf16.msra.mxu0 0
    %685 = vmatprep.subr.bf16.mxu0 0
    %686 = vmatpush1.bf16.msra.mxu0 0
    %687 = vmatprep.subr.bf16.mxu0 0
    %688 = vmatpush1.bf16.msra.mxu0 0
    %689 = vmatprep.subr.bf16.mxu0 0
    %690 = vmatpush1.bf16.msra.mxu0 0
    %691 = vmatprep.subr.bf16.mxu0 0
    %692 = vmatpush1.bf16.msra.mxu0 0
    %693 = vmatprep.subr.bf16.mxu0 0
    %694 = vmatpush1.bf16.msra.mxu0 0
    %695 = vmatprep.subr.bf16.mxu0 0
    %696 = vmatpush1.bf16.msra.mxu0 0
    %697 = vmatprep.subr.bf16.mxu0 0
    %698 = vmatpush1.bf16.msra.mxu0 0
    %699 = vmatprep.subr.bf16.mxu0 0
    %700 = vmatpush1.bf16.msra.mxu0 0
    %701 = vmatprep.mubr.bf16.mxu0 0
    %702 = vmatmul.mubr.bf16.gmra.mrb[0].mxu0 %v646
    %v703 = vpop.f32.mrb[0].mxu0
    %v704 = vadd.f32 %v632, %v703
    %v705 = vpop.f32.mrb[0].mxu0
    %v706 = vpop.f32.mrb[0].mxu0
    %v707 = vadd.f32 %v632, %v706
    %v708 = vpop.f32.mrb[0].mxu0
    %709 = vmatprep.mubr.bf16.mxu0 0
    %710 = vmatmul.mubr.bf16.gmra.mrb[0].mxu0 %v649
    %v711 = vpop.f32.mrb[0].mxu0
    %v712 = vadd.f32 %v632, %v711
    %v713 = vpop.f32.mrb[0].mxu0
    %v714 = vpop.f32.mrb[0].mxu0
    %v715 = vadd.f32 %v632, %v714
    %v716 = vpop.f32.mrb[0].mxu0
    %717 = vmatprep.mubr.bf16.mxu0 0
    %718 = vmatmul.mubr.bf16.gmra.mrb[0].mxu0 %v652
    %v719 = vpop.f32.mrb[0].mxu0
    %v720 = vadd.f32 %v632, %v719
    %v721 = vpop.f32.mrb[0].mxu0
    %v722 = vpop.f32.mrb[0].mxu0
    %v723 = vadd.f32 %v632, %v722
    %v724 = vpop.f32.mrb[0].mxu0
    %725 = vmatprep.mubr.bf16.mxu0 0
    %726 = vmatmul.mubr.bf16.gmra.mrb[0].mxu0 %v655
    %v727 = vpop.f32.mrb[0].mxu0
    %v728 = vadd.f32 %v632, %v727
    %v729 = vpop.f32.mrb[0].mxu0
    %v730 = vpop.f32.mrb[0].mxu0
    %v731 = vadd.f32 %v632, %v730
    %v732 = vpop.f32.mrb[0].mxu0
    %733 = vmatprep.mubr.bf16.mxu0 0
    %734 = vmatmul.mubr.bf16.gmra.mrb[0].mxu0 %v658
    %v735 = vpop.f32.mrb[0].mxu0
    %v736 = vadd.f32 %v632, %v735
    %v737 = vpop.f32.mrb[0].mxu0
    %v738 = vpop.f32.mrb[0].mxu0
    %v739 = vadd.f32 %v632, %v738
    %v740 = vpop.f32.mrb[0].mxu0
    %741 = vmatprep.mubr.bf16.mxu0 0
    %742 = vmatmul.mubr.bf16.gmra.mrb[0].mxu0 %v661
    %v743 = vpop.f32.mrb[0].mxu0
    %v744 = vadd.f32 %v632, %v743
    %v745 = vpop.f32.mrb[0].mxu0
    %v746 = vpop.f32.mrb[0].mxu0
    %v747 = vadd.f32 %v632, %v746
    %v748 = vpop.f32.mrb[0].mxu0
    %749 = vmatprep.mubr.bf16.mxu0 0
    %750 = vmatmul.mubr.bf16.gmra.mrb[0].mxu0 %v664
    %v751 = vpop.f32.mrb[0].mxu0
    %v752 = vadd.f32 %v632, %v751
    %v753 = vpop.f32.mrb[0].mxu0
    %v754 = vpop.f32.mrb[0].mxu0
    %v755 = vadd.f32 %v632, %v754
    %v756 = vpop.f32.mrb[0].mxu0
    %757 = vmatprep.mubr.bf16.mxu0 0
    %758 = vmatmul.mubr.bf16.gmra.mrb[0].mxu0 %v667
    %v759 = vpop.f32.mrb[0].mxu0
    %v760 = vadd.f32 %v632, %v759
    %v761 = vpop.f32.mrb[0].mxu0
    %v762 = vpop.f32.mrb[0].mxu0
    %v763 = vadd.f32 %v632, %v762
    %v764 = vpop.f32.mrb[0].mxu0
    %765 = vdwg.mxu0
    %v766 = vmax.f32 %v704, 0.0
    %v767 = vmax.f32 %v707, 0.0
    %v768 = vmax.f32 %v712, 0.0
    %v769 = vmax.f32 %v715, 0.0
    %v770 = vmax.f32 %v720, 0.0
    %v771 = vmax.f32 %v723, 0.0
    %v772 = vmax.f32 %v728, 0.0
    %v773 = vmax.f32 %v731, 0.0
    %v774 = vmax.f32 %v736, 0.0
    %v775 = vmax.f32 %v739, 0.0
    %v776 = vmax.f32 %v744, 0.0
    %v777 = vmax.f32 %v747, 0.0
    %v778 = vmax.f32 %v752, 0.0
    %v779 = vmax.f32 %v755, 0.0
    %v780 = vmax.f32 %v760, 0.0
    %v781 = vmax.f32 %v763, 0.0
    %v782 = vld [vmem:[%s9] sm:$0x1]
    %v783 = vlaneseq
    %v784 = vshrl.u32 %v783, 7
    %v785 = vsub.s32 0, %v784
    %v786 = vrot.slane %v782, %v785
    %v787 = vmul.f32 %v766, %v786
    %v788 = vmul.f32 %v767, %v786
    %v789 = vmul.f32 %v768, %v786
    %v790 = vmul.f32 %v769, %v786
    %v791 = vmul.f32 %v770, %v786
    %v792 = vmul.f32 %v771, %v786
    %v793 = vmul.f32 %v772, %v786
    %v794 = vmul.f32 %v773, %v786
    %v795 = vmul.f32 %v774, %v786
    %v796 = vmul.f32 %v775, %v786
    %v797 = vmul.f32 %v776, %v786
    %v798 = vmul.f32 %v777, %v786
    %v799 = vmul.f32 %v778, %v786
    %v800 = vmul.f32 %v779, %v786
    %v801 = vmul.f32 %v780, %v786
    %v802 = vmul.f32 %v781, %v786
    %v803 = vsel %vm478, %v787, 0.0
    %804 = vadd.xlane.f32.xlu0 %v803
    %v805 = vpop.xlane.xlu0 %804
    %v806 = vsel %vm478, %v788, 0.0
    %807 = vadd.xlane.f32.xlu0 %v806
    %v808 = vpop.xlane.xlu0 %807
    %v809 = vsel %vm478, %v789, 0.0
    %810 = vadd.xlane.f32.xlu0 %v809
    %v811 = vpop.xlane.xlu0 %810
    %v812 = vsel %vm478, %v790, 0.0
    %813 = vadd.xlane.f32.xlu0 %v812
    %v814 = vpop.xlane.xlu0 %813
    %v815 = vsel %vm478, %v791, 0.0
    %816 = vadd.xlane.f32.xlu0 %v815
    %v817 = vpop.xlane.xlu0 %816
    %v818 = vsel %vm478, %v792, 0.0
    %819 = vadd.xlane.f32.xlu0 %v818
    %v820 = vpop.xlane.xlu0 %819
    %v821 = vsel %vm478, %v793, 0.0
    %822 = vadd.xlane.f32.xlu0 %v821
    %v823 = vpop.xlane.xlu0 %822
    %v824 = vsel %vm478, %v794, 0.0
    %825 = vadd.xlane.f32.xlu0 %v824
    %v826 = vpop.xlane.xlu0 %825
    %v827 = vsel %vm478, %v795, 0.0
    %828 = vadd.xlane.f32.xlu0 %v827
    %v829 = vpop.xlane.xlu0 %828
    %v830 = vsel %vm478, %v796, 0.0
    %831 = vadd.xlane.f32.xlu0 %v830
    %v832 = vpop.xlane.xlu0 %831
    %v833 = vsel %vm478, %v797, 0.0
    %834 = vadd.xlane.f32.xlu0 %v833
    %v835 = vpop.xlane.xlu0 %834
    %v836 = vsel %vm478, %v798, 0.0
    %837 = vadd.xlane.f32.xlu0 %v836
    %v838 = vpop.xlane.xlu0 %837
    %v839 = vsel %vm478, %v799, 0.0
    %840 = vadd.xlane.f32.xlu0 %v839
    %v841 = vpop.xlane.xlu0 %840
    %v842 = vsel %vm478, %v800, 0.0
    %843 = vadd.xlane.f32.xlu0 %v842
    %v844 = vpop.xlane.xlu0 %843
    %v845 = vsel %vm478, %v801, 0.0
    %846 = vadd.xlane.f32.xlu0 %v845
    %v847 = vpop.xlane.xlu0 %846
    %v848 = vsel %vm478, %v802, 0.0
    %849 = vadd.xlane.f32.xlu0 %v848
    %v850 = vpop.xlane.xlu0 %849
    %v851 = vld [vmem:[%s10] sm:$0x1]
    %853 = vset.pattern.permute.xlu0 0
    %854 = vperm.xlu0 %853, %v851
    %v855 = vpop.permute.xlu0 %854
    %v856 = vlaneseq
    %v857 = vshrl.u32 %v856, 7
    %v858 = vsub.s32 0, %v857
    %v859 = vrot.slane %v855, %v858
    %v861 = vadd.f32 %v805, %v859
    %v862 = vadd.f32 %v808, %v859
    %v863 = vadd.f32 %v811, %v859
    %v864 = vadd.f32 %v814, %v859
    %v865 = vadd.f32 %v817, %v859
    %v866 = vadd.f32 %v820, %v859
    %v867 = vadd.f32 %v823, %v859
    %v868 = vadd.f32 %v826, %v859
    %v869 = vadd.f32 %v829, %v859
    %v870 = vadd.f32 %v832, %v859
    %v871 = vadd.f32 %v835, %v859
    %v872 = vadd.f32 %v838, %v859
    %v873 = vadd.f32 %v841, %v859
    %v874 = vadd.f32 %v844, %v859
    %v875 = vadd.f32 %v847, %v859
    %v876 = vadd.f32 %v850, %v859
    %893 = vset.pattern.permute.xlu0 0
    %894 = vperm.xlu0 %893, %v861
    %v895 = vpop.permute.xlu0 %894
    %896 = vset.pattern.permute.xlu0 0
    %897 = vperm.xlu0 %896, %v862
    %v898 = vpop.permute.xlu0 %897
    %899 = vset.pattern.permute.xlu0 0
    %900 = vperm.xlu0 %899, %v863
    %v901 = vpop.permute.xlu0 %900
    %902 = vset.pattern.permute.xlu0 0
    %903 = vperm.xlu0 %902, %v864
    %v904 = vpop.permute.xlu0 %903
    %905 = vset.pattern.permute.xlu0 0
    %906 = vperm.xlu0 %905, %v865
    %v907 = vpop.permute.xlu0 %906
    %908 = vset.pattern.permute.xlu0 0
    %909 = vperm.xlu0 %908, %v866
    %v910 = vpop.permute.xlu0 %909
    %911 = vset.pattern.permute.xlu0 0
    %912 = vperm.xlu0 %911, %v867
    %v913 = vpop.permute.xlu0 %912
    %914 = vset.pattern.permute.xlu0 0
    %915 = vperm.xlu0 %914, %v868
    %v916 = vpop.permute.xlu0 %915
    %917 = vset.pattern.permute.xlu0 0
    %918 = vperm.xlu0 %917, %v869
    %v919 = vpop.permute.xlu0 %918
    %920 = vset.pattern.permute.xlu0 0
    %921 = vperm.xlu0 %920, %v870
    %v922 = vpop.permute.xlu0 %921
    %923 = vset.pattern.permute.xlu0 0
    %924 = vperm.xlu0 %923, %v871
    %v925 = vpop.permute.xlu0 %924
    %926 = vset.pattern.permute.xlu0 0
    %927 = vperm.xlu0 %926, %v872
    %v928 = vpop.permute.xlu0 %927
    %929 = vset.pattern.permute.xlu0 0
    %930 = vperm.xlu0 %929, %v873
    %v931 = vpop.permute.xlu0 %930
    %932 = vset.pattern.permute.xlu0 0
    %933 = vperm.xlu0 %932, %v874
    %v934 = vpop.permute.xlu0 %933
    %935 = vset.pattern.permute.xlu0 0
    %936 = vperm.xlu0 %935, %v875
    %v937 = vpop.permute.xlu0 %936
    %938 = vset.pattern.permute.xlu0 0
    %939 = vperm.xlu0 %938, %v876
    %v940 = vpop.permute.xlu0 %939
    %v941 = vlaneseq
    %v942 = vand.u32 %v941, 127
    %v943 = vlaneseq
    %v944 = vshrl.u32 %v943, 7
    %v945 = vsub.s32 %v942, %v944
    %v946 = vrot.slane %v895, %v945
    %v947 = vadd.s32 %v942, 4294967288
    %v948 = vlaneseq
    %v949 = vshrl.u32 %v948, 7
    %v950 = vsub.s32 %v947, %v949
    %v951 = vrot.slane %v898, %v950
    %vm952 = vcmask 130112
    %v953 = vsel %vm952, %v951, %v946
    %v954 = vadd.s32 %v942, 4294967280
    %v955 = vlaneseq
    %v956 = vshrl.u32 %v955, 7
    %v957 = vsub.s32 %v954, %v956
    %v958 = vrot.slane %v901, %v957
    %vm959 = vcmask 195712
    %v960 = vsel %vm959, %v958, %v953
    %v961 = vadd.s32 %v942, 4294967272
    %v962 = vlaneseq
    %v963 = vshrl.u32 %v962, 7
    %v964 = vsub.s32 %v961, %v963
    %v965 = vrot.slane %v904, %v964
    %vm966 = vcmask 261312
    %v967 = vsel %vm966, %v965, %v960
    %v968 = vadd.s32 %v942, 4294967264
    %v969 = vlaneseq
    %v970 = vshrl.u32 %v969, 7
    %v971 = vsub.s32 %v968, %v970
    %v972 = vrot.slane %v907, %v971
    %vm973 = vcmask 326912
    %v974 = vsel %vm973, %v972, %v967
    %v975 = vadd.s32 %v942, 4294967256
    %v976 = vlaneseq
    %v977 = vshrl.u32 %v976, 7
    %v978 = vsub.s32 %v975, %v977
    %v979 = vrot.slane %v910, %v978
    %vm980 = vcmask 392512
    %v981 = vsel %vm980, %v979, %v974
    %v982 = vadd.s32 %v942, 4294967248
    %v983 = vlaneseq
    %v984 = vshrl.u32 %v983, 7
    %v985 = vsub.s32 %v982, %v984
    %v986 = vrot.slane %v913, %v985
    %vm987 = vcmask 458112
    %v988 = vsel %vm987, %v986, %v981
    %v989 = vadd.s32 %v942, 4294967240
    %v990 = vlaneseq
    %v991 = vshrl.u32 %v990, 7
    %v992 = vsub.s32 %v989, %v991
    %v993 = vrot.slane %v916, %v992
    %vm994 = vcmask 523712
    %v995 = vsel %vm994, %v993, %v988
    %v996 = vadd.s32 %v942, 4294967232
    %v997 = vlaneseq
    %v998 = vshrl.u32 %v997, 7
    %v999 = vsub.s32 %v996, %v998
    %v1000 = vrot.slane %v919, %v999
    %vm1001 = vcmask 589312
    %v1002 = vsel %vm1001, %v1000, %v995
    %v1003 = vadd.s32 %v942, 4294967224
    %v1004 = vlaneseq
    %v1005 = vshrl.u32 %v1004, 7
    %v1006 = vsub.s32 %v1003, %v1005
    %v1007 = vrot.slane %v922, %v1006
    %vm1008 = vcmask 654912
    %v1009 = vsel %vm1008, %v1007, %v1002
    %v1010 = vadd.s32 %v942, 4294967216
    %v1011 = vlaneseq
    %v1012 = vshrl.u32 %v1011, 7
    %v1013 = vsub.s32 %v1010, %v1012
    %v1014 = vrot.slane %v925, %v1013
    %vm1015 = vcmask 720512
    %v1016 = vsel %vm1015, %v1014, %v1009
    %v1017 = vadd.s32 %v942, 4294967208
    %v1018 = vlaneseq
    %v1019 = vshrl.u32 %v1018, 7
    %v1020 = vsub.s32 %v1017, %v1019
    %v1021 = vrot.slane %v928, %v1020
    %vm1022 = vcmask 786112
    %v1023 = vsel %vm1022, %v1021, %v1016
    %v1024 = vadd.s32 %v942, 4294967200
    %v1025 = vlaneseq
    %v1026 = vshrl.u32 %v1025, 7
    %v1027 = vsub.s32 %v1024, %v1026
    %v1028 = vrot.slane %v931, %v1027
    %vm1029 = vcmask 851712
    %v1030 = vsel %vm1029, %v1028, %v1023
    %v1031 = vadd.s32 %v942, 4294967192
    %v1032 = vlaneseq
    %v1033 = vshrl.u32 %v1032, 7
    %v1034 = vsub.s32 %v1031, %v1033
    %v1035 = vrot.slane %v934, %v1034
    %vm1036 = vcmask 917312
    %v1037 = vsel %vm1036, %v1035, %v1030
    %v1038 = vadd.s32 %v942, 4294967184
    %v1039 = vlaneseq
    %v1040 = vshrl.u32 %v1039, 7
    %v1041 = vsub.s32 %v1038, %v1040
    %v1042 = vrot.slane %v937, %v1041
    %vm1043 = vcmask 982912
    %v1044 = vsel %vm1043, %v1042, %v1037
    %v1045 = vadd.s32 %v942, 4294967176
    %v1046 = vlaneseq
    %v1047 = vshrl.u32 %v1046, 7
    %v1048 = vsub.s32 %v1045, %v1047
    %v1049 = vrot.slane %v940, %v1048
    %vm1050 = vcmask 1048512
    %v1051 = vsel %vm1050, %v1049, %v1044
    %1053 = vst [vmem:[#allocation2] sm:$0x1] %v1051
    %v1054 = vld [vmem:[%s4 + $0x1] sm:$0x1]
    %v1055 = vlaneseq
    %v1056 = vshrl.u32 %v1055, 7
    %v1057 = vsub.s32 0, %v1056
    %v1058 = vrot.slane %v1054, %v1057
    %1060 = vrot.lane.b32.xlu0 %v1058, 32
    %v1061 = vpop.permute.xlu0 %1060
    %v1063 = vadd.f32 %v350, %v1061
    %v1064 = vadd.f32 %v353, %v1061
    %v1065 = vadd.f32 %v358, %v1061
    %v1066 = vadd.f32 %v361, %v1061
    %v1067 = vadd.f32 %v366, %v1061
    %v1068 = vadd.f32 %v369, %v1061
    %v1069 = vadd.f32 %v374, %v1061
    %v1070 = vadd.f32 %v377, %v1061
    %v1071 = vadd.f32 %v382, %v1061
    %v1072 = vadd.f32 %v385, %v1061
    %v1073 = vadd.f32 %v390, %v1061
    %v1074 = vadd.f32 %v393, %v1061
    %v1075 = vadd.f32 %v398, %v1061
    %v1076 = vadd.f32 %v401, %v1061
    %v1077 = vadd.f32 %v406, %v1061
    %v1078 = vadd.f32 %v409, %v1061
    %v1079 = vmax.f32 %v1063, 0.0
    %v1080 = vmax.f32 %v1064, 0.0
    %v1081 = vmax.f32 %v1065, 0.0
    %v1082 = vmax.f32 %v1066, 0.0
    %v1083 = vmax.f32 %v1067, 0.0
    %v1084 = vmax.f32 %v1068, 0.0
    %v1085 = vmax.f32 %v1069, 0.0
    %v1086 = vmax.f32 %v1070, 0.0
    %v1087 = vmax.f32 %v1071, 0.0
    %v1088 = vmax.f32 %v1072, 0.0
    %v1089 = vmax.f32 %v1073, 0.0
    %v1090 = vmax.f32 %v1074, 0.0
    %v1091 = vmax.f32 %v1075, 0.0
    %v1092 = vmax.f32 %v1076, 0.0
    %v1093 = vmax.f32 %v1077, 0.0
    %v1094 = vmax.f32 %v1078, 0.0
    %v1095 = vpack.c.bf16 %v1080, %v1079
    %v1096 = vpack.c.bf16 %v1082, %v1081
    %v1097 = vpack.c.bf16 %v1084, %v1083
    %v1098 = vpack.c.bf16 %v1086, %v1085
    %v1099 = vpack.c.bf16 %v1088, %v1087
    %v1100 = vpack.c.bf16 %v1090, %v1089
    %v1101 = vpack.c.bf16 %v1092, %v1091
    %v1102 = vpack.c.bf16 %v1094, %v1093
    %s1103 = scalar_lea.vmem %s5, 16
    %v1104 = vld [vmem:[%s1103] sm:$0xf]
    %v1105 = vld [vmem:[%s1103 + $0x4] sm:$0xf]
    %v1106 = vld [vmem:[%s1103 + $0x8] sm:$0xf]
    %v1107 = vld [vmem:[%s1103 + $0xc] sm:$0xf]
    %v1108 = vld [vmem:[%s6 + $0x1] sm:$0x1]
    %v1109 = vlaneseq
    %v1110 = vshrl.u32 %v1109, 7
    %v1111 = vsub.s32 0, %v1110
    %v1112 = vrot.slane %v1108, %v1111
    %1121 = vrot.lane.b32.xlu0 %v1095, 96
    %v1122 = vpop.permute.xlu0 %1121
    %1123 = vrot.lane.b32.xlu0 %v1096, 96
    %v1124 = vpop.permute.xlu0 %1123
    %1125 = vrot.lane.b32.xlu0 %v1097, 96
    %v1126 = vpop.permute.xlu0 %1125
    %1127 = vrot.lane.b32.xlu0 %v1098, 96
    %v1128 = vpop.permute.xlu0 %1127
    %1129 = vrot.lane.b32.xlu0 %v1099, 96
    %v1130 = vpop.permute.xlu0 %1129
    %1131 = vrot.lane.b32.xlu0 %v1100, 96
    %v1132 = vpop.permute.xlu0 %1131
    %1133 = vrot.lane.b32.xlu0 %v1101, 96
    %v1134 = vpop.permute.xlu0 %1133
    %1135 = vrot.lane.b32.xlu0 %v1102, 96
    %v1136 = vpop.permute.xlu0 %1135
    %v1141 = vunpack.c.l.b16 %v1104
    %v1142 = vunpack.c.l.b16 %v1105
    %v1143 = vunpack.c.l.b16 %v1106
    %v1144 = vunpack.c.l.b16 %v1107
    %v1145 = vpack.c.b16 %v1142, %v1141
    %v1146 = vpack.c.b16 %v1144, %v1143
    %v1150 = vsel %vm478, %v1122, 0
    %v1153 = vsel %vm478, %v1124, 0
    %v1156 = vsel %vm478, %v1126, 0
    %v1159 = vsel %vm478, %v1128, 0
    %v1162 = vsel %vm478, %v1130, 0
    %v1165 = vsel %vm478, %v1132, 0
    %v1168 = vsel %vm478, %v1134, 0
    %v1171 = vsel %vm478, %v1136, 0
    %1173 = vmatprep.subr.bf16.mxu0 0
    %1174 = vmatpush1.bf16.msra.mxu0 %v1145
    %1175 = vmatprep.subr.bf16.mxu0 0
    %1176 = vmatpush1.bf16.msra.mxu0 %v1146
    %1177 = vmatprep.subr.bf16.mxu0 0
    %1178 = vmatpush1.bf16.msra.mxu0 0
    %1179 = vmatprep.subr.bf16.mxu0 0
    %1180 = vmatpush1.bf16.msra.mxu0 0
    %1181 = vmatprep.subr.bf16.mxu0 0
    %1182 = vmatpush1.bf16.msra.mxu0 0
    %1183 = vmatprep.subr.bf16.mxu0 0
    %1184 = vmatpush1.bf16.msra.mxu0 0
    %1185 = vmatprep.subr.bf16.mxu0 0
    %1186 = vmatpush1.bf16.msra.mxu0 0
    %1187 = vmatprep.subr.bf16.mxu0 0
    %1188 = vmatpush1.bf16.msra.mxu0 0
    %1189 = vmatprep.subr.bf16.mxu0 0
    %1190 = vmatpush1.bf16.msra.mxu0 0
    %1191 = vmatprep.subr.bf16.mxu0 0
    %1192 = vmatpush1.bf16.msra.mxu0 0
    %1193 = vmatprep.subr.bf16.mxu0 0
    %1194 = vmatpush1.bf16.msra.mxu0 0
    %1195 = vmatprep.subr.bf16.mxu0 0
    %1196 = vmatpush1.bf16.msra.mxu0 0
    %1197 = vmatprep.subr.bf16.mxu0 0
    %1198 = vmatpush1.bf16.msra.mxu0 0
    %1199 = vmatprep.subr.bf16.mxu0 0
    %1200 = vmatpush1.bf16.msra.mxu0 0
    %1201 = vmatprep.subr.bf16.mxu0 0
    %1202 = vmatpush1.bf16.msra.mxu0 0
    %1203 = vmatprep.subr.bf16.mxu0 0
    %1204 = vmatpush1.bf16.msra.mxu0 0
    %1205 = vmatprep.mubr.bf16.mxu0 0
    %1206 = vmatmul.mubr.bf16.gmra.mrb[0].mxu0 %v1150
    %v1207 = vpop.f32.mrb[0].mxu0
    %v1208 = vadd.f32 %v1112, %v1207
    %v1209 = vpop.f32.mrb[0].mxu0
    %v1210 = vpop.f32.mrb[0].mxu0
    %v1211 = vadd.f32 %v1112, %v1210
    %v1212 = vpop.f32.mrb[0].mxu0
    %1213 = vmatprep.mubr.bf16.mxu0 0
    %1214 = vmatmul.mubr.bf16.gmra.mrb[0].mxu0 %v1153
    %v1215 = vpop.f32.mrb[0].mxu0
    %v1216 = vadd.f32 %v1112, %v1215
    %v1217 = vpop.f32.mrb[0].mxu0
    %v1218 = vpop.f32.mrb[0].mxu0
    %v1219 = vadd.f32 %v1112, %v1218
    %v1220 = vpop.f32.mrb[0].mxu0
    %1221 = vmatprep.mubr.bf16.mxu0 0
    %1222 = vmatmul.mubr.bf16.gmra.mrb[0].mxu0 %v1156
    %v1223 = vpop.f32.mrb[0].mxu0
    %v1224 = vadd.f32 %v1112, %v1223
    %v1225 = vpop.f32.mrb[0].mxu0
    %v1226 = vpop.f32.mrb[0].mxu0
    %v1227 = vadd.f32 %v1112, %v1226
    %v1228 = vpop.f32.mrb[0].mxu0
    %1229 = vmatprep.mubr.bf16.mxu0 0
    %1230 = vmatmul.mubr.bf16.gmra.mrb[0].mxu0 %v1159
    %v1231 = vpop.f32.mrb[0].mxu0
    %v1232 = vadd.f32 %v1112, %v1231
    %v1233 = vpop.f32.mrb[0].mxu0
    %v1234 = vpop.f32.mrb[0].mxu0
    %v1235 = vadd.f32 %v1112, %v1234
    %v1236 = vpop.f32.mrb[0].mxu0
    %1237 = vmatprep.mubr.bf16.mxu0 0
    %1238 = vmatmul.mubr.bf16.gmra.mrb[0].mxu0 %v1162
    %v1239 = vpop.f32.mrb[0].mxu0
    %v1240 = vadd.f32 %v1112, %v1239
    %v1241 = vpop.f32.mrb[0].mxu0
    %v1242 = vpop.f32.mrb[0].mxu0
    %v1243 = vadd.f32 %v1112, %v1242
    %v1244 = vpop.f32.mrb[0].mxu0
    %1245 = vmatprep.mubr.bf16.mxu0 0
    %1246 = vmatmul.mubr.bf16.gmra.mrb[0].mxu0 %v1165
    %v1247 = vpop.f32.mrb[0].mxu0
    %v1248 = vadd.f32 %v1112, %v1247
    %v1249 = vpop.f32.mrb[0].mxu0
    %v1250 = vpop.f32.mrb[0].mxu0
    %v1251 = vadd.f32 %v1112, %v1250
    %v1252 = vpop.f32.mrb[0].mxu0
    %1253 = vmatprep.mubr.bf16.mxu0 0
    %1254 = vmatmul.mubr.bf16.gmra.mrb[0].mxu0 %v1168
    %v1255 = vpop.f32.mrb[0].mxu0
    %v1256 = vadd.f32 %v1112, %v1255
    %v1257 = vpop.f32.mrb[0].mxu0
    %v1258 = vpop.f32.mrb[0].mxu0
    %v1259 = vadd.f32 %v1112, %v1258
    %v1260 = vpop.f32.mrb[0].mxu0
    %1261 = vmatprep.mubr.bf16.mxu0 0
    %1262 = vmatmul.mubr.bf16.gmra.mrb[0].mxu0 %v1171
    %v1263 = vpop.f32.mrb[0].mxu0
    %v1264 = vadd.f32 %v1112, %v1263
    %v1265 = vpop.f32.mrb[0].mxu0
    %v1266 = vpop.f32.mrb[0].mxu0
    %v1267 = vadd.f32 %v1112, %v1266
    %v1268 = vpop.f32.mrb[0].mxu0
    %1269 = vdwg.mxu0
    %v1270 = vmax.f32 %v1208, 0.0
    %v1271 = vmax.f32 %v1211, 0.0
    %v1272 = vmax.f32 %v1216, 0.0
    %v1273 = vmax.f32 %v1219, 0.0
    %v1274 = vmax.f32 %v1224, 0.0
    %v1275 = vmax.f32 %v1227, 0.0
    %v1276 = vmax.f32 %v1232, 0.0
    %v1277 = vmax.f32 %v1235, 0.0
    %v1278 = vmax.f32 %v1240, 0.0
    %v1279 = vmax.f32 %v1243, 0.0
    %v1280 = vmax.f32 %v1248, 0.0
    %v1281 = vmax.f32 %v1251, 0.0
    %v1282 = vmax.f32 %v1256, 0.0
    %v1283 = vmax.f32 %v1259, 0.0
    %v1284 = vmax.f32 %v1264, 0.0
    %v1285 = vmax.f32 %v1267, 0.0
    %v1286 = vpack.c.bf16 %v1271, %v1270
    %v1287 = vpack.c.bf16 %v1273, %v1272
    %v1288 = vpack.c.bf16 %v1275, %v1274
    %v1289 = vpack.c.bf16 %v1277, %v1276
    %v1290 = vpack.c.bf16 %v1279, %v1278
    %v1291 = vpack.c.bf16 %v1281, %v1280
    %v1292 = vpack.c.bf16 %v1283, %v1282
    %v1293 = vpack.c.bf16 %v1285, %v1284
    %s1294 = scalar_lea.vmem %s7, 16
    %v1295 = vld [vmem:[%s1294] sm:$0xf]
    %v1296 = vld [vmem:[%s1294 + $0x4] sm:$0xf]
    %v1297 = vld [vmem:[%s1294 + $0x8] sm:$0xf]
    %v1298 = vld [vmem:[%s1294 + $0xc] sm:$0xf]
    %v1299 = vld [vmem:[%s8 + $0x1] sm:$0x1]
    %v1300 = vlaneseq
    %v1301 = vshrl.u32 %v1300, 7
    %v1302 = vsub.s32 0, %v1301
    %v1303 = vrot.slane %v1299, %v1302
    %v1308 = vunpack.c.l.b16 %v1295
    %v1309 = vunpack.c.l.b16 %v1296
    %v1310 = vunpack.c.l.b16 %v1297
    %v1311 = vunpack.c.l.b16 %v1298
    %v1312 = vpack.c.b16 %v1309, %v1308
    %v1313 = vpack.c.b16 %v1311, %v1310
    %v1317 = vsel %vm478, %v1286, 0
    %v1320 = vsel %vm478, %v1287, 0
    %v1323 = vsel %vm478, %v1288, 0
    %v1326 = vsel %vm478, %v1289, 0
    %v1329 = vsel %vm478, %v1290, 0
    %v1332 = vsel %vm478, %v1291, 0
    %v1335 = vsel %vm478, %v1292, 0
    %v1338 = vsel %vm478, %v1293, 0
    %1340 = vmatprep.subr.bf16.mxu0 0
    %1341 = vmatpush1.bf16.msra.mxu0 %v1312
    %1342 = vmatprep.subr.bf16.mxu0 0
    %1343 = vmatpush1.bf16.msra.mxu0 %v1313
    %1344 = vmatprep.subr.bf16.mxu0 0
    %1345 = vmatpush1.bf16.msra.mxu0 0
    %1346 = vmatprep.subr.bf16.mxu0 0
    %1347 = vmatpush1.bf16.msra.mxu0 0
    %1348 = vmatprep.subr.bf16.mxu0 0
    %1349 = vmatpush1.bf16.msra.mxu0 0
    %1350 = vmatprep.subr.bf16.mxu0 0
    %1351 = vmatpush1.bf16.msra.mxu0 0
    %1352 = vmatprep.subr.bf16.mxu0 0
    %1353 = vmatpush1.bf16.msra.mxu0 0
    %1354 = vmatprep.subr.bf16.mxu0 0
    %1355 = vmatpush1.bf16.msra.mxu0 0
    %1356 = vmatprep.subr.bf16.mxu0 0
    %1357 = vmatpush1.bf16.msra.mxu0 0
    %1358 = vmatprep.subr.bf16.mxu0 0
    %1359 = vmatpush1.bf16.msra.mxu0 0
    %1360 = vmatprep.subr.bf16.mxu0 0
    %1361 = vmatpush1.bf16.msra.mxu0 0
    %1362 = vmatprep.subr.bf16.mxu0 0
    %1363 = vmatpush1.bf16.msra.mxu0 0
    %1364 = vmatprep.subr.bf16.mxu0 0
    %1365 = vmatpush1.bf16.msra.mxu0 0
    %1366 = vmatprep.subr.bf16.mxu0 0
    %1367 = vmatpush1.bf16.msra.mxu0 0
    %1368 = vmatprep.subr.bf16.mxu0 0
    %1369 = vmatpush1.bf16.msra.mxu0 0
    %1370 = vmatprep.subr.bf16.mxu0 0
    %1371 = vmatpush1.bf16.msra.mxu0 0
    %1372 = vmatprep.mubr.bf16.mxu0 0
    %1373 = vmatmul.mubr.bf16.gmra.mrb[0].mxu0 %v1317
    %v1374 = vpop.f32.mrb[0].mxu0
    %v1375 = vadd.f32 %v1303, %v1374
    %v1376 = vpop.f32.mrb[0].mxu0
    %v1377 = vpop.f32.mrb[0].mxu0
    %v1378 = vadd.f32 %v1303, %v1377
    %v1379 = vpop.f32.mrb[0].mxu0
    %1380 = vmatprep.mubr.bf16.mxu0 0
    %1381 = vmatmul.mubr.bf16.gmra.mrb[0].mxu0 %v1320
    %v1382 = vpop.f32.mrb[0].mxu0
    %v1383 = vadd.f32 %v1303, %v1382
    %v1384 = vpop.f32.mrb[0].mxu0
    %v1385 = vpop.f32.mrb[0].mxu0
    %v1386 = vadd.f32 %v1303, %v1385
    %v1387 = vpop.f32.mrb[0].mxu0
    %1388 = vmatprep.mubr.bf16.mxu0 0
    %1389 = vmatmul.mubr.bf16.gmra.mrb[0].mxu0 %v1323
    %v1390 = vpop.f32.mrb[0].mxu0
    %v1391 = vadd.f32 %v1303, %v1390
    %v1392 = vpop.f32.mrb[0].mxu0
    %v1393 = vpop.f32.mrb[0].mxu0
    %v1394 = vadd.f32 %v1303, %v1393
    %v1395 = vpop.f32.mrb[0].mxu0
    %1396 = vmatprep.mubr.bf16.mxu0 0
    %1397 = vmatmul.mubr.bf16.gmra.mrb[0].mxu0 %v1326
    %v1398 = vpop.f32.mrb[0].mxu0
    %v1399 = vadd.f32 %v1303, %v1398
    %v1400 = vpop.f32.mrb[0].mxu0
    %v1401 = vpop.f32.mrb[0].mxu0
    %v1402 = vadd.f32 %v1303, %v1401
    %v1403 = vpop.f32.mrb[0].mxu0
    %1404 = vmatprep.mubr.bf16.mxu0 0
    %1405 = vmatmul.mubr.bf16.gmra.mrb[0].mxu0 %v1329
    %v1406 = vpop.f32.mrb[0].mxu0
    %v1407 = vadd.f32 %v1303, %v1406
    %v1408 = vpop.f32.mrb[0].mxu0
    %v1409 = vpop.f32.mrb[0].mxu0
    %v1410 = vadd.f32 %v1303, %v1409
    %v1411 = vpop.f32.mrb[0].mxu0
    %1412 = vmatprep.mubr.bf16.mxu0 0
    %1413 = vmatmul.mubr.bf16.gmra.mrb[0].mxu0 %v1332
    %v1414 = vpop.f32.mrb[0].mxu0
    %v1415 = vadd.f32 %v1303, %v1414
    %v1416 = vpop.f32.mrb[0].mxu0
    %v1417 = vpop.f32.mrb[0].mxu0
    %v1418 = vadd.f32 %v1303, %v1417
    %v1419 = vpop.f32.mrb[0].mxu0
    %1420 = vmatprep.mubr.bf16.mxu0 0
    %1421 = vmatmul.mubr.bf16.gmra.mrb[0].mxu0 %v1335
    %v1422 = vpop.f32.mrb[0].mxu0
    %v1423 = vadd.f32 %v1303, %v1422
    %v1424 = vpop.f32.mrb[0].mxu0
    %v1425 = vpop.f32.mrb[0].mxu0
    %v1426 = vadd.f32 %v1303, %v1425
    %v1427 = vpop.f32.mrb[0].mxu0
    %1428 = vmatprep.mubr.bf16.mxu0 0
    %1429 = vmatmul.mubr.bf16.gmra.mrb[0].mxu0 %v1338
    %v1430 = vpop.f32.mrb[0].mxu0
    %v1431 = vadd.f32 %v1303, %v1430
    %v1432 = vpop.f32.mrb[0].mxu0
    %v1433 = vpop.f32.mrb[0].mxu0
    %v1434 = vadd.f32 %v1303, %v1433
    %v1435 = vpop.f32.mrb[0].mxu0
    %1436 = vdwg.mxu0
    %v1437 = vmax.f32 %v1375, 0.0
    %v1438 = vmax.f32 %v1378, 0.0
    %v1439 = vmax.f32 %v1383, 0.0
    %v1440 = vmax.f32 %v1386, 0.0
    %v1441 = vmax.f32 %v1391, 0.0
    %v1442 = vmax.f32 %v1394, 0.0
    %v1443 = vmax.f32 %v1399, 0.0
    %v1444 = vmax.f32 %v1402, 0.0
    %v1445 = vmax.f32 %v1407, 0.0
    %v1446 = vmax.f32 %v1410, 0.0
    %v1447 = vmax.f32 %v1415, 0.0
    %v1448 = vmax.f32 %v1418, 0.0
    %v1449 = vmax.f32 %v1423, 0.0
    %v1450 = vmax.f32 %v1426, 0.0
    %v1451 = vmax.f32 %v1431, 0.0
    %v1452 = vmax.f32 %v1434, 0.0
    %v1453 = vld [vmem:[%s9 + $0x1] sm:$0x1]
    %v1454 = vlaneseq
    %v1455 = vshrl.u32 %v1454, 7
    %v1456 = vsub.s32 0, %v1455
    %v1457 = vrot.slane %v1453, %v1456
    %v1458 = vmul.f32 %v1437, %v1457
    %v1459 = vmul.f32 %v1438, %v1457
    %v1460 = vmul.f32 %v1439, %v1457
    %v1461 = vmul.f32 %v1440, %v1457
    %v1462 = vmul.f32 %v1441, %v1457
    %v1463 = vmul.f32 %v1442, %v1457
    %v1464 = vmul.f32 %v1443, %v1457
    %v1465 = vmul.f32 %v1444, %v1457
    %v1466 = vmul.f32 %v1445, %v1457
    %v1467 = vmul.f32 %v1446, %v1457
    %v1468 = vmul.f32 %v1447, %v1457
    %v1469 = vmul.f32 %v1448, %v1457
    %v1470 = vmul.f32 %v1449, %v1457
    %v1471 = vmul.f32 %v1450, %v1457
    %v1472 = vmul.f32 %v1451, %v1457
    %v1473 = vmul.f32 %v1452, %v1457
    %v1474 = vsel %vm478, %v1458, 0.0
    %1475 = vadd.xlane.f32.xlu0 %v1474
    %v1476 = vpop.xlane.xlu0 %1475
    %v1477 = vsel %vm478, %v1459, 0.0
    %1478 = vadd.xlane.f32.xlu0 %v1477
    %v1479 = vpop.xlane.xlu0 %1478
    %v1480 = vsel %vm478, %v1460, 0.0
    %1481 = vadd.xlane.f32.xlu0 %v1480
    %v1482 = vpop.xlane.xlu0 %1481
    %v1483 = vsel %vm478, %v1461, 0.0
    %1484 = vadd.xlane.f32.xlu0 %v1483
    %v1485 = vpop.xlane.xlu0 %1484
    %v1486 = vsel %vm478, %v1462, 0.0
    %1487 = vadd.xlane.f32.xlu0 %v1486
    %v1488 = vpop.xlane.xlu0 %1487
    %v1489 = vsel %vm478, %v1463, 0.0
    %1490 = vadd.xlane.f32.xlu0 %v1489
    %v1491 = vpop.xlane.xlu0 %1490
    %v1492 = vsel %vm478, %v1464, 0.0
    %1493 = vadd.xlane.f32.xlu0 %v1492
    %v1494 = vpop.xlane.xlu0 %1493
    %v1495 = vsel %vm478, %v1465, 0.0
    %1496 = vadd.xlane.f32.xlu0 %v1495
    %v1497 = vpop.xlane.xlu0 %1496
    %v1498 = vsel %vm478, %v1466, 0.0
    %1499 = vadd.xlane.f32.xlu0 %v1498
    %v1500 = vpop.xlane.xlu0 %1499
    %v1501 = vsel %vm478, %v1467, 0.0
    %1502 = vadd.xlane.f32.xlu0 %v1501
    %v1503 = vpop.xlane.xlu0 %1502
    %v1504 = vsel %vm478, %v1468, 0.0
    %1505 = vadd.xlane.f32.xlu0 %v1504
    %v1506 = vpop.xlane.xlu0 %1505
    %v1507 = vsel %vm478, %v1469, 0.0
    %1508 = vadd.xlane.f32.xlu0 %v1507
    %v1509 = vpop.xlane.xlu0 %1508
    %v1510 = vsel %vm478, %v1470, 0.0
    %1511 = vadd.xlane.f32.xlu0 %v1510
    %v1512 = vpop.xlane.xlu0 %1511
    %v1513 = vsel %vm478, %v1471, 0.0
    %1514 = vadd.xlane.f32.xlu0 %v1513
    %v1515 = vpop.xlane.xlu0 %1514
    %v1516 = vsel %vm478, %v1472, 0.0
    %1517 = vadd.xlane.f32.xlu0 %v1516
    %v1518 = vpop.xlane.xlu0 %1517
    %v1519 = vsel %vm478, %v1473, 0.0
    %1520 = vadd.xlane.f32.xlu0 %v1519
    %v1521 = vpop.xlane.xlu0 %1520
    %v1522 = vld [vmem:[%s10 + $0x1] sm:$0x1]
    %1524 = vset.pattern.permute.xlu0 0
    %1525 = vperm.xlu0 %1524, %v1522
    %v1526 = vpop.permute.xlu0 %1525
    %v1527 = vlaneseq
    %v1528 = vshrl.u32 %v1527, 7
    %v1529 = vsub.s32 0, %v1528
    %v1530 = vrot.slane %v1526, %v1529
    %v1532 = vadd.f32 %v1476, %v1530
    %v1533 = vadd.f32 %v1479, %v1530
    %v1534 = vadd.f32 %v1482, %v1530
    %v1535 = vadd.f32 %v1485, %v1530
    %v1536 = vadd.f32 %v1488, %v1530
    %v1537 = vadd.f32 %v1491, %v1530
    %v1538 = vadd.f32 %v1494, %v1530
    %v1539 = vadd.f32 %v1497, %v1530
    %v1540 = vadd.f32 %v1500, %v1530
    %v1541 = vadd.f32 %v1503, %v1530
    %v1542 = vadd.f32 %v1506, %v1530
    %v1543 = vadd.f32 %v1509, %v1530
    %v1544 = vadd.f32 %v1512, %v1530
    %v1545 = vadd.f32 %v1515, %v1530
    %v1546 = vadd.f32 %v1518, %v1530
    %v1547 = vadd.f32 %v1521, %v1530
    %1564 = vset.pattern.permute.xlu0 0
    %1565 = vperm.xlu0 %1564, %v1532
    %v1566 = vpop.permute.xlu0 %1565
    %1567 = vset.pattern.permute.xlu0 0
    %1568 = vperm.xlu0 %1567, %v1533
    %v1569 = vpop.permute.xlu0 %1568
    %1570 = vset.pattern.permute.xlu0 0
    %1571 = vperm.xlu0 %1570, %v1534
    %v1572 = vpop.permute.xlu0 %1571
    %1573 = vset.pattern.permute.xlu0 0
    %1574 = vperm.xlu0 %1573, %v1535
    %v1575 = vpop.permute.xlu0 %1574
    %1576 = vset.pattern.permute.xlu0 0
    %1577 = vperm.xlu0 %1576, %v1536
    %v1578 = vpop.permute.xlu0 %1577
    %1579 = vset.pattern.permute.xlu0 0
    %1580 = vperm.xlu0 %1579, %v1537
    %v1581 = vpop.permute.xlu0 %1580
    %1582 = vset.pattern.permute.xlu0 0
    %1583 = vperm.xlu0 %1582, %v1538
    %v1584 = vpop.permute.xlu0 %1583
    %1585 = vset.pattern.permute.xlu0 0
    %1586 = vperm.xlu0 %1585, %v1539
    %v1587 = vpop.permute.xlu0 %1586
    %1588 = vset.pattern.permute.xlu0 0
    %1589 = vperm.xlu0 %1588, %v1540
    %v1590 = vpop.permute.xlu0 %1589
    %1591 = vset.pattern.permute.xlu0 0
    %1592 = vperm.xlu0 %1591, %v1541
    %v1593 = vpop.permute.xlu0 %1592
    %1594 = vset.pattern.permute.xlu0 0
    %1595 = vperm.xlu0 %1594, %v1542
    %v1596 = vpop.permute.xlu0 %1595
    %1597 = vset.pattern.permute.xlu0 0
    %1598 = vperm.xlu0 %1597, %v1543
    %v1599 = vpop.permute.xlu0 %1598
    %1600 = vset.pattern.permute.xlu0 0
    %1601 = vperm.xlu0 %1600, %v1544
    %v1602 = vpop.permute.xlu0 %1601
    %1603 = vset.pattern.permute.xlu0 0
    %1604 = vperm.xlu0 %1603, %v1545
    %v1605 = vpop.permute.xlu0 %1604
    %1606 = vset.pattern.permute.xlu0 0
    %1607 = vperm.xlu0 %1606, %v1546
    %v1608 = vpop.permute.xlu0 %1607
    %1609 = vset.pattern.permute.xlu0 0
    %1610 = vperm.xlu0 %1609, %v1547
    %v1611 = vpop.permute.xlu0 %1610
    %v1612 = vlaneseq
    %v1613 = vshrl.u32 %v1612, 7
    %v1614 = vsub.s32 %v942, %v1613
    %v1615 = vrot.slane %v1566, %v1614
    %v1616 = vlaneseq
    %v1617 = vshrl.u32 %v1616, 7
    %v1618 = vsub.s32 %v947, %v1617
    %v1619 = vrot.slane %v1569, %v1618
    %v1620 = vsel %vm952, %v1619, %v1615
    %v1621 = vlaneseq
    %v1622 = vshrl.u32 %v1621, 7
    %v1623 = vsub.s32 %v954, %v1622
    %v1624 = vrot.slane %v1572, %v1623
    %v1625 = vsel %vm959, %v1624, %v1620
    %v1626 = vlaneseq
    %v1627 = vshrl.u32 %v1626, 7
    %v1628 = vsub.s32 %v961, %v1627
    %v1629 = vrot.slane %v1575, %v1628
    %v1630 = vsel %vm966, %v1629, %v1625
    %v1631 = vlaneseq
    %v1632 = vshrl.u32 %v1631, 7
    %v1633 = vsub.s32 %v968, %v1632
    %v1634 = vrot.slane %v1578, %v1633
    %v1635 = vsel %vm973, %v1634, %v1630
    %v1636 = vlaneseq
    %v1637 = vshrl.u32 %v1636, 7
    %v1638 = vsub.s32 %v975, %v1637
    %v1639 = vrot.slane %v1581, %v1638
    %v1640 = vsel %vm980, %v1639, %v1635
    %v1641 = vlaneseq
    %v1642 = vshrl.u32 %v1641, 7
    %v1643 = vsub.s32 %v982, %v1642
    %v1644 = vrot.slane %v1584, %v1643
    %v1645 = vsel %vm987, %v1644, %v1640
    %v1646 = vlaneseq
    %v1647 = vshrl.u32 %v1646, 7
    %v1648 = vsub.s32 %v989, %v1647
    %v1649 = vrot.slane %v1587, %v1648
    %v1650 = vsel %vm994, %v1649, %v1645
    %v1651 = vlaneseq
    %v1652 = vshrl.u32 %v1651, 7
    %v1653 = vsub.s32 %v996, %v1652
    %v1654 = vrot.slane %v1590, %v1653
    %v1655 = vsel %vm1001, %v1654, %v1650
    %v1656 = vlaneseq
    %v1657 = vshrl.u32 %v1656, 7
    %v1658 = vsub.s32 %v1003, %v1657
    %v1659 = vrot.slane %v1593, %v1658
    %v1660 = vsel %vm1008, %v1659, %v1655
    %v1661 = vlaneseq
    %v1662 = vshrl.u32 %v1661, 7
    %v1663 = vsub.s32 %v1010, %v1662
    %v1664 = vrot.slane %v1596, %v1663
    %v1665 = vsel %vm1015, %v1664, %v1660
    %v1666 = vlaneseq
    %v1667 = vshrl.u32 %v1666, 7
    %v1668 = vsub.s32 %v1017, %v1667
    %v1669 = vrot.slane %v1599, %v1668
    %v1670 = vsel %vm1022, %v1669, %v1665
    %v1671 = vlaneseq
    %v1672 = vshrl.u32 %v1671, 7
    %v1673 = vsub.s32 %v1024, %v1672
    %v1674 = vrot.slane %v1602, %v1673
    %v1675 = vsel %vm1029, %v1674, %v1670
    %v1676 = vlaneseq
    %v1677 = vshrl.u32 %v1676, 7
    %v1678 = vsub.s32 %v1031, %v1677
    %v1679 = vrot.slane %v1605, %v1678
    %v1680 = vsel %vm1036, %v1679, %v1675
    %v1681 = vlaneseq
    %v1682 = vshrl.u32 %v1681, 7
    %v1683 = vsub.s32 %v1038, %v1682
    %v1684 = vrot.slane %v1608, %v1683
    %v1685 = vsel %vm1043, %v1684, %v1680
    %v1686 = vlaneseq
    %v1687 = vshrl.u32 %v1686, 7
    %v1688 = vsub.s32 %v1045, %v1687
    %v1689 = vrot.slane %v1611, %v1688
    %v1690 = vsel %vm1050, %v1689, %v1685
    %1692 = vst [vmem:[#allocation2 + $0x1] sm:$0x1] %v1690
    %v1693 = vld [vmem:[%s4 + $0x2] sm:$0x1]
    %v1694 = vlaneseq
    %v1695 = vshrl.u32 %v1694, 7
    %v1696 = vsub.s32 0, %v1695
    %v1697 = vrot.slane %v1693, %v1696
    %1699 = vrot.lane.b32.xlu0 %v1697, 64
    %v1700 = vpop.permute.xlu0 %1699
    %v1702 = vadd.f32 %v350, %v1700
    %v1703 = vadd.f32 %v353, %v1700
    %v1704 = vadd.f32 %v358, %v1700
    %v1705 = vadd.f32 %v361, %v1700
    %v1706 = vadd.f32 %v366, %v1700
    %v1707 = vadd.f32 %v369, %v1700
    %v1708 = vadd.f32 %v374, %v1700
    %v1709 = vadd.f32 %v377, %v1700
    %v1710 = vadd.f32 %v382, %v1700
    %v1711 = vadd.f32 %v385, %v1700
    %v1712 = vadd.f32 %v390, %v1700
    %v1713 = vadd.f32 %v393, %v1700
    %v1714 = vadd.f32 %v398, %v1700
    %v1715 = vadd.f32 %v401, %v1700
    %v1716 = vadd.f32 %v406, %v1700
    %v1717 = vadd.f32 %v409, %v1700
    %v1718 = vmax.f32 %v1702, 0.0
    %v1719 = vmax.f32 %v1703, 0.0
    %v1720 = vmax.f32 %v1704, 0.0
    %v1721 = vmax.f32 %v1705, 0.0
    %v1722 = vmax.f32 %v1706, 0.0
    %v1723 = vmax.f32 %v1707, 0.0
    %v1724 = vmax.f32 %v1708, 0.0
    %v1725 = vmax.f32 %v1709, 0.0
    %v1726 = vmax.f32 %v1710, 0.0
    %v1727 = vmax.f32 %v1711, 0.0
    %v1728 = vmax.f32 %v1712, 0.0
    %v1729 = vmax.f32 %v1713, 0.0
    %v1730 = vmax.f32 %v1714, 0.0
    %v1731 = vmax.f32 %v1715, 0.0
    %v1732 = vmax.f32 %v1716, 0.0
    %v1733 = vmax.f32 %v1717, 0.0
    %v1734 = vpack.c.bf16 %v1719, %v1718
    %v1735 = vpack.c.bf16 %v1721, %v1720
    %v1736 = vpack.c.bf16 %v1723, %v1722
    %v1737 = vpack.c.bf16 %v1725, %v1724
    %v1738 = vpack.c.bf16 %v1727, %v1726
    %v1739 = vpack.c.bf16 %v1729, %v1728
    %v1740 = vpack.c.bf16 %v1731, %v1730
    %v1741 = vpack.c.bf16 %v1733, %v1732
    %s1742 = scalar_lea.vmem %s5, 32
    %v1743 = vld [vmem:[%s1742] sm:$0xf]
    %v1744 = vld [vmem:[%s1742 + $0x4] sm:$0xf]
    %v1745 = vld [vmem:[%s1742 + $0x8] sm:$0xf]
    %v1746 = vld [vmem:[%s1742 + $0xc] sm:$0xf]
    %v1747 = vld [vmem:[%s6 + $0x2] sm:$0x1]
    %v1748 = vlaneseq
    %v1749 = vshrl.u32 %v1748, 7
    %v1750 = vsub.s32 0, %v1749
    %v1751 = vrot.slane %v1747, %v1750
    %1760 = vrot.lane.b32.xlu0 %v1734, 64
    %v1761 = vpop.permute.xlu0 %1760
    %1762 = vrot.lane.b32.xlu0 %v1735, 64
    %v1763 = vpop.permute.xlu0 %1762
    %1764 = vrot.lane.b32.xlu0 %v1736, 64
    %v1765 = vpop.permute.xlu0 %1764
    %1766 = vrot.lane.b32.xlu0 %v1737, 64
    %v1767 = vpop.permute.xlu0 %1766
    %1768 = vrot.lane.b32.xlu0 %v1738, 64
    %v1769 = vpop.permute.xlu0 %1768
    %1770 = vrot.lane.b32.xlu0 %v1739, 64
    %v1771 = vpop.permute.xlu0 %1770
    %1772 = vrot.lane.b32.xlu0 %v1740, 64
    %v1773 = vpop.permute.xlu0 %1772
    %1774 = vrot.lane.b32.xlu0 %v1741, 64
    %v1775 = vpop.permute.xlu0 %1774
    %v1780 = vunpack.c.l.b16 %v1743
    %v1781 = vunpack.c.l.b16 %v1744
    %v1782 = vunpack.c.l.b16 %v1745
    %v1783 = vunpack.c.l.b16 %v1746
    %v1784 = vpack.c.b16 %v1781, %v1780
    %v1785 = vpack.c.b16 %v1783, %v1782
    %v1789 = vsel %vm478, %v1761, 0
    %v1792 = vsel %vm478, %v1763, 0
    %v1795 = vsel %vm478, %v1765, 0
    %v1798 = vsel %vm478, %v1767, 0
    %v1801 = vsel %vm478, %v1769, 0
    %v1804 = vsel %vm478, %v1771, 0
    %v1807 = vsel %vm478, %v1773, 0
    %v1810 = vsel %vm478, %v1775, 0
    %1812 = vmatprep.subr.bf16.mxu0 0
    %1813 = vmatpush1.bf16.msra.mxu0 %v1784
    %1814 = vmatprep.subr.bf16.mxu0 0
    %1815 = vmatpush1.bf16.msra.mxu0 %v1785
    %1816 = vmatprep.subr.bf16.mxu0 0
    %1817 = vmatpush1.bf16.msra.mxu0 0
    %1818 = vmatprep.subr.bf16.mxu0 0
    %1819 = vmatpush1.bf16.msra.mxu0 0
    %1820 = vmatprep.subr.bf16.mxu0 0
    %1821 = vmatpush1.bf16.msra.mxu0 0
    %1822 = vmatprep.subr.bf16.mxu0 0
    %1823 = vmatpush1.bf16.msra.mxu0 0
    %1824 = vmatprep.subr.bf16.mxu0 0
    %1825 = vmatpush1.bf16.msra.mxu0 0
    %1826 = vmatprep.subr.bf16.mxu0 0
    %1827 = vmatpush1.bf16.msra.mxu0 0
    %1828 = vmatprep.subr.bf16.mxu0 0
    %1829 = vmatpush1.bf16.msra.mxu0 0
    %1830 = vmatprep.subr.bf16.mxu0 0
    %1831 = vmatpush1.bf16.msra.mxu0 0
    %1832 = vmatprep.subr.bf16.mxu0 0
    %1833 = vmatpush1.bf16.msra.mxu0 0
    %1834 = vmatprep.subr.bf16.mxu0 0
    %1835 = vmatpush1.bf16.msra.mxu0 0
    %1836 = vmatprep.subr.bf16.mxu0 0
    %1837 = vmatpush1.bf16.msra.mxu0 0
    %1838 = vmatprep.subr.bf16.mxu0 0
    %1839 = vmatpush1.bf16.msra.mxu0 0
    %1840 = vmatprep.subr.bf16.mxu0 0
    %1841 = vmatpush1.bf16.msra.mxu0 0
    %1842 = vmatprep.subr.bf16.mxu0 0
    %1843 = vmatpush1.bf16.msra.mxu0 0
    %1844 = vmatprep.mubr.bf16.mxu0 0
    %1845 = vmatmul.mubr.bf16.gmra.mrb[0].mxu0 %v1789
    %v1846 = vpop.f32.mrb[0].mxu0
    %v1847 = vadd.f32 %v1751, %v1846
    %v1848 = vpop.f32.mrb[0].mxu0
    %v1849 = vpop.f32.mrb[0].mxu0
    %v1850 = vadd.f32 %v1751, %v1849
    %v1851 = vpop.f32.mrb[0].mxu0
    %1852 = vmatprep.mubr.bf16.mxu0 0
    %1853 = vmatmul.mubr.bf16.gmra.mrb[0].mxu0 %v1792
    %v1854 = vpop.f32.mrb[0].mxu0
    %v1855 = vadd.f32 %v1751, %v1854
    %v1856 = vpop.f32.mrb[0].mxu0
    %v1857 = vpop.f32.mrb[0].mxu0
    %v1858 = vadd.f32 %v1751, %v1857
    %v1859 = vpop.f32.mrb[0].mxu0
    %1860 = vmatprep.mubr.bf16.mxu0 0
    %1861 = vmatmul.mubr.bf16.gmra.mrb[0].mxu0 %v1795
    %v1862 = vpop.f32.mrb[0].mxu0
    %v1863 = vadd.f32 %v1751, %v1862
    %v1864 = vpop.f32.mrb[0].mxu0
    %v1865 = vpop.f32.mrb[0].mxu0
    %v1866 = vadd.f32 %v1751, %v1865
    %v1867 = vpop.f32.mrb[0].mxu0
    %1868 = vmatprep.mubr.bf16.mxu0 0
    %1869 = vmatmul.mubr.bf16.gmra.mrb[0].mxu0 %v1798
    %v1870 = vpop.f32.mrb[0].mxu0
    %v1871 = vadd.f32 %v1751, %v1870
    %v1872 = vpop.f32.mrb[0].mxu0
    %v1873 = vpop.f32.mrb[0].mxu0
    %v1874 = vadd.f32 %v1751, %v1873
    %v1875 = vpop.f32.mrb[0].mxu0
    %1876 = vmatprep.mubr.bf16.mxu0 0
    %1877 = vmatmul.mubr.bf16.gmra.mrb[0].mxu0 %v1801
    %v1878 = vpop.f32.mrb[0].mxu0
    %v1879 = vadd.f32 %v1751, %v1878
    %v1880 = vpop.f32.mrb[0].mxu0
    %v1881 = vpop.f32.mrb[0].mxu0
    %v1882 = vadd.f32 %v1751, %v1881
    %v1883 = vpop.f32.mrb[0].mxu0
    %1884 = vmatprep.mubr.bf16.mxu0 0
    %1885 = vmatmul.mubr.bf16.gmra.mrb[0].mxu0 %v1804
    %v1886 = vpop.f32.mrb[0].mxu0
    %v1887 = vadd.f32 %v1751, %v1886
    %v1888 = vpop.f32.mrb[0].mxu0
    %v1889 = vpop.f32.mrb[0].mxu0
    %v1890 = vadd.f32 %v1751, %v1889
    %v1891 = vpop.f32.mrb[0].mxu0
    %1892 = vmatprep.mubr.bf16.mxu0 0
    %1893 = vmatmul.mubr.bf16.gmra.mrb[0].mxu0 %v1807
    %v1894 = vpop.f32.mrb[0].mxu0
    %v1895 = vadd.f32 %v1751, %v1894
    %v1896 = vpop.f32.mrb[0].mxu0
    %v1897 = vpop.f32.mrb[0].mxu0
    %v1898 = vadd.f32 %v1751, %v1897
    %v1899 = vpop.f32.mrb[0].mxu0
    %1900 = vmatprep.mubr.bf16.mxu0 0
    %1901 = vmatmul.mubr.bf16.gmra.mrb[0].mxu0 %v1810
    %v1902 = vpop.f32.mrb[0].mxu0
    %v1903 = vadd.f32 %v1751, %v1902
    %v1904 = vpop.f32.mrb[0].mxu0
    %v1905 = vpop.f32.mrb[0].mxu0
    %v1906 = vadd.f32 %v1751, %v1905
    %v1907 = vpop.f32.mrb[0].mxu0
    %1908 = vdwg.mxu0
    %v1909 = vmax.f32 %v1847, 0.0
    %v1910 = vmax.f32 %v1850, 0.0
    %v1911 = vmax.f32 %v1855, 0.0
    %v1912 = vmax.f32 %v1858, 0.0
    %v1913 = vmax.f32 %v1863, 0.0
    %v1914 = vmax.f32 %v1866, 0.0
    %v1915 = vmax.f32 %v1871, 0.0
    %v1916 = vmax.f32 %v1874, 0.0
    %v1917 = vmax.f32 %v1879, 0.0
    %v1918 = vmax.f32 %v1882, 0.0
    %v1919 = vmax.f32 %v1887, 0.0
    %v1920 = vmax.f32 %v1890, 0.0
    %v1921 = vmax.f32 %v1895, 0.0
    %v1922 = vmax.f32 %v1898, 0.0
    %v1923 = vmax.f32 %v1903, 0.0
    %v1924 = vmax.f32 %v1906, 0.0
    %v1925 = vpack.c.bf16 %v1910, %v1909
    %v1926 = vpack.c.bf16 %v1912, %v1911
    %v1927 = vpack.c.bf16 %v1914, %v1913
    %v1928 = vpack.c.bf16 %v1916, %v1915
    %v1929 = vpack.c.bf16 %v1918, %v1917
    %v1930 = vpack.c.bf16 %v1920, %v1919
    %v1931 = vpack.c.bf16 %v1922, %v1921
    %v1932 = vpack.c.bf16 %v1924, %v1923
    %s1933 = scalar_lea.vmem %s7, 32
    %v1934 = vld [vmem:[%s1933] sm:$0xf]
    %v1935 = vld [vmem:[%s1933 + $0x4] sm:$0xf]
    %v1936 = vld [vmem:[%s1933 + $0x8] sm:$0xf]
    %v1937 = vld [vmem:[%s1933 + $0xc] sm:$0xf]
    %v1938 = vld [vmem:[%s8 + $0x2] sm:$0x1]
    %v1939 = vlaneseq
    %v1940 = vshrl.u32 %v1939, 7
    %v1941 = vsub.s32 0, %v1940
    %v1942 = vrot.slane %v1938, %v1941
    %v1947 = vunpack.c.l.b16 %v1934
    %v1948 = vunpack.c.l.b16 %v1935
    %v1949 = vunpack.c.l.b16 %v1936
    %v1950 = vunpack.c.l.b16 %v1937
    %v1951 = vpack.c.b16 %v1948, %v1947
    %v1952 = vpack.c.b16 %v1950, %v1949
    %v1956 = vsel %vm478, %v1925, 0
    %v1959 = vsel %vm478, %v1926, 0
    %v1962 = vsel %vm478, %v1927, 0
    %v1965 = vsel %vm478, %v1928, 0
    %v1968 = vsel %vm478, %v1929, 0
    %v1971 = vsel %vm478, %v1930, 0
    %v1974 = vsel %vm478, %v1931, 0
    %v1977 = vsel %vm478, %v1932, 0
    %1979 = vmatprep.subr.bf16.mxu0 0
    %1980 = vmatpush1.bf16.msra.mxu0 %v1951
    %1981 = vmatprep.subr.bf16.mxu0 0
    %1982 = vmatpush1.bf16.msra.mxu0 %v1952
    %1983 = vmatprep.subr.bf16.mxu0 0
    %1984 = vmatpush1.bf16.msra.mxu0 0
    %1985 = vmatprep.subr.bf16.mxu0 0
    %1986 = vmatpush1.bf16.msra.mxu0 0
    %1987 = vmatprep.subr.bf16.mxu0 0
    %1988 = vmatpush1.bf16.msra.mxu0 0
    %1989 = vmatprep.subr.bf16.mxu0 0
    %1990 = vmatpush1.bf16.msra.mxu0 0
    %1991 = vmatprep.subr.bf16.mxu0 0
    %1992 = vmatpush1.bf16.msra.mxu0 0
    %1993 = vmatprep.subr.bf16.mxu0 0
    %1994 = vmatpush1.bf16.msra.mxu0 0
    %1995 = vmatprep.subr.bf16.mxu0 0
    %1996 = vmatpush1.bf16.msra.mxu0 0
    %1997 = vmatprep.subr.bf16.mxu0 0
    %1998 = vmatpush1.bf16.msra.mxu0 0
    %1999 = vmatprep.subr.bf16.mxu0 0
    %2000 = vmatpush1.bf16.msra.mxu0 0
    %2001 = vmatprep.subr.bf16.mxu0 0
    %2002 = vmatpush1.bf16.msra.mxu0 0
    %2003 = vmatprep.subr.bf16.mxu0 0
    %2004 = vmatpush1.bf16.msra.mxu0 0
    %2005 = vmatprep.subr.bf16.mxu0 0
    %2006 = vmatpush1.bf16.msra.mxu0 0
    %2007 = vmatprep.subr.bf16.mxu0 0
    %2008 = vmatpush1.bf16.msra.mxu0 0
    %2009 = vmatprep.subr.bf16.mxu0 0
    %2010 = vmatpush1.bf16.msra.mxu0 0
    %2011 = vmatprep.mubr.bf16.mxu0 0
    %2012 = vmatmul.mubr.bf16.gmra.mrb[0].mxu0 %v1956
    %v2013 = vpop.f32.mrb[0].mxu0
    %v2014 = vadd.f32 %v1942, %v2013
    %v2015 = vpop.f32.mrb[0].mxu0
    %v2016 = vpop.f32.mrb[0].mxu0
    %v2017 = vadd.f32 %v1942, %v2016
    %v2018 = vpop.f32.mrb[0].mxu0
    %2019 = vmatprep.mubr.bf16.mxu0 0
    %2020 = vmatmul.mubr.bf16.gmra.mrb[0].mxu0 %v1959
    %v2021 = vpop.f32.mrb[0].mxu0
    %v2022 = vadd.f32 %v1942, %v2021
    %v2023 = vpop.f32.mrb[0].mxu0
    %v2024 = vpop.f32.mrb[0].mxu0
    %v2025 = vadd.f32 %v1942, %v2024
    %v2026 = vpop.f32.mrb[0].mxu0
    %2027 = vmatprep.mubr.bf16.mxu0 0
    %2028 = vmatmul.mubr.bf16.gmra.mrb[0].mxu0 %v1962
    %v2029 = vpop.f32.mrb[0].mxu0
    %v2030 = vadd.f32 %v1942, %v2029
    %v2031 = vpop.f32.mrb[0].mxu0
    %v2032 = vpop.f32.mrb[0].mxu0
    %v2033 = vadd.f32 %v1942, %v2032
    %v2034 = vpop.f32.mrb[0].mxu0
    %2035 = vmatprep.mubr.bf16.mxu0 0
    %2036 = vmatmul.mubr.bf16.gmra.mrb[0].mxu0 %v1965
    %v2037 = vpop.f32.mrb[0].mxu0
    %v2038 = vadd.f32 %v1942, %v2037
    %v2039 = vpop.f32.mrb[0].mxu0
    %v2040 = vpop.f32.mrb[0].mxu0
    %v2041 = vadd.f32 %v1942, %v2040
    %v2042 = vpop.f32.mrb[0].mxu0
    %2043 = vmatprep.mubr.bf16.mxu0 0
    %2044 = vmatmul.mubr.bf16.gmra.mrb[0].mxu0 %v1968
    %v2045 = vpop.f32.mrb[0].mxu0
    %v2046 = vadd.f32 %v1942, %v2045
    %v2047 = vpop.f32.mrb[0].mxu0
    %v2048 = vpop.f32.mrb[0].mxu0
    %v2049 = vadd.f32 %v1942, %v2048
    %v2050 = vpop.f32.mrb[0].mxu0
    %2051 = vmatprep.mubr.bf16.mxu0 0
    %2052 = vmatmul.mubr.bf16.gmra.mrb[0].mxu0 %v1971
    %v2053 = vpop.f32.mrb[0].mxu0
    %v2054 = vadd.f32 %v1942, %v2053
    %v2055 = vpop.f32.mrb[0].mxu0
    %v2056 = vpop.f32.mrb[0].mxu0
    %v2057 = vadd.f32 %v1942, %v2056
    %v2058 = vpop.f32.mrb[0].mxu0
    %2059 = vmatprep.mubr.bf16.mxu0 0
    %2060 = vmatmul.mubr.bf16.gmra.mrb[0].mxu0 %v1974
    %v2061 = vpop.f32.mrb[0].mxu0
    %v2062 = vadd.f32 %v1942, %v2061
    %v2063 = vpop.f32.mrb[0].mxu0
    %v2064 = vpop.f32.mrb[0].mxu0
    %v2065 = vadd.f32 %v1942, %v2064
    %v2066 = vpop.f32.mrb[0].mxu0
    %2067 = vmatprep.mubr.bf16.mxu0 0
    %2068 = vmatmul.mubr.bf16.gmra.mrb[0].mxu0 %v1977
    %v2069 = vpop.f32.mrb[0].mxu0
    %v2070 = vadd.f32 %v1942, %v2069
    %v2071 = vpop.f32.mrb[0].mxu0
    %v2072 = vpop.f32.mrb[0].mxu0
    %v2073 = vadd.f32 %v1942, %v2072
    %v2074 = vpop.f32.mrb[0].mxu0
    %2075 = vdwg.mxu0
    %v2076 = vmax.f32 %v2014, 0.0
    %v2077 = vmax.f32 %v2017, 0.0
    %v2078 = vmax.f32 %v2022, 0.0
    %v2079 = vmax.f32 %v2025, 0.0
    %v2080 = vmax.f32 %v2030, 0.0
    %v2081 = vmax.f32 %v2033, 0.0
    %v2082 = vmax.f32 %v2038, 0.0
    %v2083 = vmax.f32 %v2041, 0.0
    %v2084 = vmax.f32 %v2046, 0.0
    %v2085 = vmax.f32 %v2049, 0.0
    %v2086 = vmax.f32 %v2054, 0.0
    %v2087 = vmax.f32 %v2057, 0.0
    %v2088 = vmax.f32 %v2062, 0.0
    %v2089 = vmax.f32 %v2065, 0.0
    %v2090 = vmax.f32 %v2070, 0.0
    %v2091 = vmax.f32 %v2073, 0.0
    %v2092 = vld [vmem:[%s9 + $0x2] sm:$0x1]
    %v2093 = vlaneseq
    %v2094 = vshrl.u32 %v2093, 7
    %v2095 = vsub.s32 0, %v2094
    %v2096 = vrot.slane %v2092, %v2095
    %v2097 = vmul.f32 %v2076, %v2096
    %v2098 = vmul.f32 %v2077, %v2096
    %v2099 = vmul.f32 %v2078, %v2096
    %v2100 = vmul.f32 %v2079, %v2096
    %v2101 = vmul.f32 %v2080, %v2096
    %v2102 = vmul.f32 %v2081, %v2096
    %v2103 = vmul.f32 %v2082, %v2096
    %v2104 = vmul.f32 %v2083, %v2096
    %v2105 = vmul.f32 %v2084, %v2096
    %v2106 = vmul.f32 %v2085, %v2096
    %v2107 = vmul.f32 %v2086, %v2096
    %v2108 = vmul.f32 %v2087, %v2096
    %v2109 = vmul.f32 %v2088, %v2096
    %v2110 = vmul.f32 %v2089, %v2096
    %v2111 = vmul.f32 %v2090, %v2096
    %v2112 = vmul.f32 %v2091, %v2096
    %v2113 = vsel %vm478, %v2097, 0.0
    %2114 = vadd.xlane.f32.xlu0 %v2113
    %v2115 = vpop.xlane.xlu0 %2114
    %v2116 = vsel %vm478, %v2098, 0.0
    %2117 = vadd.xlane.f32.xlu0 %v2116
    %v2118 = vpop.xlane.xlu0 %2117
    %v2119 = vsel %vm478, %v2099, 0.0
    %2120 = vadd.xlane.f32.xlu0 %v2119
    %v2121 = vpop.xlane.xlu0 %2120
    %v2122 = vsel %vm478, %v2100, 0.0
    %2123 = vadd.xlane.f32.xlu0 %v2122
    %v2124 = vpop.xlane.xlu0 %2123
    %v2125 = vsel %vm478, %v2101, 0.0
    %2126 = vadd.xlane.f32.xlu0 %v2125
    %v2127 = vpop.xlane.xlu0 %2126
    %v2128 = vsel %vm478, %v2102, 0.0
    %2129 = vadd.xlane.f32.xlu0 %v2128
    %v2130 = vpop.xlane.xlu0 %2129
    %v2131 = vsel %vm478, %v2103, 0.0
    %2132 = vadd.xlane.f32.xlu0 %v2131
    %v2133 = vpop.xlane.xlu0 %2132
    %v2134 = vsel %vm478, %v2104, 0.0
    %2135 = vadd.xlane.f32.xlu0 %v2134
    %v2136 = vpop.xlane.xlu0 %2135
    %v2137 = vsel %vm478, %v2105, 0.0
    %2138 = vadd.xlane.f32.xlu0 %v2137
    %v2139 = vpop.xlane.xlu0 %2138
    %v2140 = vsel %vm478, %v2106, 0.0
    %2141 = vadd.xlane.f32.xlu0 %v2140
    %v2142 = vpop.xlane.xlu0 %2141
    %v2143 = vsel %vm478, %v2107, 0.0
    %2144 = vadd.xlane.f32.xlu0 %v2143
    %v2145 = vpop.xlane.xlu0 %2144
    %v2146 = vsel %vm478, %v2108, 0.0
    %2147 = vadd.xlane.f32.xlu0 %v2146
    %v2148 = vpop.xlane.xlu0 %2147
    %v2149 = vsel %vm478, %v2109, 0.0
    %2150 = vadd.xlane.f32.xlu0 %v2149
    %v2151 = vpop.xlane.xlu0 %2150
    %v2152 = vsel %vm478, %v2110, 0.0
    %2153 = vadd.xlane.f32.xlu0 %v2152
    %v2154 = vpop.xlane.xlu0 %2153
    %v2155 = vsel %vm478, %v2111, 0.0
    %2156 = vadd.xlane.f32.xlu0 %v2155
    %v2157 = vpop.xlane.xlu0 %2156
    %v2158 = vsel %vm478, %v2112, 0.0
    %2159 = vadd.xlane.f32.xlu0 %v2158
    %v2160 = vpop.xlane.xlu0 %2159
    %v2161 = vld [vmem:[%s10 + $0x2] sm:$0x1]
    %2163 = vset.pattern.permute.xlu0 0
    %2164 = vperm.xlu0 %2163, %v2161
    %v2165 = vpop.permute.xlu0 %2164
    %v2166 = vlaneseq
    %v2167 = vshrl.u32 %v2166, 7
    %v2168 = vsub.s32 0, %v2167
    %v2169 = vrot.slane %v2165, %v2168
    %v2171 = vadd.f32 %v2115, %v2169
    %v2172 = vadd.f32 %v2118, %v2169
    %v2173 = vadd.f32 %v2121, %v2169
    %v2174 = vadd.f32 %v2124, %v2169
    %v2175 = vadd.f32 %v2127, %v2169
    %v2176 = vadd.f32 %v2130, %v2169
    %v2177 = vadd.f32 %v2133, %v2169
    %v2178 = vadd.f32 %v2136, %v2169
    %v2179 = vadd.f32 %v2139, %v2169
    %v2180 = vadd.f32 %v2142, %v2169
    %v2181 = vadd.f32 %v2145, %v2169
    %v2182 = vadd.f32 %v2148, %v2169
    %v2183 = vadd.f32 %v2151, %v2169
    %v2184 = vadd.f32 %v2154, %v2169
    %v2185 = vadd.f32 %v2157, %v2169
    %v2186 = vadd.f32 %v2160, %v2169
    %2203 = vset.pattern.permute.xlu0 0
    %2204 = vperm.xlu0 %2203, %v2171
    %v2205 = vpop.permute.xlu0 %2204
    %2206 = vset.pattern.permute.xlu0 0
    %2207 = vperm.xlu0 %2206, %v2172
    %v2208 = vpop.permute.xlu0 %2207
    %2209 = vset.pattern.permute.xlu0 0
    %2210 = vperm.xlu0 %2209, %v2173
    %v2211 = vpop.permute.xlu0 %2210
    %2212 = vset.pattern.permute.xlu0 0
    %2213 = vperm.xlu0 %2212, %v2174
    %v2214 = vpop.permute.xlu0 %2213
    %2215 = vset.pattern.permute.xlu0 0
    %2216 = vperm.xlu0 %2215, %v2175
    %v2217 = vpop.permute.xlu0 %2216
    %2218 = vset.pattern.permute.xlu0 0
    %2219 = vperm.xlu0 %2218, %v2176
    %v2220 = vpop.permute.xlu0 %2219
    %2221 = vset.pattern.permute.xlu0 0
    %2222 = vperm.xlu0 %2221, %v2177
    %v2223 = vpop.permute.xlu0 %2222
    %2224 = vset.pattern.permute.xlu0 0
    %2225 = vperm.xlu0 %2224, %v2178
    %v2226 = vpop.permute.xlu0 %2225
    %2227 = vset.pattern.permute.xlu0 0
    %2228 = vperm.xlu0 %2227, %v2179
    %v2229 = vpop.permute.xlu0 %2228
    %2230 = vset.pattern.permute.xlu0 0
    %2231 = vperm.xlu0 %2230, %v2180
    %v2232 = vpop.permute.xlu0 %2231
    %2233 = vset.pattern.permute.xlu0 0
    %2234 = vperm.xlu0 %2233, %v2181
    %v2235 = vpop.permute.xlu0 %2234
    %2236 = vset.pattern.permute.xlu0 0
    %2237 = vperm.xlu0 %2236, %v2182
    %v2238 = vpop.permute.xlu0 %2237
    %2239 = vset.pattern.permute.xlu0 0
    %2240 = vperm.xlu0 %2239, %v2183
    %v2241 = vpop.permute.xlu0 %2240
    %2242 = vset.pattern.permute.xlu0 0
    %2243 = vperm.xlu0 %2242, %v2184
    %v2244 = vpop.permute.xlu0 %2243
    %2245 = vset.pattern.permute.xlu0 0
    %2246 = vperm.xlu0 %2245, %v2185
    %v2247 = vpop.permute.xlu0 %2246
    %2248 = vset.pattern.permute.xlu0 0
    %2249 = vperm.xlu0 %2248, %v2186
    %v2250 = vpop.permute.xlu0 %2249
    %v2251 = vlaneseq
    %v2252 = vshrl.u32 %v2251, 7
    %v2253 = vsub.s32 %v942, %v2252
    %v2254 = vrot.slane %v2205, %v2253
    %v2255 = vlaneseq
    %v2256 = vshrl.u32 %v2255, 7
    %v2257 = vsub.s32 %v947, %v2256
    %v2258 = vrot.slane %v2208, %v2257
    %v2259 = vsel %vm952, %v2258, %v2254
    %v2260 = vlaneseq
    %v2261 = vshrl.u32 %v2260, 7
    %v2262 = vsub.s32 %v954, %v2261
    %v2263 = vrot.slane %v2211, %v2262
    %v2264 = vsel %vm959, %v2263, %v2259
    %v2265 = vlaneseq
    %v2266 = vshrl.u32 %v2265, 7
    %v2267 = vsub.s32 %v961, %v2266
    %v2268 = vrot.slane %v2214, %v2267
    %v2269 = vsel %vm966, %v2268, %v2264
    %v2270 = vlaneseq
    %v2271 = vshrl.u32 %v2270, 7
    %v2272 = vsub.s32 %v968, %v2271
    %v2273 = vrot.slane %v2217, %v2272
    %v2274 = vsel %vm973, %v2273, %v2269
    %v2275 = vlaneseq
    %v2276 = vshrl.u32 %v2275, 7
    %v2277 = vsub.s32 %v975, %v2276
    %v2278 = vrot.slane %v2220, %v2277
    %v2279 = vsel %vm980, %v2278, %v2274
    %v2280 = vlaneseq
    %v2281 = vshrl.u32 %v2280, 7
    %v2282 = vsub.s32 %v982, %v2281
    %v2283 = vrot.slane %v2223, %v2282
    %v2284 = vsel %vm987, %v2283, %v2279
    %v2285 = vlaneseq
    %v2286 = vshrl.u32 %v2285, 7
    %v2287 = vsub.s32 %v989, %v2286
    %v2288 = vrot.slane %v2226, %v2287
    %v2289 = vsel %vm994, %v2288, %v2284
    %v2290 = vlaneseq
    %v2291 = vshrl.u32 %v2290, 7
    %v2292 = vsub.s32 %v996, %v2291
    %v2293 = vrot.slane %v2229, %v2292
    %v2294 = vsel %vm1001, %v2293, %v2289
    %v2295 = vlaneseq
    %v2296 = vshrl.u32 %v2295, 7
    %v2297 = vsub.s32 %v1003, %v2296
    %v2298 = vrot.slane %v2232, %v2297
    %v2299 = vsel %vm1008, %v2298, %v2294
    %v2300 = vlaneseq
    %v2301 = vshrl.u32 %v2300, 7
    %v2302 = vsub.s32 %v1010, %v2301
    %v2303 = vrot.slane %v2235, %v2302
    %v2304 = vsel %vm1015, %v2303, %v2299
    %v2305 = vlaneseq
    %v2306 = vshrl.u32 %v2305, 7
    %v2307 = vsub.s32 %v1017, %v2306
    %v2308 = vrot.slane %v2238, %v2307
    %v2309 = vsel %vm1022, %v2308, %v2304
    %v2310 = vlaneseq
    %v2311 = vshrl.u32 %v2310, 7
    %v2312 = vsub.s32 %v1024, %v2311
    %v2313 = vrot.slane %v2241, %v2312
    %v2314 = vsel %vm1029, %v2313, %v2309
    %v2315 = vlaneseq
    %v2316 = vshrl.u32 %v2315, 7
    %v2317 = vsub.s32 %v1031, %v2316
    %v2318 = vrot.slane %v2244, %v2317
    %v2319 = vsel %vm1036, %v2318, %v2314
    %v2320 = vlaneseq
    %v2321 = vshrl.u32 %v2320, 7
    %v2322 = vsub.s32 %v1038, %v2321
    %v2323 = vrot.slane %v2247, %v2322
    %v2324 = vsel %vm1043, %v2323, %v2319
    %v2325 = vlaneseq
    %v2326 = vshrl.u32 %v2325, 7
    %v2327 = vsub.s32 %v1045, %v2326
    %v2328 = vrot.slane %v2250, %v2327
    %v2329 = vsel %vm1050, %v2328, %v2324
    %2331 = vst [vmem:[#allocation2 + $0x2] sm:$0x1] %v2329
    %v2332 = vld [vmem:[%s4 + $0x3] sm:$0x1]
    %v2333 = vlaneseq
    %v2334 = vshrl.u32 %v2333, 7
    %v2335 = vsub.s32 0, %v2334
    %v2336 = vrot.slane %v2332, %v2335
    %2338 = vrot.lane.b32.xlu0 %v2336, 96
    %v2339 = vpop.permute.xlu0 %2338
    %v2341 = vadd.f32 %v350, %v2339
    %v2342 = vadd.f32 %v353, %v2339
    %v2343 = vadd.f32 %v358, %v2339
    %v2344 = vadd.f32 %v361, %v2339
    %v2345 = vadd.f32 %v366, %v2339
    %v2346 = vadd.f32 %v369, %v2339
    %v2347 = vadd.f32 %v374, %v2339
    %v2348 = vadd.f32 %v377, %v2339
    %v2349 = vadd.f32 %v382, %v2339
    %v2350 = vadd.f32 %v385, %v2339
    %v2351 = vadd.f32 %v390, %v2339
    %v2352 = vadd.f32 %v393, %v2339
    %v2353 = vadd.f32 %v398, %v2339
    %v2354 = vadd.f32 %v401, %v2339
    %v2355 = vadd.f32 %v406, %v2339
    %v2356 = vadd.f32 %v409, %v2339
    %v2357 = vmax.f32 %v2341, 0.0
    %v2358 = vmax.f32 %v2342, 0.0
    %v2359 = vmax.f32 %v2343, 0.0
    %v2360 = vmax.f32 %v2344, 0.0
    %v2361 = vmax.f32 %v2345, 0.0
    %v2362 = vmax.f32 %v2346, 0.0
    %v2363 = vmax.f32 %v2347, 0.0
    %v2364 = vmax.f32 %v2348, 0.0
    %v2365 = vmax.f32 %v2349, 0.0
    %v2366 = vmax.f32 %v2350, 0.0
    %v2367 = vmax.f32 %v2351, 0.0
    %v2368 = vmax.f32 %v2352, 0.0
    %v2369 = vmax.f32 %v2353, 0.0
    %v2370 = vmax.f32 %v2354, 0.0
    %v2371 = vmax.f32 %v2355, 0.0
    %v2372 = vmax.f32 %v2356, 0.0
    %v2373 = vpack.c.bf16 %v2358, %v2357
    %v2374 = vpack.c.bf16 %v2360, %v2359
    %v2375 = vpack.c.bf16 %v2362, %v2361
    %v2376 = vpack.c.bf16 %v2364, %v2363
    %v2377 = vpack.c.bf16 %v2366, %v2365
    %v2378 = vpack.c.bf16 %v2368, %v2367
    %v2379 = vpack.c.bf16 %v2370, %v2369
    %v2380 = vpack.c.bf16 %v2372, %v2371
    %s2381 = scalar_lea.vmem %s5, 48
    %v2382 = vld [vmem:[%s2381] sm:$0xf]
    %v2383 = vld [vmem:[%s2381 + $0x4] sm:$0xf]
    %v2384 = vld [vmem:[%s2381 + $0x8] sm:$0xf]
    %v2385 = vld [vmem:[%s2381 + $0xc] sm:$0xf]
    %v2386 = vld [vmem:[%s6 + $0x3] sm:$0x1]
    %v2387 = vlaneseq
    %v2388 = vshrl.u32 %v2387, 7
    %v2389 = vsub.s32 0, %v2388
    %v2390 = vrot.slane %v2386, %v2389
    %2399 = vrot.lane.b32.xlu0 %v2373, 32
    %v2400 = vpop.permute.xlu0 %2399
    %2401 = vrot.lane.b32.xlu0 %v2374, 32
    %v2402 = vpop.permute.xlu0 %2401
    %2403 = vrot.lane.b32.xlu0 %v2375, 32
    %v2404 = vpop.permute.xlu0 %2403
    %2405 = vrot.lane.b32.xlu0 %v2376, 32
    %v2406 = vpop.permute.xlu0 %2405
    %2407 = vrot.lane.b32.xlu0 %v2377, 32
    %v2408 = vpop.permute.xlu0 %2407
    %2409 = vrot.lane.b32.xlu0 %v2378, 32
    %v2410 = vpop.permute.xlu0 %2409
    %2411 = vrot.lane.b32.xlu0 %v2379, 32
    %v2412 = vpop.permute.xlu0 %2411
    %2413 = vrot.lane.b32.xlu0 %v2380, 32
    %v2414 = vpop.permute.xlu0 %2413
    %v2419 = vunpack.c.l.b16 %v2382
    %v2420 = vunpack.c.l.b16 %v2383
    %v2421 = vunpack.c.l.b16 %v2384
    %v2422 = vunpack.c.l.b16 %v2385
    %v2423 = vpack.c.b16 %v2420, %v2419
    %v2424 = vpack.c.b16 %v2422, %v2421
    %v2428 = vsel %vm478, %v2400, 0
    %v2431 = vsel %vm478, %v2402, 0
    %v2434 = vsel %vm478, %v2404, 0
    %v2437 = vsel %vm478, %v2406, 0
    %v2440 = vsel %vm478, %v2408, 0
    %v2443 = vsel %vm478, %v2410, 0
    %v2446 = vsel %vm478, %v2412, 0
    %v2449 = vsel %vm478, %v2414, 0
    %2451 = vmatprep.subr.bf16.mxu0 0
    %2452 = vmatpush1.bf16.msra.mxu0 %v2423
    %2453 = vmatprep.subr.bf16.mxu0 0
    %2454 = vmatpush1.bf16.msra.mxu0 %v2424
    %2455 = vmatprep.subr.bf16.mxu0 0
    %2456 = vmatpush1.bf16.msra.mxu0 0
    %2457 = vmatprep.subr.bf16.mxu0 0
    %2458 = vmatpush1.bf16.msra.mxu0 0
    %2459 = vmatprep.subr.bf16.mxu0 0
    %2460 = vmatpush1.bf16.msra.mxu0 0
    %2461 = vmatprep.subr.bf16.mxu0 0
    %2462 = vmatpush1.bf16.msra.mxu0 0
    %2463 = vmatprep.subr.bf16.mxu0 0
    %2464 = vmatpush1.bf16.msra.mxu0 0
    %2465 = vmatprep.subr.bf16.mxu0 0
    %2466 = vmatpush1.bf16.msra.mxu0 0
    %2467 = vmatprep.subr.bf16.mxu0 0
    %2468 = vmatpush1.bf16.msra.mxu0 0
    %2469 = vmatprep.subr.bf16.mxu0 0
    %2470 = vmatpush1.bf16.msra.mxu0 0
    %2471 = vmatprep.subr.bf16.mxu0 0
    %2472 = vmatpush1.bf16.msra.mxu0 0
    %2473 = vmatprep.subr.bf16.mxu0 0
    %2474 = vmatpush1.bf16.msra.mxu0 0
    %2475 = vmatprep.subr.bf16.mxu0 0
    %2476 = vmatpush1.bf16.msra.mxu0 0
    %2477 = vmatprep.subr.bf16.mxu0 0
    %2478 = vmatpush1.bf16.msra.mxu0 0
    %2479 = vmatprep.subr.bf16.mxu0 0
    %2480 = vmatpush1.bf16.msra.mxu0 0
    %2481 = vmatprep.subr.bf16.mxu0 0
    %2482 = vmatpush1.bf16.msra.mxu0 0
    %2483 = vmatprep.mubr.bf16.mxu0 0
    %2484 = vmatmul.mubr.bf16.gmra.mrb[0].mxu0 %v2428
    %v2485 = vpop.f32.mrb[0].mxu0
    %v2486 = vadd.f32 %v2390, %v2485
    %v2487 = vpop.f32.mrb[0].mxu0
    %v2488 = vpop.f32.mrb[0].mxu0
    %v2489 = vadd.f32 %v2390, %v2488
    %v2490 = vpop.f32.mrb[0].mxu0
    %2491 = vmatprep.mubr.bf16.mxu0 0
    %2492 = vmatmul.mubr.bf16.gmra.mrb[0].mxu0 %v2431
    %v2493 = vpop.f32.mrb[0].mxu0
    %v2494 = vadd.f32 %v2390, %v2493
    %v2495 = vpop.f32.mrb[0].mxu0
    %v2496 = vpop.f32.mrb[0].mxu0
    %v2497 = vadd.f32 %v2390, %v2496
    %v2498 = vpop.f32.mrb[0].mxu0
    %2499 = vmatprep.mubr.bf16.mxu0 0
    %2500 = vmatmul.mubr.bf16.gmra.mrb[0].mxu0 %v2434
    %v2501 = vpop.f32.mrb[0].mxu0
    %v2502 = vadd.f32 %v2390, %v2501
    %v2503 = vpop.f32.mrb[0].mxu0
    %v2504 = vpop.f32.mrb[0].mxu0
    %v2505 = vadd.f32 %v2390, %v2504
    %v2506 = vpop.f32.mrb[0].mxu0
    %2507 = vmatprep.mubr.bf16.mxu0 0
    %2508 = vmatmul.mubr.bf16.gmra.mrb[0].mxu0 %v2437
    %v2509 = vpop.f32.mrb[0].mxu0
    %v2510 = vadd.f32 %v2390, %v2509
    %v2511 = vpop.f32.mrb[0].mxu0
    %v2512 = vpop.f32.mrb[0].mxu0
    %v2513 = vadd.f32 %v2390, %v2512
    %v2514 = vpop.f32.mrb[0].mxu0
    %2515 = vmatprep.mubr.bf16.mxu0 0
    %2516 = vmatmul.mubr.bf16.gmra.mrb[0].mxu0 %v2440
    %v2517 = vpop.f32.mrb[0].mxu0
    %v2518 = vadd.f32 %v2390, %v2517
    %v2519 = vpop.f32.mrb[0].mxu0
    %v2520 = vpop.f32.mrb[0].mxu0
    %v2521 = vadd.f32 %v2390, %v2520
    %v2522 = vpop.f32.mrb[0].mxu0
    %2523 = vmatprep.mubr.bf16.mxu0 0
    %2524 = vmatmul.mubr.bf16.gmra.mrb[0].mxu0 %v2443
    %v2525 = vpop.f32.mrb[0].mxu0
    %v2526 = vadd.f32 %v2390, %v2525
    %v2527 = vpop.f32.mrb[0].mxu0
    %v2528 = vpop.f32.mrb[0].mxu0
    %v2529 = vadd.f32 %v2390, %v2528
    %v2530 = vpop.f32.mrb[0].mxu0
    %2531 = vmatprep.mubr.bf16.mxu0 0
    %2532 = vmatmul.mubr.bf16.gmra.mrb[0].mxu0 %v2446
    %v2533 = vpop.f32.mrb[0].mxu0
    %v2534 = vadd.f32 %v2390, %v2533
    %v2535 = vpop.f32.mrb[0].mxu0
    %v2536 = vpop.f32.mrb[0].mxu0
    %v2537 = vadd.f32 %v2390, %v2536
    %v2538 = vpop.f32.mrb[0].mxu0
    %2539 = vmatprep.mubr.bf16.mxu0 0
    %2540 = vmatmul.mubr.bf16.gmra.mrb[0].mxu0 %v2449
    %v2541 = vpop.f32.mrb[0].mxu0
    %v2542 = vadd.f32 %v2390, %v2541
    %v2543 = vpop.f32.mrb[0].mxu0
    %v2544 = vpop.f32.mrb[0].mxu0
    %v2545 = vadd.f32 %v2390, %v2544
    %v2546 = vpop.f32.mrb[0].mxu0
    %2547 = vdwg.mxu0
    %v2548 = vmax.f32 %v2486, 0.0
    %v2549 = vmax.f32 %v2489, 0.0
    %v2550 = vmax.f32 %v2494, 0.0
    %v2551 = vmax.f32 %v2497, 0.0
    %v2552 = vmax.f32 %v2502, 0.0
    %v2553 = vmax.f32 %v2505, 0.0
    %v2554 = vmax.f32 %v2510, 0.0
    %v2555 = vmax.f32 %v2513, 0.0
    %v2556 = vmax.f32 %v2518, 0.0
    %v2557 = vmax.f32 %v2521, 0.0
    %v2558 = vmax.f32 %v2526, 0.0
    %v2559 = vmax.f32 %v2529, 0.0
    %v2560 = vmax.f32 %v2534, 0.0
    %v2561 = vmax.f32 %v2537, 0.0
    %v2562 = vmax.f32 %v2542, 0.0
    %v2563 = vmax.f32 %v2545, 0.0
    %v2564 = vpack.c.bf16 %v2549, %v2548
    %v2565 = vpack.c.bf16 %v2551, %v2550
    %v2566 = vpack.c.bf16 %v2553, %v2552
    %v2567 = vpack.c.bf16 %v2555, %v2554
    %v2568 = vpack.c.bf16 %v2557, %v2556
    %v2569 = vpack.c.bf16 %v2559, %v2558
    %v2570 = vpack.c.bf16 %v2561, %v2560
    %v2571 = vpack.c.bf16 %v2563, %v2562
    %s2572 = scalar_lea.vmem %s7, 48
    %v2573 = vld [vmem:[%s2572] sm:$0xf]
    %v2574 = vld [vmem:[%s2572 + $0x4] sm:$0xf]
    %v2575 = vld [vmem:[%s2572 + $0x8] sm:$0xf]
    %v2576 = vld [vmem:[%s2572 + $0xc] sm:$0xf]
    %v2577 = vld [vmem:[%s8 + $0x3] sm:$0x1]
    %v2578 = vlaneseq
    %v2579 = vshrl.u32 %v2578, 7
    %v2580 = vsub.s32 0, %v2579
    %v2581 = vrot.slane %v2577, %v2580
    %v2586 = vunpack.c.l.b16 %v2573
    %v2587 = vunpack.c.l.b16 %v2574
    %v2588 = vunpack.c.l.b16 %v2575
    %v2589 = vunpack.c.l.b16 %v2576
    %v2590 = vpack.c.b16 %v2587, %v2586
    %v2591 = vpack.c.b16 %v2589, %v2588
    %v2595 = vsel %vm478, %v2564, 0
    %v2598 = vsel %vm478, %v2565, 0
    %v2601 = vsel %vm478, %v2566, 0
    %v2604 = vsel %vm478, %v2567, 0
    %v2607 = vsel %vm478, %v2568, 0
    %v2610 = vsel %vm478, %v2569, 0
    %v2613 = vsel %vm478, %v2570, 0
    %v2616 = vsel %vm478, %v2571, 0
    %2618 = vmatprep.subr.bf16.mxu0 0
    %2619 = vmatpush1.bf16.msra.mxu0 %v2590
    %2620 = vmatprep.subr.bf16.mxu0 0
    %2621 = vmatpush1.bf16.msra.mxu0 %v2591
    %2622 = vmatprep.subr.bf16.mxu0 0
    %2623 = vmatpush1.bf16.msra.mxu0 0
    %2624 = vmatprep.subr.bf16.mxu0 0
    %2625 = vmatpush1.bf16.msra.mxu0 0
    %2626 = vmatprep.subr.bf16.mxu0 0
    %2627 = vmatpush1.bf16.msra.mxu0 0
    %2628 = vmatprep.subr.bf16.mxu0 0
    %2629 = vmatpush1.bf16.msra.mxu0 0
    %2630 = vmatprep.subr.bf16.mxu0 0
    %2631 = vmatpush1.bf16.msra.mxu0 0
    %2632 = vmatprep.subr.bf16.mxu0 0
    %2633 = vmatpush1.bf16.msra.mxu0 0
    %2634 = vmatprep.subr.bf16.mxu0 0
    %2635 = vmatpush1.bf16.msra.mxu0 0
    %2636 = vmatprep.subr.bf16.mxu0 0
    %2637 = vmatpush1.bf16.msra.mxu0 0
    %2638 = vmatprep.subr.bf16.mxu0 0
    %2639 = vmatpush1.bf16.msra.mxu0 0
    %2640 = vmatprep.subr.bf16.mxu0 0
    %2641 = vmatpush1.bf16.msra.mxu0 0
    %2642 = vmatprep.subr.bf16.mxu0 0
    %2643 = vmatpush1.bf16.msra.mxu0 0
    %2644 = vmatprep.subr.bf16.mxu0 0
    %2645 = vmatpush1.bf16.msra.mxu0 0
    %2646 = vmatprep.subr.bf16.mxu0 0
    %2647 = vmatpush1.bf16.msra.mxu0 0
    %2648 = vmatprep.subr.bf16.mxu0 0
    %2649 = vmatpush1.bf16.msra.mxu0 0
    %2650 = vmatprep.mubr.bf16.mxu0 0
    %2651 = vmatmul.mubr.bf16.gmra.mrb[0].mxu0 %v2595
    %v2652 = vpop.f32.mrb[0].mxu0
    %v2653 = vadd.f32 %v2581, %v2652
    %v2654 = vpop.f32.mrb[0].mxu0
    %v2655 = vpop.f32.mrb[0].mxu0
    %v2656 = vadd.f32 %v2581, %v2655
    %v2657 = vpop.f32.mrb[0].mxu0
    %2658 = vmatprep.mubr.bf16.mxu0 0
    %2659 = vmatmul.mubr.bf16.gmra.mrb[0].mxu0 %v2598
    %v2660 = vpop.f32.mrb[0].mxu0
    %v2661 = vadd.f32 %v2581, %v2660
    %v2662 = vpop.f32.mrb[0].mxu0
    %v2663 = vpop.f32.mrb[0].mxu0
    %v2664 = vadd.f32 %v2581, %v2663
    %v2665 = vpop.f32.mrb[0].mxu0
    %2666 = vmatprep.mubr.bf16.mxu0 0
    %2667 = vmatmul.mubr.bf16.gmra.mrb[0].mxu0 %v2601
    %v2668 = vpop.f32.mrb[0].mxu0
    %v2669 = vadd.f32 %v2581, %v2668
    %v2670 = vpop.f32.mrb[0].mxu0
    %v2671 = vpop.f32.mrb[0].mxu0
    %v2672 = vadd.f32 %v2581, %v2671
    %v2673 = vpop.f32.mrb[0].mxu0
    %2674 = vmatprep.mubr.bf16.mxu0 0
    %2675 = vmatmul.mubr.bf16.gmra.mrb[0].mxu0 %v2604
    %v2676 = vpop.f32.mrb[0].mxu0
    %v2677 = vadd.f32 %v2581, %v2676
    %v2678 = vpop.f32.mrb[0].mxu0
    %v2679 = vpop.f32.mrb[0].mxu0
    %v2680 = vadd.f32 %v2581, %v2679
    %v2681 = vpop.f32.mrb[0].mxu0
    %2682 = vmatprep.mubr.bf16.mxu0 0
    %2683 = vmatmul.mubr.bf16.gmra.mrb[0].mxu0 %v2607
    %v2684 = vpop.f32.mrb[0].mxu0
    %v2685 = vadd.f32 %v2581, %v2684
    %v2686 = vpop.f32.mrb[0].mxu0
    %v2687 = vpop.f32.mrb[0].mxu0
    %v2688 = vadd.f32 %v2581, %v2687
    %v2689 = vpop.f32.mrb[0].mxu0
    %2690 = vmatprep.mubr.bf16.mxu0 0
    %2691 = vmatmul.mubr.bf16.gmra.mrb[0].mxu0 %v2610
    %v2692 = vpop.f32.mrb[0].mxu0
    %v2693 = vadd.f32 %v2581, %v2692
    %v2694 = vpop.f32.mrb[0].mxu0
    %v2695 = vpop.f32.mrb[0].mxu0
    %v2696 = vadd.f32 %v2581, %v2695
    %v2697 = vpop.f32.mrb[0].mxu0
    %2698 = vmatprep.mubr.bf16.mxu0 0
    %2699 = vmatmul.mubr.bf16.gmra.mrb[0].mxu0 %v2613
    %v2700 = vpop.f32.mrb[0].mxu0
    %v2701 = vadd.f32 %v2581, %v2700
    %v2702 = vpop.f32.mrb[0].mxu0
    %v2703 = vpop.f32.mrb[0].mxu0
    %v2704 = vadd.f32 %v2581, %v2703
    %v2705 = vpop.f32.mrb[0].mxu0
    %2706 = vmatprep.mubr.bf16.mxu0 0
    %2707 = vmatmul.mubr.bf16.gmra.mrb[0].mxu0 %v2616
    %v2708 = vpop.f32.mrb[0].mxu0
    %v2709 = vadd.f32 %v2581, %v2708
    %v2710 = vpop.f32.mrb[0].mxu0
    %v2711 = vpop.f32.mrb[0].mxu0
    %v2712 = vadd.f32 %v2581, %v2711
    %v2713 = vpop.f32.mrb[0].mxu0
    %2714 = vdwg.mxu0
    %v2715 = vmax.f32 %v2653, 0.0
    %v2716 = vmax.f32 %v2656, 0.0
    %v2717 = vmax.f32 %v2661, 0.0
    %v2718 = vmax.f32 %v2664, 0.0
    %v2719 = vmax.f32 %v2669, 0.0
    %v2720 = vmax.f32 %v2672, 0.0
    %v2721 = vmax.f32 %v2677, 0.0
    %v2722 = vmax.f32 %v2680, 0.0
    %v2723 = vmax.f32 %v2685, 0.0
    %v2724 = vmax.f32 %v2688, 0.0
    %v2725 = vmax.f32 %v2693, 0.0
    %v2726 = vmax.f32 %v2696, 0.0
    %v2727 = vmax.f32 %v2701, 0.0
    %v2728 = vmax.f32 %v2704, 0.0
    %v2729 = vmax.f32 %v2709, 0.0
    %v2730 = vmax.f32 %v2712, 0.0
    %v2731 = vld [vmem:[%s9 + $0x3] sm:$0x1]
    %v2732 = vlaneseq
    %v2733 = vshrl.u32 %v2732, 7
    %v2734 = vsub.s32 0, %v2733
    %v2735 = vrot.slane %v2731, %v2734
    %v2736 = vmul.f32 %v2715, %v2735
    %v2737 = vmul.f32 %v2716, %v2735
    %v2738 = vmul.f32 %v2717, %v2735
    %v2739 = vmul.f32 %v2718, %v2735
    %v2740 = vmul.f32 %v2719, %v2735
    %v2741 = vmul.f32 %v2720, %v2735
    %v2742 = vmul.f32 %v2721, %v2735
    %v2743 = vmul.f32 %v2722, %v2735
    %v2744 = vmul.f32 %v2723, %v2735
    %v2745 = vmul.f32 %v2724, %v2735
    %v2746 = vmul.f32 %v2725, %v2735
    %v2747 = vmul.f32 %v2726, %v2735
    %v2748 = vmul.f32 %v2727, %v2735
    %v2749 = vmul.f32 %v2728, %v2735
    %v2750 = vmul.f32 %v2729, %v2735
    %v2751 = vmul.f32 %v2730, %v2735
    %v2752 = vsel %vm478, %v2736, 0.0
    %2753 = vadd.xlane.f32.xlu0 %v2752
    %v2754 = vpop.xlane.xlu0 %2753
    %v2755 = vsel %vm478, %v2737, 0.0
    %2756 = vadd.xlane.f32.xlu0 %v2755
    %v2757 = vpop.xlane.xlu0 %2756
    %v2758 = vsel %vm478, %v2738, 0.0
    %2759 = vadd.xlane.f32.xlu0 %v2758
    %v2760 = vpop.xlane.xlu0 %2759
    %v2761 = vsel %vm478, %v2739, 0.0
    %2762 = vadd.xlane.f32.xlu0 %v2761
    %v2763 = vpop.xlane.xlu0 %2762
    %v2764 = vsel %vm478, %v2740, 0.0
    %2765 = vadd.xlane.f32.xlu0 %v2764
    %v2766 = vpop.xlane.xlu0 %2765
    %v2767 = vsel %vm478, %v2741, 0.0
    %2768 = vadd.xlane.f32.xlu0 %v2767
    %v2769 = vpop.xlane.xlu0 %2768
    %v2770 = vsel %vm478, %v2742, 0.0
    %2771 = vadd.xlane.f32.xlu0 %v2770
    %v2772 = vpop.xlane.xlu0 %2771
    %v2773 = vsel %vm478, %v2743, 0.0
    %2774 = vadd.xlane.f32.xlu0 %v2773
    %v2775 = vpop.xlane.xlu0 %2774
    %v2776 = vsel %vm478, %v2744, 0.0
    %2777 = vadd.xlane.f32.xlu0 %v2776
    %v2778 = vpop.xlane.xlu0 %2777
    %v2779 = vsel %vm478, %v2745, 0.0
    %2780 = vadd.xlane.f32.xlu0 %v2779
    %v2781 = vpop.xlane.xlu0 %2780
    %v2782 = vsel %vm478, %v2746, 0.0
    %2783 = vadd.xlane.f32.xlu0 %v2782
    %v2784 = vpop.xlane.xlu0 %2783
    %v2785 = vsel %vm478, %v2747, 0.0
    %2786 = vadd.xlane.f32.xlu0 %v2785
    %v2787 = vpop.xlane.xlu0 %2786
    %v2788 = vsel %vm478, %v2748, 0.0
    %2789 = vadd.xlane.f32.xlu0 %v2788
    %v2790 = vpop.xlane.xlu0 %2789
    %v2791 = vsel %vm478, %v2749, 0.0
    %2792 = vadd.xlane.f32.xlu0 %v2791
    %v2793 = vpop.xlane.xlu0 %2792
    %v2794 = vsel %vm478, %v2750, 0.0
    %2795 = vadd.xlane.f32.xlu0 %v2794
    %v2796 = vpop.xlane.xlu0 %2795
    %v2797 = vsel %vm478, %v2751, 0.0
    %2798 = vadd.xlane.f32.xlu0 %v2797
    %v2799 = vpop.xlane.xlu0 %2798
    %v2800 = vld [vmem:[%s10 + $0x3] sm:$0x1]
    %2802 = vset.pattern.permute.xlu0 0
    %2803 = vperm.xlu0 %2802, %v2800
    %v2804 = vpop.permute.xlu0 %2803
    %v2805 = vlaneseq
    %v2806 = vshrl.u32 %v2805, 7
    %v2807 = vsub.s32 0, %v2806
    %v2808 = vrot.slane %v2804, %v2807
    %v2810 = vadd.f32 %v2754, %v2808
    %v2811 = vadd.f32 %v2757, %v2808
    %v2812 = vadd.f32 %v2760, %v2808
    %v2813 = vadd.f32 %v2763, %v2808
    %v2814 = vadd.f32 %v2766, %v2808
    %v2815 = vadd.f32 %v2769, %v2808
    %v2816 = vadd.f32 %v2772, %v2808
    %v2817 = vadd.f32 %v2775, %v2808
    %v2818 = vadd.f32 %v2778, %v2808
    %v2819 = vadd.f32 %v2781, %v2808
    %v2820 = vadd.f32 %v2784, %v2808
    %v2821 = vadd.f32 %v2787, %v2808
    %v2822 = vadd.f32 %v2790, %v2808
    %v2823 = vadd.f32 %v2793, %v2808
    %v2824 = vadd.f32 %v2796, %v2808
    %v2825 = vadd.f32 %v2799, %v2808
    %2842 = vset.pattern.permute.xlu0 0
    %2843 = vperm.xlu0 %2842, %v2810
    %v2844 = vpop.permute.xlu0 %2843
    %2845 = vset.pattern.permute.xlu0 0
    %2846 = vperm.xlu0 %2845, %v2811
    %v2847 = vpop.permute.xlu0 %2846
    %2848 = vset.pattern.permute.xlu0 0
    %2849 = vperm.xlu0 %2848, %v2812
    %v2850 = vpop.permute.xlu0 %2849
    %2851 = vset.pattern.permute.xlu0 0
    %2852 = vperm.xlu0 %2851, %v2813
    %v2853 = vpop.permute.xlu0 %2852
    %2854 = vset.pattern.permute.xlu0 0
    %2855 = vperm.xlu0 %2854, %v2814
    %v2856 = vpop.permute.xlu0 %2855
    %2857 = vset.pattern.permute.xlu0 0
    %2858 = vperm.xlu0 %2857, %v2815
    %v2859 = vpop.permute.xlu0 %2858
    %2860 = vset.pattern.permute.xlu0 0
    %2861 = vperm.xlu0 %2860, %v2816
    %v2862 = vpop.permute.xlu0 %2861
    %2863 = vset.pattern.permute.xlu0 0
    %2864 = vperm.xlu0 %2863, %v2817
    %v2865 = vpop.permute.xlu0 %2864
    %2866 = vset.pattern.permute.xlu0 0
    %2867 = vperm.xlu0 %2866, %v2818
    %v2868 = vpop.permute.xlu0 %2867
    %2869 = vset.pattern.permute.xlu0 0
    %2870 = vperm.xlu0 %2869, %v2819
    %v2871 = vpop.permute.xlu0 %2870
    %2872 = vset.pattern.permute.xlu0 0
    %2873 = vperm.xlu0 %2872, %v2820
    %v2874 = vpop.permute.xlu0 %2873
    %2875 = vset.pattern.permute.xlu0 0
    %2876 = vperm.xlu0 %2875, %v2821
    %v2877 = vpop.permute.xlu0 %2876
    %2878 = vset.pattern.permute.xlu0 0
    %2879 = vperm.xlu0 %2878, %v2822
    %v2880 = vpop.permute.xlu0 %2879
    %2881 = vset.pattern.permute.xlu0 0
    %2882 = vperm.xlu0 %2881, %v2823
    %v2883 = vpop.permute.xlu0 %2882
    %2884 = vset.pattern.permute.xlu0 0
    %2885 = vperm.xlu0 %2884, %v2824
    %v2886 = vpop.permute.xlu0 %2885
    %2887 = vset.pattern.permute.xlu0 0
    %2888 = vperm.xlu0 %2887, %v2825
    %v2889 = vpop.permute.xlu0 %2888
    %v2890 = vlaneseq
    %v2891 = vshrl.u32 %v2890, 7
    %v2892 = vsub.s32 %v942, %v2891
    %v2893 = vrot.slane %v2844, %v2892
    %v2894 = vlaneseq
    %v2895 = vshrl.u32 %v2894, 7
    %v2896 = vsub.s32 %v947, %v2895
    %v2897 = vrot.slane %v2847, %v2896
    %v2898 = vsel %vm952, %v2897, %v2893
    %v2899 = vlaneseq
    %v2900 = vshrl.u32 %v2899, 7
    %v2901 = vsub.s32 %v954, %v2900
    %v2902 = vrot.slane %v2850, %v2901
    %v2903 = vsel %vm959, %v2902, %v2898
    %v2904 = vlaneseq
    %v2905 = vshrl.u32 %v2904, 7
    %v2906 = vsub.s32 %v961, %v2905
    %v2907 = vrot.slane %v2853, %v2906
    %v2908 = vsel %vm966, %v2907, %v2903
    %v2909 = vlaneseq
    %v2910 = vshrl.u32 %v2909, 7
    %v2911 = vsub.s32 %v968, %v2910
    %v2912 = vrot.slane %v2856, %v2911
    %v2913 = vsel %vm973, %v2912, %v2908
    %v2914 = vlaneseq
    %v2915 = vshrl.u32 %v2914, 7
    %v2916 = vsub.s32 %v975, %v2915
    %v2917 = vrot.slane %v2859, %v2916
    %v2918 = vsel %vm980, %v2917, %v2913
    %v2919 = vlaneseq
    %v2920 = vshrl.u32 %v2919, 7
    %v2921 = vsub.s32 %v982, %v2920
    %v2922 = vrot.slane %v2862, %v2921
    %v2923 = vsel %vm987, %v2922, %v2918
    %v2924 = vlaneseq
    %v2925 = vshrl.u32 %v2924, 7
    %v2926 = vsub.s32 %v989, %v2925
    %v2927 = vrot.slane %v2865, %v2926
    %v2928 = vsel %vm994, %v2927, %v2923
    %v2929 = vlaneseq
    %v2930 = vshrl.u32 %v2929, 7
    %v2931 = vsub.s32 %v996, %v2930
    %v2932 = vrot.slane %v2868, %v2931
    %v2933 = vsel %vm1001, %v2932, %v2928
    %v2934 = vlaneseq
    %v2935 = vshrl.u32 %v2934, 7
    %v2936 = vsub.s32 %v1003, %v2935
    %v2937 = vrot.slane %v2871, %v2936
    %v2938 = vsel %vm1008, %v2937, %v2933
    %v2939 = vlaneseq
    %v2940 = vshrl.u32 %v2939, 7
    %v2941 = vsub.s32 %v1010, %v2940
    %v2942 = vrot.slane %v2874, %v2941
    %v2943 = vsel %vm1015, %v2942, %v2938
    %v2944 = vlaneseq
    %v2945 = vshrl.u32 %v2944, 7
    %v2946 = vsub.s32 %v1017, %v2945
    %v2947 = vrot.slane %v2877, %v2946
    %v2948 = vsel %vm1022, %v2947, %v2943
    %v2949 = vlaneseq
    %v2950 = vshrl.u32 %v2949, 7
    %v2951 = vsub.s32 %v1024, %v2950
    %v2952 = vrot.slane %v2880, %v2951
    %v2953 = vsel %vm1029, %v2952, %v2948
    %v2954 = vlaneseq
    %v2955 = vshrl.u32 %v2954, 7
    %v2956 = vsub.s32 %v1031, %v2955
    %v2957 = vrot.slane %v2883, %v2956
    %v2958 = vsel %vm1036, %v2957, %v2953
    %v2959 = vlaneseq
    %v2960 = vshrl.u32 %v2959, 7
    %v2961 = vsub.s32 %v1038, %v2960
    %v2962 = vrot.slane %v2886, %v2961
    %v2963 = vsel %vm1043, %v2962, %v2958
    %v2964 = vlaneseq
    %v2965 = vshrl.u32 %v2964, 7
    %v2966 = vsub.s32 %v1045, %v2965
    %v2967 = vrot.slane %v2889, %v2966
    %v2968 = vsel %vm1050, %v2967, %v2963
    %2970 = vst [vmem:[#allocation2 + $0x3] sm:$0x1] %v2968
    // Predicated region
    $region46: #{tpu_custom_call.1} parent=1 // pred_check
      _
    $region47: #{tpu_custom_call.1} parent=1 // pred_check_branch
      %2972 = sbr.rel (0) target = $region49
    $region48: #{tpu_custom_call.1} parent=1 // pred_region
      %s2974 = ssub.s32 64, 64
      %2975 = vsyncadd [#allocation3], %s2974
      %s2977 = sshll.u32 [#allocation2], 4
      %s2978 = int_to_ptr.vmem [resolvable:$true] %s2977
      %2980 = dma.vmem_to_hbm [thread:$0]  %s2978, 64, %s11, [#allocation3]
    $region49: #{tpu_custom_call.1} parent=1 // pred_fallthru
      _
    // Predicated region
    $region50: #{tpu_custom_call.1} parent=1 // pred_check
      _
    $region51: #{tpu_custom_call.1} parent=1 // pred_check_branch
      %2982 = sbr.rel (0) target = $region53
    $region52: #{tpu_custom_call.1} parent=1 // pred_region
      %2983 = dma.done [#allocation3], 64
    $region53: #{tpu_custom_call.1} parent=1 // pred_fallthru
      _
    %2984 = vsyncpa [#allocation3], 1

// kernel: tpu_custom_call.1
$region0: #{tpu_custom_call.1}
  #allocation0 [shape = 'u32[]', space=smem, size = 0x4, offset = 0x4, fixed_abs, tag = 'smem constant byte address 0x4 - core index']
  #allocation1 [shape = 'u32[144,128]{1,0:T(1,128)}', space=vmem, size = 0x12000, scoped, tag = 'internal scratch']
  %s0 = inlined_call_operand.vmem [shape: bf16[128,10], index: 0, kind: input, shape index: {}]
  %s1 = inlined_call_operand.vmem [shape: bf16[128,6], index: 1, kind: input, shape index: {}]
  %s2 = inlined_call_operand.vmem [shape: bf16[10,128], index: 2, kind: input, shape index: {}]
  %s3 = inlined_call_operand.vmem [shape: bf16[6,128], index: 3, kind: input, shape index: {}]
  %s4 = inlined_call_operand.vmem [shape: f32[4,32], index: 4, kind: input, shape index: {}]
  %s5 = inlined_call_operand.vmem [shape: bf16[4,32,32], index: 5, kind: input, shape index: {}]
  %s6 = inlined_call_operand.vmem [shape: f32[4,32], index: 6, kind: input, shape index: {}]
  %s7 = inlined_call_operand.vmem [shape: bf16[4,32,32], index: 7, kind: input, shape index: {}]
  %s8 = inlined_call_operand.vmem [shape: f32[4,32], index: 8, kind: input, shape index: {}]
  %s9 = inlined_call_operand.vmem [shape: f32[4,32], index: 9, kind: input, shape index: {}]
  %s10 = inlined_call_operand.vmem [shape: f32[4,1], index: 10, kind: input, shape index: {}]
  %s11 = inlined_call_operand.hbm [shape: f32[4,128], index: 11, kind: output, shape index: {}]
  %s12 = sld [smem:[#allocation0]]
  $region54: #{tpu_custom_call.1} parent=0
    _
  %s14 = ssub.s32 1, %s12
  %s15 = scalar_select 0, %s14, %s12
  $region1: #{tpu_custom_call.1} parent=0
    #allocation2 [shape = 'u8[2048]{0}', space=vmem, size = 0x800, scoped, tag = 'output window, operand 0, single buffered']
    #allocation3 [shape = 's32[1]{0}', space=sflag, size = 0x4, scoped, tag = 'scoped memory for tpu_custom_call.1']
    %16 = vsyncpa [#allocation3], 0
    // Predicated region
    $region2: #{tpu_custom_call.1} parent=1 // pred_check
      _
    $region3: #{tpu_custom_call.1} parent=1 // pred_check_branch
      %18 = sbr.rel (0) target = $region5
    $region4: #{tpu_custom_call.1} parent=1 // pred_region
      _
    $region5: #{tpu_custom_call.1} parent=1 // pred_fallthru
      _
    // Predicated region
    $region6: #{tpu_custom_call.1} parent=1 // pred_check
      _
    $region7: #{tpu_custom_call.1} parent=1 // pred_check_branch
      %20 = sbr.rel (0) target = $region9
    $region8: #{tpu_custom_call.1} parent=1 // pred_region
      _
    $region9: #{tpu_custom_call.1} parent=1 // pred_fallthru
      _
    // Predicated region
    $region10: #{tpu_custom_call.1} parent=1 // pred_check
      _
    $region11: #{tpu_custom_call.1} parent=1 // pred_check_branch
      %22 = sbr.rel (0) target = $region13
    $region12: #{tpu_custom_call.1} parent=1 // pred_region
      _
    $region13: #{tpu_custom_call.1} parent=1 // pred_fallthru
      _
    // Predicated region
    $region14: #{tpu_custom_call.1} parent=1 // pred_check
      _
    $region15: #{tpu_custom_call.1} parent=1 // pred_check_branch
      %24 = sbr.rel (0) target = $region17
    $region16: #{tpu_custom_call.1} parent=1 // pred_region
      _
    $region17: #{tpu_custom_call.1} parent=1 // pred_fallthru
      _
    // Predicated region
    $region18: #{tpu_custom_call.1} parent=1 // pred_check
      _
    $region19: #{tpu_custom_call.1} parent=1 // pred_check_branch
      %26 = sbr.rel (0) target = $region21
    $region20: #{tpu_custom_call.1} parent=1 // pred_region
      _
    $region21: #{tpu_custom_call.1} parent=1 // pred_fallthru
      _
    // Predicated region
    $region22: #{tpu_custom_call.1} parent=1 // pred_check
      _
    $region23: #{tpu_custom_call.1} parent=1 // pred_check_branch
      %28 = sbr.rel (0) target = $region25
    $region24: #{tpu_custom_call.1} parent=1 // pred_region
      _
    $region25: #{tpu_custom_call.1} parent=1 // pred_fallthru
      _
    // Predicated region
    $region26: #{tpu_custom_call.1} parent=1 // pred_check
      _
    $region27: #{tpu_custom_call.1} parent=1 // pred_check_branch
      %30 = sbr.rel (0) target = $region29
    $region28: #{tpu_custom_call.1} parent=1 // pred_region
      _
    $region29: #{tpu_custom_call.1} parent=1 // pred_fallthru
      _
    // Predicated region
    $region30: #{tpu_custom_call.1} parent=1 // pred_check
      _
    $region31: #{tpu_custom_call.1} parent=1 // pred_check_branch
      %32 = sbr.rel (0) target = $region33
    $region32: #{tpu_custom_call.1} parent=1 // pred_region
      _
    $region33: #{tpu_custom_call.1} parent=1 // pred_fallthru
      _
    // Predicated region
    $region34: #{tpu_custom_call.1} parent=1 // pred_check
      _
    $region35: #{tpu_custom_call.1} parent=1 // pred_check_branch
      %34 = sbr.rel (0) target = $region37
    $region36: #{tpu_custom_call.1} parent=1 // pred_region
      _
    $region37: #{tpu_custom_call.1} parent=1 // pred_fallthru
      _
    // Predicated region
    $region38: #{tpu_custom_call.1} parent=1 // pred_check
      _
    $region39: #{tpu_custom_call.1} parent=1 // pred_check_branch
      %36 = sbr.rel (0) target = $region41
    $region40: #{tpu_custom_call.1} parent=1 // pred_region
      _
    $region41: #{tpu_custom_call.1} parent=1 // pred_fallthru
      _
    // Predicated region
    $region42: #{tpu_custom_call.1} parent=1 // pred_check
      _
    $region43: #{tpu_custom_call.1} parent=1 // pred_check_branch
      %38 = sbr.rel (0) target = $region45
    $region44: #{tpu_custom_call.1} parent=1 // pred_region
      _
    $region45: #{tpu_custom_call.1} parent=1 // pred_fallthru
      _
    %v40 = vld [vmem:[%s0] sm:$0xf]
    %v41 = vld [vmem:[%s0 + $0x4] sm:$0xf]
    %v42 = vld [vmem:[%s0 + $0x8] sm:$0xf]
    %v43 = vld [vmem:[%s0 + $0xc] sm:$0xf]
    %v44 = vld [vmem:[%s0 + $0x10] sm:$0xf]
    %v45 = vld [vmem:[%s0 + $0x14] sm:$0xf]
    %v46 = vld [vmem:[%s0 + $0x18] sm:$0xf]
    %v47 = vld [vmem:[%s0 + $0x1c] sm:$0xf]
    %v48 = vld [vmem:[%s0 + $0x20] sm:$0xf]
    %v49 = vld [vmem:[%s0 + $0x24] sm:$0xf]
    %v50 = vld [vmem:[%s0 + $0x28] sm:$0xf]
    %v51 = vld [vmem:[%s0 + $0x2c] sm:$0xf]
    %v52 = vld [vmem:[%s0 + $0x30] sm:$0xf]
    %v53 = vld [vmem:[%s0 + $0x34] sm:$0xf]
    %v54 = vld [vmem:[%s0 + $0x38] sm:$0xf]
    %v55 = vld [vmem:[%s0 + $0x3c] sm:$0xf]
    %v56 = vld [vmem:[%s1] sm:$0xf]
    %v57 = vld [vmem:[%s1 + $0x4] sm:$0xf]
    %v58 = vld [vmem:[%s1 + $0x8] sm:$0xf]
    %v59 = vld [vmem:[%s1 + $0xc] sm:$0xf]
    %v60 = vld [vmem:[%s1 + $0x10] sm:$0xf]
    %v61 = vld [vmem:[%s1 + $0x14] sm:$0xf]
    %v62 = vld [vmem:[%s1 + $0x18] sm:$0xf]
    %v63 = vld [vmem:[%s1 + $0x1c] sm:$0xf]
    %v64 = vld [vmem:[%s1 + $0x20] sm:$0xf]
    %v65 = vld [vmem:[%s1 + $0x24] sm:$0xf]
    %v66 = vld [vmem:[%s1 + $0x28] sm:$0xf]
    %v67 = vld [vmem:[%s1 + $0x2c] sm:$0xf]
    %v68 = vld [vmem:[%s1 + $0x30] sm:$0xf]
    %v69 = vld [vmem:[%s1 + $0x34] sm:$0xf]
    %v70 = vld [vmem:[%s1 + $0x38] sm:$0xf]
    %v71 = vld [vmem:[%s1 + $0x3c] sm:$0xf]
    %v72 = vld [vmem:[%s2] sm:$0xf]
    %v73 = vld [vmem:[%s2 + $0x4] sm:$0x1]
    %v74 = vld [vmem:[%s3] sm:$0x7]
    %v91 = vunpack.c.l.b16 %v56
    %v92 = vunpack.c.l.b16 %v57
    %v93 = vunpack.c.l.b16 %v58
    %v94 = vunpack.c.l.b16 %v59
    %v95 = vunpack.c.l.b16 %v60
    %v96 = vunpack.c.l.b16 %v61
    %v97 = vunpack.c.l.b16 %v62
    %v98 = vunpack.c.l.b16 %v63
    %v99 = vunpack.c.l.b16 %v64
    %v100 = vunpack.c.l.b16 %v65
    %v101 = vunpack.c.l.b16 %v66
    %v102 = vunpack.c.l.b16 %v67
    %v103 = vunpack.c.l.b16 %v68
    %v104 = vunpack.c.l.b16 %v69
    %v105 = vunpack.c.l.b16 %v70
    %v106 = vunpack.c.l.b16 %v71
    %v107 = vpack.c.b16 %v92, %v91
    %v108 = vpack.c.b16 %v94, %v93
    %v109 = vpack.c.b16 %v96, %v95
    %v110 = vpack.c.b16 %v98, %v97
    %v111 = vpack.c.b16 %v100, %v99
    %v112 = vpack.c.b16 %v102, %v101
    %v113 = vpack.c.b16 %v104, %v103
    %v114 = vpack.c.b16 %v106, %v105
    %vm115 = vcmask 48128
    %v117 = vsel %vm115, %v107, 0
    %v120 = vsel %vm115, %v108, 0
    %v123 = vsel %vm115, %v109, 0
    %v126 = vsel %vm115, %v110, 0
    %v129 = vsel %vm115, %v111, 0
    %v132 = vsel %vm115, %v112, 0
    %v135 = vsel %vm115, %v113, 0
    %v138 = vsel %vm115, %v114, 0
    %vm140 = vcmask 1042432
    %v142 = vsel %vm140, %v74, 0
    %144 = vmatprep.subr.bf16.mxu0 0
    %145 = vmatpush1.bf16.msra.mxu0 %v142
    %146 = vmatprep.subr.bf16.mxu0 0
    %147 = vmatpush1.bf16.msra.mxu0 0
    %148 = vmatprep.subr.bf16.mxu0 0
    %149 = vmatpush1.bf16.msra.mxu0 0
    %150 = vmatprep.subr.bf16.mxu0 0
    %151 = vmatpush1.bf16.msra.mxu0 0
    %152 = vmatprep.subr.bf16.mxu0 0
    %153 = vmatpush1.bf16.msra.mxu0 0
    %154 = vmatprep.subr.bf16.mxu0 0
    %155 = vmatpush1.bf16.msra.mxu0 0
    %156 = vmatprep.subr.bf16.mxu0 0
    %157 = vmatpush1.bf16.msra.mxu0 0
    %158 = vmatprep.subr.bf16.mxu0 0
    %159 = vmatpush1.bf16.msra.mxu0 0
    %160 = vmatprep.subr.bf16.mxu0 0
    %161 = vmatpush1.bf16.msra.mxu0 0
    %162 = vmatprep.subr.bf16.mxu0 0
    %163 = vmatpush1.bf16.msra.mxu0 0
    %164 = vmatprep.subr.bf16.mxu0 0
    %165 = vmatpush1.bf16.msra.mxu0 0
    %166 = vmatprep.subr.bf16.mxu0 0
    %167 = vmatpush1.bf16.msra.mxu0 0
    %168 = vmatprep.subr.bf16.mxu0 0
    %169 = vmatpush1.bf16.msra.mxu0 0
    %170 = vmatprep.subr.bf16.mxu0 0
    %171 = vmatpush1.bf16.msra.mxu0 0
    %172 = vmatprep.subr.bf16.mxu0 0
    %173 = vmatpush1.bf16.msra.mxu0 0
    %174 = vmatprep.subr.bf16.mxu0 0
    %175 = vmatpush1.bf16.msra.mxu0 0
    %176 = vmatprep.mubr.bf16.mxu0 0
    %177 = vmatmul.mubr.bf16.gmra.mrb[0].mxu0 %v117
    %v178 = vpop.f32.mrb[0].mxu0
    %v179 = vadd.f32 0.0, %v178
    %v180 = vpop.f32.mrb[0].mxu0
    %v181 = vpop.f32.mrb[0].mxu0
    %v182 = vadd.f32 0.0, %v181
    %v183 = vpop.f32.mrb[0].mxu0
    %184 = vmatprep.mubr.bf16.mxu0 0
    %185 = vmatmul.mubr.bf16.gmra.mrb[0].mxu0 %v120
    %v186 = vpop.f32.mrb[0].mxu0
    %v187 = vadd.f32 0.0, %v186
    %v188 = vpop.f32.mrb[0].mxu0
    %v189 = vpop.f32.mrb[0].mxu0
    %v190 = vadd.f32 0.0, %v189
    %v191 = vpop.f32.mrb[0].mxu0
    %192 = vmatprep.mubr.bf16.mxu0 0
    %193 = vmatmul.mubr.bf16.gmra.mrb[0].mxu0 %v123
    %v194 = vpop.f32.mrb[0].mxu0
    %v195 = vadd.f32 0.0, %v194
    %v196 = vpop.f32.mrb[0].mxu0
    %v197 = vpop.f32.mrb[0].mxu0
    %v198 = vadd.f32 0.0, %v197
    %v199 = vpop.f32.mrb[0].mxu0
    %200 = vmatprep.mubr.bf16.mxu0 0
    %201 = vmatmul.mubr.bf16.gmra.mrb[0].mxu0 %v126
    %v202 = vpop.f32.mrb[0].mxu0
    %v203 = vadd.f32 0.0, %v202
    %v204 = vpop.f32.mrb[0].mxu0
    %v205 = vpop.f32.mrb[0].mxu0
    %v206 = vadd.f32 0.0, %v205
    %v207 = vpop.f32.mrb[0].mxu0
    %208 = vmatprep.mubr.bf16.mxu0 0
    %209 = vmatmul.mubr.bf16.gmra.mrb[0].mxu0 %v129
    %v210 = vpop.f32.mrb[0].mxu0
    %v211 = vadd.f32 0.0, %v210
    %v212 = vpop.f32.mrb[0].mxu0
    %v213 = vpop.f32.mrb[0].mxu0
    %v214 = vadd.f32 0.0, %v213
    %v215 = vpop.f32.mrb[0].mxu0
    %216 = vmatprep.mubr.bf16.mxu0 0
    %217 = vmatmul.mubr.bf16.gmra.mrb[0].mxu0 %v132
    %v218 = vpop.f32.mrb[0].mxu0
    %v219 = vadd.f32 0.0, %v218
    %v220 = vpop.f32.mrb[0].mxu0
    %v221 = vpop.f32.mrb[0].mxu0
    %v222 = vadd.f32 0.0, %v221
    %v223 = vpop.f32.mrb[0].mxu0
    %224 = vmatprep.mubr.bf16.mxu0 0
    %225 = vmatmul.mubr.bf16.gmra.mrb[0].mxu0 %v135
    %v226 = vpop.f32.mrb[0].mxu0
    %v227 = vadd.f32 0.0, %v226
    %v228 = vpop.f32.mrb[0].mxu0
    %v229 = vpop.f32.mrb[0].mxu0
    %v230 = vadd.f32 0.0, %v229
    %v231 = vpop.f32.mrb[0].mxu0
    %232 = vmatprep.mubr.bf16.mxu0 0
    %233 = vmatmul.mubr.bf16.gmra.mrb[0].mxu0 %v138
    %v234 = vpop.f32.mrb[0].mxu0
    %v235 = vadd.f32 0.0, %v234
    %v236 = vpop.f32.mrb[0].mxu0
    %v237 = vpop.f32.mrb[0].mxu0
    %v238 = vadd.f32 0.0, %v237
    %v239 = vpop.f32.mrb[0].mxu0
    %240 = vdwg.mxu0
    %v257 = vunpack.c.l.b16 %v40
    %v258 = vunpack.c.l.b16 %v41
    %v259 = vunpack.c.l.b16 %v42
    %v260 = vunpack.c.l.b16 %v43
    %v261 = vunpack.c.l.b16 %v44
    %v262 = vunpack.c.l.b16 %v45
    %v263 = vunpack.c.l.b16 %v46
    %v264 = vunpack.c.l.b16 %v47
    %v265 = vunpack.c.l.b16 %v48
    %v266 = vunpack.c.l.b16 %v49
    %v267 = vunpack.c.l.b16 %v50
    %v268 = vunpack.c.l.b16 %v51
    %v269 = vunpack.c.l.b16 %v52
    %v270 = vunpack.c.l.b16 %v53
    %v271 = vunpack.c.l.b16 %v54
    %v272 = vunpack.c.l.b16 %v55
    %v273 = vpack.c.b16 %v258, %v257
    %v274 = vpack.c.b16 %v260, %v259
    %v275 = vpack.c.b16 %v262, %v261
    %v276 = vpack.c.b16 %v264, %v263
    %v277 = vpack.c.b16 %v266, %v265
    %v278 = vpack.c.b16 %v268, %v267
    %v279 = vpack.c.b16 %v270, %v269
    %v280 = vpack.c.b16 %v272, %v271
    %v283 = vunpack.c.l.b16 %v72
    %v284 = vunpack.c.l.b16 %v73
    %v285 = vpack.c.b16 %v284, %v283
    %vm286 = vcmask 80896
    %v288 = vsel %vm286, %v273, 0
    %v291 = vsel %vm286, %v274, 0
    %v294 = vsel %vm286, %v275, 0
    %v297 = vsel %vm286, %v276, 0
    %v300 = vsel %vm286, %v277, 0
    %v303 = vsel %vm286, %v278, 0
    %v306 = vsel %vm286, %v279, 0
    %v309 = vsel %vm286, %v280, 0
    %vm311 = vcmask 1044480
    %v313 = vsel %vm311, %v285, 0
    %315 = vmatprep.subr.bf16.mxu0 0
    %316 = vmatpush1.bf16.msra.mxu0 %v313
    %317 = vmatprep.subr.bf16.mxu0 0
    %318 = vmatpush1.bf16.msra.mxu0 0
    %319 = vmatprep.subr.bf16.mxu0 0
    %320 = vmatpush1.bf16.msra.mxu0 0
    %321 = vmatprep.subr.bf16.mxu0 0
    %322 = vmatpush1.bf16.msra.mxu0 0
    %323 = vmatprep.subr.bf16.mxu0 0
    %324 = vmatpush1.bf16.msra.mxu0 0
    %325 = vmatprep.subr.bf16.mxu0 0
    %326 = vmatpush1.bf16.msra.mxu0 0
    %327 = vmatprep.subr.bf16.mxu0 0
    %328 = vmatpush1.bf16.msra.mxu0 0
    %329 = vmatprep.subr.bf16.mxu0 0
    %330 = vmatpush1.bf16.msra.mxu0 0
    %331 = vmatprep.subr.bf16.mxu0 0
    %332 = vmatpush1.bf16.msra.mxu0 0
    %333 = vmatprep.subr.bf16.mxu0 0
    %334 = vmatpush1.bf16.msra.mxu0 0
    %335 = vmatprep.subr.bf16.mxu0 0
    %336 = vmatpush1.bf16.msra.mxu0 0
    %337 = vmatprep.subr.bf16.mxu0 0
    %338 = vmatpush1.bf16.msra.mxu0 0
    %339 = vmatprep.subr.bf16.mxu0 0
    %340 = vmatpush1.bf16.msra.mxu0 0
    %341 = vmatprep.subr.bf16.mxu0 0
    %342 = vmatpush1.bf16.msra.mxu0 0
    %343 = vmatprep.subr.bf16.mxu0 0
    %344 = vmatpush1.bf16.msra.mxu0 0
    %345 = vmatprep.subr.bf16.mxu0 0
    %346 = vmatpush1.bf16.msra.mxu0 0
    %347 = vmatprep.mubr.bf16.mxu0 0
    %348 = vmatmul.mubr.bf16.gmra.mrb[0].mxu0 %v288
    %v349 = vpop.f32.mrb[0].mxu0
    %v350 = vadd.f32 %v179, %v349
    %v351 = vpop.f32.mrb[0].mxu0
    %v352 = vpop.f32.mrb[0].mxu0
    %v353 = vadd.f32 %v182, %v352
    %v354 = vpop.f32.mrb[0].mxu0
    %355 = vmatprep.mubr.bf16.mxu0 0
    %356 = vmatmul.mubr.bf16.gmra.mrb[0].mxu0 %v291
    %v357 = vpop.f32.mrb[0].mxu0
    %v358 = vadd.f32 %v187, %v357
    %v359 = vpop.f32.mrb[0].mxu0
    %v360 = vpop.f32.mrb[0].mxu0
    %v361 = vadd.f32 %v190, %v360
    %v362 = vpop.f32.mrb[0].mxu0
    %363 = vmatprep.mubr.bf16.mxu0 0
    %364 = vmatmul.mubr.bf16.gmra.mrb[0].mxu0 %v294
    %v365 = vpop.f32.mrb[0].mxu0
    %v366 = vadd.f32 %v195, %v365
    %v367 = vpop.f32.mrb[0].mxu0
    %v368 = vpop.f32.mrb[0].mxu0
    %v369 = vadd.f32 %v198, %v368
    %v370 = vpop.f32.mrb[0].mxu0
    %371 = vmatprep.mubr.bf16.mxu0 0
    %372 = vmatmul.mubr.bf16.gmra.mrb[0].mxu0 %v297
    %v373 = vpop.f32.mrb[0].mxu0
    %v374 = vadd.f32 %v203, %v373
    %v375 = vpop.f32.mrb[0].mxu0
    %v376 = vpop.f32.mrb[0].mxu0
    %v377 = vadd.f32 %v206, %v376
    %v378 = vpop.f32.mrb[0].mxu0
    %379 = vmatprep.mubr.bf16.mxu0 0
    %380 = vmatmul.mubr.bf16.gmra.mrb[0].mxu0 %v300
    %v381 = vpop.f32.mrb[0].mxu0
    %v382 = vadd.f32 %v211, %v381
    %v383 = vpop.f32.mrb[0].mxu0
    %v384 = vpop.f32.mrb[0].mxu0
    %v385 = vadd.f32 %v214, %v384
    %v386 = vpop.f32.mrb[0].mxu0
    %387 = vmatprep.mubr.bf16.mxu0 0
    %388 = vmatmul.mubr.bf16.gmra.mrb[0].mxu0 %v303
    %v389 = vpop.f32.mrb[0].mxu0
    %v390 = vadd.f32 %v219, %v389
    %v391 = vpop.f32.mrb[0].mxu0
    %v392 = vpop.f32.mrb[0].mxu0
    %v393 = vadd.f32 %v222, %v392
    %v394 = vpop.f32.mrb[0].mxu0
    %395 = vmatprep.mubr.bf16.mxu0 0
    %396 = vmatmul.mubr.bf16.gmra.mrb[0].mxu0 %v306
    %v397 = vpop.f32.mrb[0].mxu0
    %v398 = vadd.f32 %v227, %v397
    %v399 = vpop.f32.mrb[0].mxu0
    %v400 = vpop.f32.mrb[0].mxu0
    %v401 = vadd.f32 %v230, %v400
    %v402 = vpop.f32.mrb[0].mxu0
    %403 = vmatprep.mubr.bf16.mxu0 0
    %404 = vmatmul.mubr.bf16.gmra.mrb[0].mxu0 %v309
    %v405 = vpop.f32.mrb[0].mxu0
    %v406 = vadd.f32 %v235, %v405
    %v407 = vpop.f32.mrb[0].mxu0
    %v408 = vpop.f32.mrb[0].mxu0
    %v409 = vadd.f32 %v238, %v408
    %v410 = vpop.f32.mrb[0].mxu0
    %411 = vdwg.mxu0
    %v412 = vld [vmem:[%s4] sm:$0x1]
    %v413 = vlaneseq
    %v414 = vshrl.u32 %v413, 7
    %v415 = vsub.s32 0, %v414
    %v416 = vrot.slane %v412, %v415
    %v417 = vadd.f32 %v350, %v416
    %v418 = vadd.f32 %v353, %v416
    %v419 = vadd.f32 %v358, %v416
    %v420 = vadd.f32 %v361, %v416
    %v421 = vadd.f32 %v366, %v416
    %v422 = vadd.f32 %v369, %v416
    %v423 = vadd.f32 %v374, %v416
    %v424 = vadd.f32 %v377, %v416
    %v425 = vadd.f32 %v382, %v416
    %v426 = vadd.f32 %v385, %v416
    %v427 = vadd.f32 %v390, %v416
    %v428 = vadd.f32 %v393, %v416
    %v429 = vadd.f32 %v398, %v416
    %v430 = vadd.f32 %v401, %v416
    %v431 = vadd.f32 %v406, %v416
    %v432 = vadd.f32 %v409, %v416
    %v433 = vmax.f32 %v417, 0.0
    %v434 = vmax.f32 %v418, 0.0
    %v435 = vmax.f32 %v419, 0.0
    %v436 = vmax.f32 %v420, 0.0
    %v437 = vmax.f32 %v421, 0.0
    %v438 = vmax.f32 %v422, 0.0
    %v439 = vmax.f32 %v423, 0.0
    %v440 = vmax.f32 %v424, 0.0
    %v441 = vmax.f32 %v425, 0.0
    %v442 = vmax.f32 %v426, 0.0
    %v443 = vmax.f32 %v427, 0.0
    %v444 = vmax.f32 %v428, 0.0
    %v445 = vmax.f32 %v429, 0.0
    %v446 = vmax.f32 %v430, 0.0
    %v447 = vmax.f32 %v431, 0.0
    %v448 = vmax.f32 %v432, 0.0
    %v449 = vpack.c.bf16 %v434, %v433
    %v450 = vpack.c.bf16 %v436, %v435
    %v451 = vpack.c.bf16 %v438, %v437
    %v452 = vpack.c.bf16 %v440, %v439
    %v453 = vpack.c.bf16 %v442, %v441
    %v454 = vpack.c.bf16 %v444, %v443
    %v455 = vpack.c.bf16 %v446, %v445
    %v456 = vpack.c.bf16 %v448, %v447
    %v457 = vld [vmem:[%s5] sm:$0xf]
    %v458 = vld [vmem:[%s5 + $0x4] sm:$0xf]
    %v459 = vld [vmem:[%s5 + $0x8] sm:$0xf]
    %v460 = vld [vmem:[%s5 + $0xc] sm:$0xf]
    %v461 = vld [vmem:[%s6] sm:$0x1]
    %v462 = vlaneseq
    %v463 = vshrl.u32 %v462, 7
    %v464 = vsub.s32 0, %v463
    %v465 = vrot.slane %v461, %v464
    %v470 = vunpack.c.l.b16 %v457
    %v471 = vunpack.c.l.b16 %v458
    %v472 = vunpack.c.l.b16 %v459
    %v473 = vunpack.c.l.b16 %v460
    %v474 = vpack.c.b16 %v471, %v470
    %v475 = vpack.c.b16 %v473, %v472
    %vm478 = vcmask 261120
    %v480 = vsel %vm478, %v449, 0
    %v483 = vsel %vm478, %v450, 0
    %v486 = vsel %vm478, %v451, 0
    %v489 = vsel %vm478, %v452, 0
    %v492 = vsel %vm478, %v453, 0
    %v495 = vsel %vm478, %v454, 0
    %v498 = vsel %vm478, %v455, 0
    %v501 = vsel %vm478, %v456, 0
    %503 = vmatprep.subr.bf16.mxu0 0
    %504 = vmatpush1.bf16.msra.mxu0 %v474
    %505 = vmatprep.subr.bf16.mxu0 0
    %506 = vmatpush1.bf16.msra.mxu0 %v475
    %507 = vmatprep.subr.bf16.mxu0 0
    %508 = vmatpush1.bf16.msra.mxu0 0
    %509 = vmatprep.subr.bf16.mxu0 0
    %510 = vmatpush1.bf16.msra.mxu0 0
    %511 = vmatprep.subr.bf16.mxu0 0
    %512 = vmatpush1.bf16.msra.mxu0 0
    %513 = vmatprep.subr.bf16.mxu0 0
    %514 = vmatpush1.bf16.msra.mxu0 0
    %515 = vmatprep.subr.bf16.mxu0 0
    %516 = vmatpush1.bf16.msra.mxu0 0
    %517 = vmatprep.subr.bf16.mxu0 0
    %518 = vmatpush1.bf16.msra.mxu0 0
    %519 = vmatprep.subr.bf16.mxu0 0
    %520 = vmatpush1.bf16.msra.mxu0 0
    %521 = vmatprep.subr.bf16.mxu0 0
    %522 = vmatpush1.bf16.msra.mxu0 0
    %523 = vmatprep.subr.bf16.mxu0 0
    %524 = vmatpush1.bf16.msra.mxu0 0
    %525 = vmatprep.subr.bf16.mxu0 0
    %526 = vmatpush1.bf16.msra.mxu0 0
    %527 = vmatprep.subr.bf16.mxu0 0
    %528 = vmatpush1.bf16.msra.mxu0 0
    %529 = vmatprep.subr.bf16.mxu0 0
    %530 = vmatpush1.bf16.msra.mxu0 0
    %531 = vmatprep.subr.bf16.mxu0 0
    %532 = vmatpush1.bf16.msra.mxu0 0
    %533 = vmatprep.subr.bf16.mxu0 0
    %534 = vmatpush1.bf16.msra.mxu0 0
    %535 = vmatprep.mubr.bf16.mxu0 0
    %536 = vmatmul.mubr.bf16.gmra.mrb[0].mxu0 %v480
    %v537 = vpop.f32.mrb[0].mxu0
    %v538 = vadd.f32 %v465, %v537
    %v539 = vpop.f32.mrb[0].mxu0
    %v540 = vpop.f32.mrb[0].mxu0
    %v541 = vadd.f32 %v465, %v540
    %v542 = vpop.f32.mrb[0].mxu0
    %543 = vmatprep.mubr.bf16.mxu0 0
    %544 = vmatmul.mubr.bf16.gmra.mrb[0].mxu0 %v483
    %v545 = vpop.f32.mrb[0].mxu0
    %v546 = vadd.f32 %v465, %v545
    %v547 = vpop.f32.mrb[0].mxu0
    %v548 = vpop.f32.mrb[0].mxu0
    %v549 = vadd.f32 %v465, %v548
    %v550 = vpop.f32.mrb[0].mxu0
    %551 = vmatprep.mubr.bf16.mxu0 0
    %552 = vmatmul.mubr.bf16.gmra.mrb[0].mxu0 %v486
    %v553 = vpop.f32.mrb[0].mxu0
    %v554 = vadd.f32 %v465, %v553
    %v555 = vpop.f32.mrb[0].mxu0
    %v556 = vpop.f32.mrb[0].mxu0
    %v557 = vadd.f32 %v465, %v556
    %v558 = vpop.f32.mrb[0].mxu0
    %559 = vmatprep.mubr.bf16.mxu0 0
    %560 = vmatmul.mubr.bf16.gmra.mrb[0].mxu0 %v489
    %v561 = vpop.f32.mrb[0].mxu0
    %v562 = vadd.f32 %v465, %v561
    %v563 = vpop.f32.mrb[0].mxu0
    %v564 = vpop.f32.mrb[0].mxu0
    %v565 = vadd.f32 %v465, %v564
    %v566 = vpop.f32.mrb[0].mxu0
    %567 = vmatprep.mubr.bf16.mxu0 0
    %568 = vmatmul.mubr.bf16.gmra.mrb[0].mxu0 %v492
    %v569 = vpop.f32.mrb[0].mxu0
    %v570 = vadd.f32 %v465, %v569
    %v571 = vpop.f32.mrb[0].mxu0
    %v572 = vpop.f32.mrb[0].mxu0
    %v573 = vadd.f32 %v465, %v572
    %v574 = vpop.f32.mrb[0].mxu0
    %575 = vmatprep.mubr.bf16.mxu0 0
    %576 = vmatmul.mubr.bf16.gmra.mrb[0].mxu0 %v495
    %v577 = vpop.f32.mrb[0].mxu0
    %v578 = vadd.f32 %v465, %v577
    %v579 = vpop.f32.mrb[0].mxu0
    %v580 = vpop.f32.mrb[0].mxu0
    %v581 = vadd.f32 %v465, %v580
    %v582 = vpop.f32.mrb[0].mxu0
    %583 = vmatprep.mubr.bf16.mxu0 0
    %584 = vmatmul.mubr.bf16.gmra.mrb[0].mxu0 %v498
    %v585 = vpop.f32.mrb[0].mxu0
    %v586 = vadd.f32 %v465, %v585
    %v587 = vpop.f32.mrb[0].mxu0
    %v588 = vpop.f32.mrb[0].mxu0
    %v589 = vadd.f32 %v465, %v588
    %v590 = vpop.f32.mrb[0].mxu0
    %591 = vmatprep.mubr.bf16.mxu0 0
    %592 = vmatmul.mubr.bf16.gmra.mrb[0].mxu0 %v501
    %v593 = vpop.f32.mrb[0].mxu0
    %v594 = vadd.f32 %v465, %v593
    %v595 = vpop.f32.mrb[0].mxu0
    %v596 = vpop.f32.mrb[0].mxu0
    %v597 = vadd.f32 %v465, %v596
    %v598 = vpop.f32.mrb[0].mxu0
    %599 = vdwg.mxu0
    %v600 = vmax.f32 %v538, 0.0
    %v601 = vmax.f32 %v541, 0.0
    %v602 = vmax.f32 %v546, 0.0
    %v603 = vmax.f32 %v549, 0.0
    %v604 = vmax.f32 %v554, 0.0
    %v605 = vmax.f32 %v557, 0.0
    %v606 = vmax.f32 %v562, 0.0
    %v607 = vmax.f32 %v565, 0.0
    %v608 = vmax.f32 %v570, 0.0
    %v609 = vmax.f32 %v573, 0.0
    %v610 = vmax.f32 %v578, 0.0
    %v611 = vmax.f32 %v581, 0.0
    %v612 = vmax.f32 %v586, 0.0
    %v613 = vmax.f32 %v589, 0.0
    %v614 = vmax.f32 %v594, 0.0
    %v615 = vmax.f32 %v597, 0.0
    %v616 = vpack.c.bf16 %v601, %v600
    %v617 = vpack.c.bf16 %v603, %v602
    %v618 = vpack.c.bf16 %v605, %v604
    %v619 = vpack.c.bf16 %v607, %v606
    %v620 = vpack.c.bf16 %v609, %v608
    %v621 = vpack.c.bf16 %v611, %v610
    %v622 = vpack.c.bf16 %v613, %v612
    %v623 = vpack.c.bf16 %v615, %v614
    %v624 = vld [vmem:[%s7] sm:$0xf]
    %v625 = vld [vmem:[%s7 + $0x4] sm:$0xf]
    %v626 = vld [vmem:[%s7 + $0x8] sm:$0xf]
    %v627 = vld [vmem:[%s7 + $0xc] sm:$0xf]
    %v628 = vld [vmem:[%s8] sm:$0x1]
    %v629 = vlaneseq
    %v630 = vshrl.u32 %v629, 7
    %v631 = vsub.s32 0, %v630
    %v632 = vrot.slane %v628, %v631
    %v637 = vunpack.c.l.b16 %v624
    %v638 = vunpack.c.l.b16 %v625
    %v639 = vunpack.c.l.b16 %v626
    %v640 = vunpack.c.l.b16 %v627
    %v641 = vpack.c.b16 %v638, %v637
    %v642 = vpack.c.b16 %v640, %v639
    %v646 = vsel %vm478, %v616, 0
    %v649 = vsel %vm478, %v617, 0
    %v652 = vsel %vm478, %v618, 0
    %v655 = vsel %vm478, %v619, 0
    %v658 = vsel %vm478, %v620, 0
    %v661 = vsel %vm478, %v621, 0
    %v664 = vsel %vm478, %v622, 0
    %v667 = vsel %vm478, %v623, 0
    %669 = vmatprep.subr.bf16.mxu0 0
    %670 = vmatpush1.bf16.msra.mxu0 %v641
    %671 = vmatprep.subr.bf16.mxu0 0
    %672 = vmatpush1.bf16.msra.mxu0 %v642
    %673 = vmatprep.subr.bf16.mxu0 0
    %674 = vmatpush1.bf16.msra.mxu0 0
    %675 = vmatprep.subr.bf16.mxu0 0
    %676 = vmatpush1.bf16.msra.mxu0 0
    %677 = vmatprep.subr.bf16.mxu0 0
    %678 = vmatpush1.bf16.msra.mxu0 0
    %679 = vmatprep.subr.bf16.mxu0 0
    %680 = vmatpush1.bf16.msra.mxu0 0
    %681 = vmatprep.subr.bf16.mxu0 0
    %682 = vmatpush1.bf16.msra.mxu0 0
    %683 = vmatprep.subr.bf16.mxu0 0
    %684 = vmatpush1.bf16.msra.mxu0 0
    %685 = vmatprep.subr.bf16.mxu0 0
    %686 = vmatpush1.bf16.msra.mxu0 0
    %687 = vmatprep.subr.bf16.mxu0 0
    %688 = vmatpush1.bf16.msra.mxu0 0
    %689 = vmatprep.subr.bf16.mxu0 0
    %690 = vmatpush1.bf16.msra.mxu0 0
    %691 = vmatprep.subr.bf16.mxu0 0
    %692 = vmatpush1.bf16.msra.mxu0 0
    %693 = vmatprep.subr.bf16.mxu0 0
    %694 = vmatpush1.bf16.msra.mxu0 0
    %695 = vmatprep.subr.bf16.mxu0 0
    %696 = vmatpush1.bf16.msra.mxu0 0
    %697 = vmatprep.subr.bf16.mxu0 0
    %698 = vmatpush1.bf16.msra.mxu0 0
    %699 = vmatprep.subr.bf16.mxu0 0
    %700 = vmatpush1.bf16.msra.mxu0 0
    %701 = vmatprep.mubr.bf16.mxu0 0
    %702 = vmatmul.mubr.bf16.gmra.mrb[0].mxu0 %v646
    %v703 = vpop.f32.mrb[0].mxu0
    %v704 = vadd.f32 %v632, %v703
    %v705 = vpop.f32.mrb[0].mxu0
    %v706 = vpop.f32.mrb[0].mxu0
    %v707 = vadd.f32 %v632, %v706
    %v708 = vpop.f32.mrb[0].mxu0
    %709 = vmatprep.mubr.bf16.mxu0 0
    %710 = vmatmul.mubr.bf16.gmra.mrb[0].mxu0 %v649
    %v711 = vpop.f32.mrb[0].mxu0
    %v712 = vadd.f32 %v632, %v711
    %v713 = vpop.f32.mrb[0].mxu0
    %v714 = vpop.f32.mrb[0].mxu0
    %v715 = vadd.f32 %v632, %v714
    %v716 = vpop.f32.mrb[0].mxu0
    %717 = vmatprep.mubr.bf16.mxu0 0
    %718 = vmatmul.mubr.bf16.gmra.mrb[0].mxu0 %v652
    %v719 = vpop.f32.mrb[0].mxu0
    %v720 = vadd.f32 %v632, %v719
    %v721 = vpop.f32.mrb[0].mxu0
    %v722 = vpop.f32.mrb[0].mxu0
    %v723 = vadd.f32 %v632, %v722
    %v724 = vpop.f32.mrb[0].mxu0
    %725 = vmatprep.mubr.bf16.mxu0 0
    %726 = vmatmul.mubr.bf16.gmra.mrb[0].mxu0 %v655
    %v727 = vpop.f32.mrb[0].mxu0
    %v728 = vadd.f32 %v632, %v727
    %v729 = vpop.f32.mrb[0].mxu0
    %v730 = vpop.f32.mrb[0].mxu0
    %v731 = vadd.f32 %v632, %v730
    %v732 = vpop.f32.mrb[0].mxu0
    %733 = vmatprep.mubr.bf16.mxu0 0
    %734 = vmatmul.mubr.bf16.gmra.mrb[0].mxu0 %v658
    %v735 = vpop.f32.mrb[0].mxu0
    %v736 = vadd.f32 %v632, %v735
    %v737 = vpop.f32.mrb[0].mxu0
    %v738 = vpop.f32.mrb[0].mxu0
    %v739 = vadd.f32 %v632, %v738
    %v740 = vpop.f32.mrb[0].mxu0
    %741 = vmatprep.mubr.bf16.mxu0 0
    %742 = vmatmul.mubr.bf16.gmra.mrb[0].mxu0 %v661
    %v743 = vpop.f32.mrb[0].mxu0
    %v744 = vadd.f32 %v632, %v743
    %v745 = vpop.f32.mrb[0].mxu0
    %v746 = vpop.f32.mrb[0].mxu0
    %v747 = vadd.f32 %v632, %v746
    %v748 = vpop.f32.mrb[0].mxu0
    %749 = vmatprep.mubr.bf16.mxu0 0
    %750 = vmatmul.mubr.bf16.gmra.mrb[0].mxu0 %v664
    %v751 = vpop.f32.mrb[0].mxu0
    %v752 = vadd.f32 %v632, %v751
    %v753 = vpop.f32.mrb[0].mxu0
    %v754 = vpop.f32.mrb[0].mxu0
    %v755 = vadd.f32 %v632, %v754
    %v756 = vpop.f32.mrb[0].mxu0
    %757 = vmatprep.mubr.bf16.mxu0 0
    %758 = vmatmul.mubr.bf16.gmra.mrb[0].mxu0 %v667
    %v759 = vpop.f32.mrb[0].mxu0
    %v760 = vadd.f32 %v632, %v759
    %v761 = vpop.f32.mrb[0].mxu0
    %v762 = vpop.f32.mrb[0].mxu0
    %v763 = vadd.f32 %v632, %v762
    %v764 = vpop.f32.mrb[0].mxu0
    %765 = vdwg.mxu0
    %v766 = vmax.f32 %v704, 0.0
    %v767 = vmax.f32 %v707, 0.0
    %v768 = vmax.f32 %v712, 0.0
    %v769 = vmax.f32 %v715, 0.0
    %v770 = vmax.f32 %v720, 0.0
    %v771 = vmax.f32 %v723, 0.0
    %v772 = vmax.f32 %v728, 0.0
    %v773 = vmax.f32 %v731, 0.0
    %v774 = vmax.f32 %v736, 0.0
    %v775 = vmax.f32 %v739, 0.0
    %v776 = vmax.f32 %v744, 0.0
    %v777 = vmax.f32 %v747, 0.0
    %v778 = vmax.f32 %v752, 0.0
    %v779 = vmax.f32 %v755, 0.0
    %v780 = vmax.f32 %v760, 0.0
    %v781 = vmax.f32 %v763, 0.0
    %v782 = vld [vmem:[%s9] sm:$0x1]
    %v783 = vlaneseq
    %v784 = vshrl.u32 %v783, 7
    %v785 = vsub.s32 0, %v784
    %v786 = vrot.slane %v782, %v785
    %v787 = vmul.f32 %v766, %v786
    %v788 = vmul.f32 %v767, %v786
    %v789 = vmul.f32 %v768, %v786
    %v790 = vmul.f32 %v769, %v786
    %v791 = vmul.f32 %v770, %v786
    %v792 = vmul.f32 %v771, %v786
    %v793 = vmul.f32 %v772, %v786
    %v794 = vmul.f32 %v773, %v786
    %v795 = vmul.f32 %v774, %v786
    %v796 = vmul.f32 %v775, %v786
    %v797 = vmul.f32 %v776, %v786
    %v798 = vmul.f32 %v777, %v786
    %v799 = vmul.f32 %v778, %v786
    %v800 = vmul.f32 %v779, %v786
    %v801 = vmul.f32 %v780, %v786
    %v802 = vmul.f32 %v781, %v786
    %v803 = vsel %vm478, %v787, 0.0
    %804 = vadd.xlane.f32.xlu0 %v803
    %v805 = vpop.xlane.xlu0 %804
    %v806 = vsel %vm478, %v788, 0.0
    %807 = vadd.xlane.f32.xlu0 %v806
    %v808 = vpop.xlane.xlu0 %807
    %v809 = vsel %vm478, %v789, 0.0
    %810 = vadd.xlane.f32.xlu0 %v809
    %v811 = vpop.xlane.xlu0 %810
    %v812 = vsel %vm478, %v790, 0.0
    %813 = vadd.xlane.f32.xlu0 %v812
    %v814 = vpop.xlane.xlu0 %813
    %v815 = vsel %vm478, %v791, 0.0
    %816 = vadd.xlane.f32.xlu0 %v815
    %v817 = vpop.xlane.xlu0 %816
    %v818 = vsel %vm478, %v792, 0.0
    %819 = vadd.xlane.f32.xlu0 %v818
    %v820 = vpop.xlane.xlu0 %819
    %v821 = vsel %vm478, %v793, 0.0
    %822 = vadd.xlane.f32.xlu0 %v821
    %v823 = vpop.xlane.xlu0 %822
    %v824 = vsel %vm478, %v794, 0.0
    %825 = vadd.xlane.f32.xlu0 %v824
    %v826 = vpop.xlane.xlu0 %825
    %v827 = vsel %vm478, %v795, 0.0
    %828 = vadd.xlane.f32.xlu0 %v827
    %v829 = vpop.xlane.xlu0 %828
    %v830 = vsel %vm478, %v796, 0.0
    %831 = vadd.xlane.f32.xlu0 %v830
    %v832 = vpop.xlane.xlu0 %831
    %v833 = vsel %vm478, %v797, 0.0
    %834 = vadd.xlane.f32.xlu0 %v833
    %v835 = vpop.xlane.xlu0 %834
    %v836 = vsel %vm478, %v798, 0.0
    %837 = vadd.xlane.f32.xlu0 %v836
    %v838 = vpop.xlane.xlu0 %837
    %v839 = vsel %vm478, %v799, 0.0
    %840 = vadd.xlane.f32.xlu0 %v839
    %v841 = vpop.xlane.xlu0 %840
    %v842 = vsel %vm478, %v800, 0.0
    %843 = vadd.xlane.f32.xlu0 %v842
    %v844 = vpop.xlane.xlu0 %843
    %v845 = vsel %vm478, %v801, 0.0
    %846 = vadd.xlane.f32.xlu0 %v845
    %v847 = vpop.xlane.xlu0 %846
    %v848 = vsel %vm478, %v802, 0.0
    %849 = vadd.xlane.f32.xlu0 %v848
    %v850 = vpop.xlane.xlu0 %849
    %v851 = vld [vmem:[%s10] sm:$0x1]
    %853 = vset.pattern.permute.xlu0 0
    %854 = vperm.xlu0 %853, %v851
    %v855 = vpop.permute.xlu0 %854
    %v856 = vlaneseq
    %v857 = vshrl.u32 %v856, 7
    %v858 = vsub.s32 0, %v857
    %v859 = vrot.slane %v855, %v858
    %v861 = vadd.f32 %v805, %v859
    %v862 = vadd.f32 %v808, %v859
    %v863 = vadd.f32 %v811, %v859
    %v864 = vadd.f32 %v814, %v859
    %v865 = vadd.f32 %v817, %v859
    %v866 = vadd.f32 %v820, %v859
    %v867 = vadd.f32 %v823, %v859
    %v868 = vadd.f32 %v826, %v859
    %v869 = vadd.f32 %v829, %v859
    %v870 = vadd.f32 %v832, %v859
    %v871 = vadd.f32 %v835, %v859
    %v872 = vadd.f32 %v838, %v859
    %v873 = vadd.f32 %v841, %v859
    %v874 = vadd.f32 %v844, %v859
    %v875 = vadd.f32 %v847, %v859
    %v876 = vadd.f32 %v850, %v859
    %893 = vset.pattern.permute.xlu0 0
    %894 = vperm.xlu0 %893, %v861
    %v895 = vpop.permute.xlu0 %894
    %896 = vset.pattern.permute.xlu0 0
    %897 = vperm.xlu0 %896, %v862
    %v898 = vpop.permute.xlu0 %897
    %899 = vset.pattern.permute.xlu0 0
    %900 = vperm.xlu0 %899, %v863
    %v901 = vpop.permute.xlu0 %900
    %902 = vset.pattern.permute.xlu0 0
    %903 = vperm.xlu0 %902, %v864
    %v904 = vpop.permute.xlu0 %903
    %905 = vset.pattern.permute.xlu0 0
    %906 = vperm.xlu0 %905, %v865
    %v907 = vpop.permute.xlu0 %906
    %908 = vset.pattern.permute.xlu0 0
    %909 = vperm.xlu0 %908, %v866
    %v910 = vpop.permute.xlu0 %909
    %911 = vset.pattern.permute.xlu0 0
    %912 = vperm.xlu0 %911, %v867
    %v913 = vpop.permute.xlu0 %912
    %914 = vset.pattern.permute.xlu0 0
    %915 = vperm.xlu0 %914, %v868
    %v916 = vpop.permute.xlu0 %915
    %917 = vset.pattern.permute.xlu0 0
    %918 = vperm.xlu0 %917, %v869
    %v919 = vpop.permute.xlu0 %918
    %920 = vset.pattern.permute.xlu0 0
    %921 = vperm.xlu0 %920, %v870
    %v922 = vpop.permute.xlu0 %921
    %923 = vset.pattern.permute.xlu0 0
    %924 = vperm.xlu0 %923, %v871
    %v925 = vpop.permute.xlu0 %924
    %926 = vset.pattern.permute.xlu0 0
    %927 = vperm.xlu0 %926, %v872
    %v928 = vpop.permute.xlu0 %927
    %929 = vset.pattern.permute.xlu0 0
    %930 = vperm.xlu0 %929, %v873
    %v931 = vpop.permute.xlu0 %930
    %932 = vset.pattern.permute.xlu0 0
    %933 = vperm.xlu0 %932, %v874
    %v934 = vpop.permute.xlu0 %933
    %935 = vset.pattern.permute.xlu0 0
    %936 = vperm.xlu0 %935, %v875
    %v937 = vpop.permute.xlu0 %936
    %938 = vset.pattern.permute.xlu0 0
    %939 = vperm.xlu0 %938, %v876
    %v940 = vpop.permute.xlu0 %939
    %v941 = vlaneseq
    %v942 = vand.u32 %v941, 127
    %v943 = vlaneseq
    %v944 = vshrl.u32 %v943, 7
    %v945 = vsub.s32 %v942, %v944
    %v946 = vrot.slane %v895, %v945
    %v947 = vadd.s32 %v942, 4294967288
    %v948 = vlaneseq
    %v949 = vshrl.u32 %v948, 7
    %v950 = vsub.s32 %v947, %v949
    %v951 = vrot.slane %v898, %v950
    %vm952 = vcmask 130112
    %v953 = vsel %vm952, %v951, %v946
    %v954 = vadd.s32 %v942, 4294967280
    %v955 = vlaneseq
    %v956 = vshrl.u32 %v955, 7
    %v957 = vsub.s32 %v954, %v956
    %v958 = vrot.slane %v901, %v957
    %vm959 = vcmask 195712
    %v960 = vsel %vm959, %v958, %v953
    %v961 = vadd.s32 %v942, 4294967272
    %v962 = vlaneseq
    %v963 = vshrl.u32 %v962, 7
    %v964 = vsub.s32 %v961, %v963
    %v965 = vrot.slane %v904, %v964
    %vm966 = vcmask 261312
    %v967 = vsel %vm966, %v965, %v960
    %v968 = vadd.s32 %v942, 4294967264
    %v969 = vlaneseq
    %v970 = vshrl.u32 %v969, 7
    %v971 = vsub.s32 %v968, %v970
    %v972 = vrot.slane %v907, %v971
    %vm973 = vcmask 326912
    %v974 = vsel %vm973, %v972, %v967
    %v975 = vadd.s32 %v942, 4294967256
    %v976 = vlaneseq
    %v977 = vshrl.u32 %v976, 7
    %v978 = vsub.s32 %v975, %v977
    %v979 = vrot.slane %v910, %v978
    %vm980 = vcmask 392512
    %v981 = vsel %vm980, %v979, %v974
    %v982 = vadd.s32 %v942, 4294967248
    %v983 = vlaneseq
    %v984 = vshrl.u32 %v983, 7
    %v985 = vsub.s32 %v982, %v984
    %v986 = vrot.slane %v913, %v985
    %vm987 = vcmask 458112
    %v988 = vsel %vm987, %v986, %v981
    %v989 = vadd.s32 %v942, 4294967240
    %v990 = vlaneseq
    %v991 = vshrl.u32 %v990, 7
    %v992 = vsub.s32 %v989, %v991
    %v993 = vrot.slane %v916, %v992
    %vm994 = vcmask 523712
    %v995 = vsel %vm994, %v993, %v988
    %v996 = vadd.s32 %v942, 4294967232
    %v997 = vlaneseq
    %v998 = vshrl.u32 %v997, 7
    %v999 = vsub.s32 %v996, %v998
    %v1000 = vrot.slane %v919, %v999
    %vm1001 = vcmask 589312
    %v1002 = vsel %vm1001, %v1000, %v995
    %v1003 = vadd.s32 %v942, 4294967224
    %v1004 = vlaneseq
    %v1005 = vshrl.u32 %v1004, 7
    %v1006 = vsub.s32 %v1003, %v1005
    %v1007 = vrot.slane %v922, %v1006
    %vm1008 = vcmask 654912
    %v1009 = vsel %vm1008, %v1007, %v1002
    %v1010 = vadd.s32 %v942, 4294967216
    %v1011 = vlaneseq
    %v1012 = vshrl.u32 %v1011, 7
    %v1013 = vsub.s32 %v1010, %v1012
    %v1014 = vrot.slane %v925, %v1013
    %vm1015 = vcmask 720512
    %v1016 = vsel %vm1015, %v1014, %v1009
    %v1017 = vadd.s32 %v942, 4294967208
    %v1018 = vlaneseq
    %v1019 = vshrl.u32 %v1018, 7
    %v1020 = vsub.s32 %v1017, %v1019
    %v1021 = vrot.slane %v928, %v1020
    %vm1022 = vcmask 786112
    %v1023 = vsel %vm1022, %v1021, %v1016
    %v1024 = vadd.s32 %v942, 4294967200
    %v1025 = vlaneseq
    %v1026 = vshrl.u32 %v1025, 7
    %v1027 = vsub.s32 %v1024, %v1026
    %v1028 = vrot.slane %v931, %v1027
    %vm1029 = vcmask 851712
    %v1030 = vsel %vm1029, %v1028, %v1023
    %v1031 = vadd.s32 %v942, 4294967192
    %v1032 = vlaneseq
    %v1033 = vshrl.u32 %v1032, 7
    %v1034 = vsub.s32 %v1031, %v1033
    %v1035 = vrot.slane %v934, %v1034
    %vm1036 = vcmask 917312
    %v1037 = vsel %vm1036, %v1035, %v1030
    %v1038 = vadd.s32 %v942, 4294967184
    %v1039 = vlaneseq
    %v1040 = vshrl.u32 %v1039, 7
    %v1041 = vsub.s32 %v1038, %v1040
    %v1042 = vrot.slane %v937, %v1041
    %vm1043 = vcmask 982912
    %v1044 = vsel %vm1043, %v1042, %v1037
    %v1045 = vadd.s32 %v942, 4294967176
    %v1046 = vlaneseq
    %v1047 = vshrl.u32 %v1046, 7
    %v1048 = vsub.s32 %v1045, %v1047
    %v1049 = vrot.slane %v940, %v1048
    %vm1050 = vcmask 1048512
    %v1051 = vsel %vm1050, %v1049, %v1044
    %1053 = vst [vmem:[#allocation2] sm:$0x1] %v1051
    %v1054 = vld [vmem:[%s4 + $0x1] sm:$0x1]
    %v1055 = vlaneseq
    %v1056 = vshrl.u32 %v1055, 7
    %v1057 = vsub.s32 0, %v1056
    %v1058 = vrot.slane %v1054, %v1057
    %1060 = vrot.lane.b32.xlu0 %v1058, 32
    %v1061 = vpop.permute.xlu0 %1060
    %v1063 = vadd.f32 %v350, %v1061
    %v1064 = vadd.f32 %v353, %v1061
    %v1065 = vadd.f32 %v358, %v1061
    %v1066 = vadd.f32 %v361, %v1061
    %v1067 = vadd.f32 %v366, %v1061
    %v1068 = vadd.f32 %v369, %v1061
    %v1069 = vadd.f32 %v374, %v1061
    %v1070 = vadd.f32 %v377, %v1061
    %v1071 = vadd.f32 %v382, %v1061
    %v1072 = vadd.f32 %v385, %v1061
    %v1073 = vadd.f32 %v390, %v1061
    %v1074 = vadd.f32 %v393, %v1061
    %v1075 = vadd.f32 %v398, %v1061
    %v1076 = vadd.f32 %v401, %v1061
    %v1077 = vadd.f32 %v406, %v1061
    %v1078 = vadd.f32 %v409, %v1061
    %v1079 = vmax.f32 %v1063, 0.0
    %v1080 = vmax.f32 %v1064, 0.0
    %v1081 = vmax.f32 %v1065, 0.0
    %v1082 = vmax.f32 %v1066, 0.0
    %v1083 = vmax.f32 %v1067, 0.0
    %v1084 = vmax.f32 %v1068, 0.0
    %v1085 = vmax.f32 %v1069, 0.0
    %v1086 = vmax.f32 %v1070, 0.0
    %v1087 = vmax.f32 %v1071, 0.0
    %v1088 = vmax.f32 %v1072, 0.0
    %v1089 = vmax.f32 %v1073, 0.0
    %v1090 = vmax.f32 %v1074, 0.0
    %v1091 = vmax.f32 %v1075, 0.0
    %v1092 = vmax.f32 %v1076, 0.0
    %v1093 = vmax.f32 %v1077, 0.0
    %v1094 = vmax.f32 %v1078, 0.0
    %v1095 = vpack.c.bf16 %v1080, %v1079
    %v1096 = vpack.c.bf16 %v1082, %v1081
    %v1097 = vpack.c.bf16 %v1084, %v1083
    %v1098 = vpack.c.bf16 %v1086, %v1085
    %v1099 = vpack.c.bf16 %v1088, %v1087
    %v1100 = vpack.c.bf16 %v1090, %v1089
    %v1101 = vpack.c.bf16 %v1092, %v1091
    %v1102 = vpack.c.bf16 %v1094, %v1093
    %s1103 = scalar_lea.vmem %s5, 16
    %v1104 = vld [vmem:[%s1103] sm:$0xf]
    %v1105 = vld [vmem:[%s1103 + $0x4] sm:$0xf]
    %v1106 = vld [vmem:[%s1103 + $0x8] sm:$0xf]
    %v1107 = vld [vmem:[%s1103 + $0xc] sm:$0xf]
    %v1108 = vld [vmem:[%s6 + $0x1] sm:$0x1]
    %v1109 = vlaneseq
    %v1110 = vshrl.u32 %v1109, 7
    %v1111 = vsub.s32 0, %v1110
    %v1112 = vrot.slane %v1108, %v1111
    %1121 = vrot.lane.b32.xlu0 %v1095, 96
    %v1122 = vpop.permute.xlu0 %1121
    %1123 = vrot.lane.b32.xlu0 %v1096, 96
    %v1124 = vpop.permute.xlu0 %1123
    %1125 = vrot.lane.b32.xlu0 %v1097, 96
    %v1126 = vpop.permute.xlu0 %1125
    %1127 = vrot.lane.b32.xlu0 %v1098, 96
    %v1128 = vpop.permute.xlu0 %1127
    %1129 = vrot.lane.b32.xlu0 %v1099, 96
    %v1130 = vpop.permute.xlu0 %1129
    %1131 = vrot.lane.b32.xlu0 %v1100, 96
    %v1132 = vpop.permute.xlu0 %1131
    %1133 = vrot.lane.b32.xlu0 %v1101, 96
    %v1134 = vpop.permute.xlu0 %1133
    %1135 = vrot.lane.b32.xlu0 %v1102, 96
    %v1136 = vpop.permute.xlu0 %1135
    %v1141 = vunpack.c.l.b16 %v1104
    %v1142 = vunpack.c.l.b16 %v1105
    %v1143 = vunpack.c.l.b16 %v1106
    %v1144 = vunpack.c.l.b16 %v1107
    %v1145 = vpack.c.b16 %v1142, %v1141
    %v1146 = vpack.c.b16 %v1144, %v1143
    %v1150 = vsel %vm478, %v1122, 0
    %v1153 = vsel %vm478, %v1124, 0
    %v1156 = vsel %vm478, %v1126, 0
    %v1159 = vsel %vm478, %v1128, 0
    %v1162 = vsel %vm478, %v1130, 0
    %v1165 = vsel %vm478, %v1132, 0
    %v1168 = vsel %vm478, %v1134, 0
    %v1171 = vsel %vm478, %v1136, 0
    %1173 = vmatprep.subr.bf16.mxu0 0
    %1174 = vmatpush1.bf16.msra.mxu0 %v1145
    %1175 = vmatprep.subr.bf16.mxu0 0
    %1176 = vmatpush1.bf16.msra.mxu0 %v1146
    %1177 = vmatprep.subr.bf16.mxu0 0
    %1178 = vmatpush1.bf16.msra.mxu0 0
    %1179 = vmatprep.subr.bf16.mxu0 0
    %1180 = vmatpush1.bf16.msra.mxu0 0
    %1181 = vmatprep.subr.bf16.mxu0 0
    %1182 = vmatpush1.bf16.msra.mxu0 0
    %1183 = vmatprep.subr.bf16.mxu0 0
    %1184 = vmatpush1.bf16.msra.mxu0 0
    %1185 = vmatprep.subr.bf16.mxu0 0
    %1186 = vmatpush1.bf16.msra.mxu0 0
    %1187 = vmatprep.subr.bf16.mxu0 0
    %1188 = vmatpush1.bf16.msra.mxu0 0
    %1189 = vmatprep.subr.bf16.mxu0 0
    %1190 = vmatpush1.bf16.msra.mxu0 0
    %1191 = vmatprep.subr.bf16.mxu0 0
    %1192 = vmatpush1.bf16.msra.mxu0 0
    %1193 = vmatprep.subr.bf16.mxu0 0
    %1194 = vmatpush1.bf16.msra.mxu0 0
    %1195 = vmatprep.subr.bf16.mxu0 0
    %1196 = vmatpush1.bf16.msra.mxu0 0
    %1197 = vmatprep.subr.bf16.mxu0 0
    %1198 = vmatpush1.bf16.msra.mxu0 0
    %1199 = vmatprep.subr.bf16.mxu0 0
    %1200 = vmatpush1.bf16.msra.mxu0 0
    %1201 = vmatprep.subr.bf16.mxu0 0
    %1202 = vmatpush1.bf16.msra.mxu0 0
    %1203 = vmatprep.subr.bf16.mxu0 0
    %1204 = vmatpush1.bf16.msra.mxu0 0
    %1205 = vmatprep.mubr.bf16.mxu0 0
    %1206 = vmatmul.mubr.bf16.gmra.mrb[0].mxu0 %v1150
    %v1207 = vpop.f32.mrb[0].mxu0
    %v1208 = vadd.f32 %v1112, %v1207
    %v1209 = vpop.f32.mrb[0].mxu0
    %v1210 = vpop.f32.mrb[0].mxu0
    %v1211 = vadd.f32 %v1112, %v1210
    %v1212 = vpop.f32.mrb[0].mxu0
    %1213 = vmatprep.mubr.bf16.mxu0 0
    %1214 = vmatmul.mubr.bf16.gmra.mrb[0].mxu0 %v1153
    %v1215 = vpop.f32.mrb[0].mxu0
    %v1216 = vadd.f32 %v1112, %v1215
    %v1217 = vpop.f32.mrb[0].mxu0
    %v1218 = vpop.f32.mrb[0].mxu0
    %v1219 = vadd.f32 %v1112, %v1218
    %v1220 = vpop.f32.mrb[0].mxu0
    %1221 = vmatprep.mubr.bf16.mxu0 0
    %1222 = vmatmul.mubr.bf16.gmra.mrb[0].mxu0 %v1156
    %v1223 = vpop.f32.mrb[0].mxu0
    %v1224 = vadd.f32 %v1112, %v1223
    %v1225 = vpop.f32.mrb[0].mxu0
    %v1226 = vpop.f32.mrb[0].mxu0
    %v1227 = vadd.f32 %v1112, %v1226
    %v1228 = vpop.f32.mrb[0].mxu0
    %1229 = vmatprep.mubr.bf16.mxu0 0
    %1230 = vmatmul.mubr.bf16.gmra.mrb[0].mxu0 %v1159
    %v1231 = vpop.f32.mrb[0].mxu0
    %v1232 = vadd.f32 %v1112, %v1231
    %v1233 = vpop.f32.mrb[0].mxu0
    %v1234 = vpop.f32.mrb[0].mxu0
    %v1235 = vadd.f32 %v1112, %v1234
    %v1236 = vpop.f32.mrb[0].mxu0
    %1237 = vmatprep.mubr.bf16.mxu0 0
    %1238 = vmatmul.mubr.bf16.gmra.mrb[0].mxu0 %v1162
    %v1239 = vpop.f32.mrb[0].mxu0
    %v1240 = vadd.f32 %v1112, %v1239
    %v1241 = vpop.f32.mrb[0].mxu0
    %v1242 = vpop.f32.mrb[0].mxu0
    %v1243 = vadd.f32 %v1112, %v1242
    %v1244 = vpop.f32.mrb[0].mxu0
    %1245 = vmatprep.mubr.bf16.mxu0 0
    %1246 = vmatmul.mubr.bf16.gmra.mrb[0].mxu0 %v1165
    %v1247 = vpop.f32.mrb[0].mxu0
    %v1248 = vadd.f32 %v1112, %v1247
    %v1249 = vpop.f32.mrb[0].mxu0
    %v1250 = vpop.f32.mrb[0].mxu0
    %v1251 = vadd.f32 %v1112, %v1250
    %v1252 = vpop.f32.mrb[0].mxu0
    %1253 = vmatprep.mubr.bf16.mxu0 0
    %1254 = vmatmul.mubr.bf16.gmra.mrb[0].mxu0 %v1168
    %v1255 = vpop.f32.mrb[0].mxu0
    %v1256 = vadd.f32 %v1112, %v1255
    %v1257 = vpop.f32.mrb[0].mxu0
    %v1258 = vpop.f32.mrb[0].mxu0
    %v1259 = vadd.f32 %v1112, %v1258
    %v1260 = vpop.f32.mrb[0].mxu0
    %1261 = vmatprep.mubr.bf16.mxu0 0
    %1262 = vmatmul.mubr.bf16.gmra.mrb[0].mxu0 %v1171
    %v1263 = vpop.f32.mrb[0].mxu0
    %v1264 = vadd.f32 %v1112, %v1263
    %v1265 = vpop.f32.mrb[0].mxu0
    %v1266 = vpop.f32.mrb[0].mxu0
    %v1267 = vadd.f32 %v1112, %v1266
    %v1268 = vpop.f32.mrb[0].mxu0
    %1269 = vdwg.mxu0
    %v1270 = vmax.f32 %v1208, 0.0
    %v1271 = vmax.f32 %v1211, 0.0
    %v1272 = vmax.f32 %v1216, 0.0
    %v1273 = vmax.f32 %v1219, 0.0
    %v1274 = vmax.f32 %v1224, 0.0
    %v1275 = vmax.f32 %v1227, 0.0
    %v1276 = vmax.f32 %v1232, 0.0
    %v1277 = vmax.f32 %v1235, 0.0
    %v1278 = vmax.f32 %v1240, 0.0
    %v1279 = vmax.f32 %v1243, 0.0
    %v1280 = vmax.f32 %v1248, 0.0
    %v1281 = vmax.f32 %v1251, 0.0
    %v1282 = vmax.f32 %v1256, 0.0
    %v1283 = vmax.f32 %v1259, 0.0
    %v1284 = vmax.f32 %v1264, 0.0
    %v1285 = vmax.f32 %v1267, 0.0
    %v1286 = vpack.c.bf16 %v1271, %v1270
    %v1287 = vpack.c.bf16 %v1273, %v1272
    %v1288 = vpack.c.bf16 %v1275, %v1274
    %v1289 = vpack.c.bf16 %v1277, %v1276
    %v1290 = vpack.c.bf16 %v1279, %v1278
    %v1291 = vpack.c.bf16 %v1281, %v1280
    %v1292 = vpack.c.bf16 %v1283, %v1282
    %v1293 = vpack.c.bf16 %v1285, %v1284
    %s1294 = scalar_lea.vmem %s7, 16
    %v1295 = vld [vmem:[%s1294] sm:$0xf]
    %v1296 = vld [vmem:[%s1294 + $0x4] sm:$0xf]
    %v1297 = vld [vmem:[%s1294 + $0x8] sm:$0xf]
    %v1298 = vld [vmem:[%s1294 + $0xc] sm:$0xf]
    %v1299 = vld [vmem:[%s8 + $0x1] sm:$0x1]
    %v1300 = vlaneseq
    %v1301 = vshrl.u32 %v1300, 7
    %v1302 = vsub.s32 0, %v1301
    %v1303 = vrot.slane %v1299, %v1302
    %v1308 = vunpack.c.l.b16 %v1295
    %v1309 = vunpack.c.l.b16 %v1296
    %v1310 = vunpack.c.l.b16 %v1297
    %v1311 = vunpack.c.l.b16 %v1298
    %v1312 = vpack.c.b16 %v1309, %v1308
    %v1313 = vpack.c.b16 %v1311, %v1310
    %v1317 = vsel %vm478, %v1286, 0
    %v1320 = vsel %vm478, %v1287, 0
    %v1323 = vsel %vm478, %v1288, 0
    %v1326 = vsel %vm478, %v1289, 0
    %v1329 = vsel %vm478, %v1290, 0
    %v1332 = vsel %vm478, %v1291, 0
    %v1335 = vsel %vm478, %v1292, 0
    %v1338 = vsel %vm478, %v1293, 0
    %1340 = vmatprep.subr.bf16.mxu0 0
    %1341 = vmatpush1.bf16.msra.mxu0 %v1312
    %1342 = vmatprep.subr.bf16.mxu0 0
    %1343 = vmatpush1.bf16.msra.mxu0 %v1313
    %1344 = vmatprep.subr.bf16.mxu0 0
    %1345 = vmatpush1.bf16.msra.mxu0 0
    %1346 = vmatprep.subr.bf16.mxu0 0
    %1347 = vmatpush1.bf16.msra.mxu0 0
    %1348 = vmatprep.subr.bf16.mxu0 0
    %1349 = vmatpush1.bf16.msra.mxu0 0
    %1350 = vmatprep.subr.bf16.mxu0 0
    %1351 = vmatpush1.bf16.msra.mxu0 0
    %1352 = vmatprep.subr.bf16.mxu0 0
    %1353 = vmatpush1.bf16.msra.mxu0 0
    %1354 = vmatprep.subr.bf16.mxu0 0
    %1355 = vmatpush1.bf16.msra.mxu0 0
    %1356 = vmatprep.subr.bf16.mxu0 0
    %1357 = vmatpush1.bf16.msra.mxu0 0
    %1358 = vmatprep.subr.bf16.mxu0 0
    %1359 = vmatpush1.bf16.msra.mxu0 0
    %1360 = vmatprep.subr.bf16.mxu0 0
    %1361 = vmatpush1.bf16.msra.mxu0 0
    %1362 = vmatprep.subr.bf16.mxu0 0
    %1363 = vmatpush1.bf16.msra.mxu0 0
    %1364 = vmatprep.subr.bf16.mxu0 0
    %1365 = vmatpush1.bf16.msra.mxu0 0
    %1366 = vmatprep.subr.bf16.mxu0 0
    %1367 = vmatpush1.bf16.msra.mxu0 0
    %1368 = vmatprep.subr.bf16.mxu0 0
    %1369 = vmatpush1.bf16.msra.mxu0 0
    %1370 = vmatprep.subr.bf16.mxu0 0
    %1371 = vmatpush1.bf16.msra.mxu0 0
    %1372 = vmatprep.mubr.bf16.mxu0 0
    %1373 = vmatmul.mubr.bf16.gmra.mrb[0].mxu0 %v1317
    %v1374 = vpop.f32.mrb[0].mxu0
    %v1375 = vadd.f32 %v1303, %v1374
    %v1376 = vpop.f32.mrb[0].mxu0
    %v1377 = vpop.f32.mrb[0].mxu0
    %v1378 = vadd.f32 %v1303, %v1377
    %v1379 = vpop.f32.mrb[0].mxu0
    %1380 = vmatprep.mubr.bf16.mxu0 0
    %1381 = vmatmul.mubr.bf16.gmra.mrb[0].mxu0 %v1320
    %v1382 = vpop.f32.mrb[0].mxu0
    %v1383 = vadd.f32 %v1303, %v1382
    %v1384 = vpop.f32.mrb[0].mxu0
    %v1385 = vpop.f32.mrb[0].mxu0
    %v1386 = vadd.f32 %v1303, %v1385
    %v1387 = vpop.f32.mrb[0].mxu0
    %1388 = vmatprep.mubr.bf16.mxu0 0
    %1389 = vmatmul.mubr.bf16.gmra.mrb[0].mxu0 %v1323
    %v1390 = vpop.f32.mrb[0].mxu0
    %v1391 = vadd.f32 %v1303, %v1390
    %v1392 = vpop.f32.mrb[0].mxu0
    %v1393 = vpop.f32.mrb[0].mxu0
    %v1394 = vadd.f32 %v1303, %v1393
    %v1395 = vpop.f32.mrb[0].mxu0
    %1396 = vmatprep.mubr.bf16.mxu0 0
    %1397 = vmatmul.mubr.bf16.gmra.mrb[0].mxu0 %v1326
    %v1398 = vpop.f32.mrb[0].mxu0
    %v1399 = vadd.f32 %v1303, %v1398
    %v1400 = vpop.f32.mrb[0].mxu0
    %v1401 = vpop.f32.mrb[0].mxu0
    %v1402 = vadd.f32 %v1303, %v1401
    %v1403 = vpop.f32.mrb[0].mxu0
    %1404 = vmatprep.mubr.bf16.mxu0 0
    %1405 = vmatmul.mubr.bf16.gmra.mrb[0].mxu0 %v1329
    %v1406 = vpop.f32.mrb[0].mxu0
    %v1407 = vadd.f32 %v1303, %v1406
    %v1408 = vpop.f32.mrb[0].mxu0
    %v1409 = vpop.f32.mrb[0].mxu0
    %v1410 = vadd.f32 %v1303, %v1409
    %v1411 = vpop.f32.mrb[0].mxu0
    %1412 = vmatprep.mubr.bf16.mxu0 0
    %1413 = vmatmul.mubr.bf16.gmra.mrb[0].mxu0 %v1332
    %v1414 = vpop.f32.mrb[0].mxu0
    %v1415 = vadd.f32 %v1303, %v1414
    %v1416 = vpop.f32.mrb[0].mxu0
    %v1417 = vpop.f32.mrb[0].mxu0
    %v1418 = vadd.f32 %v1303, %v1417
    %v1419 = vpop.f32.mrb[0].mxu0
    %1420 = vmatprep.mubr.bf16.mxu0 0
    %1421 = vmatmul.mubr.bf16.gmra.mrb[0].mxu0 %v1335
    %v1422 = vpop.f32.mrb[0].mxu0
    %v1423 = vadd.f32 %v1303, %v1422
    %v1424 = vpop.f32.mrb[0].mxu0
    %v1425 = vpop.f32.mrb[0].mxu0
    %v1426 = vadd.f32 %v1303, %v1425
    %v1427 = vpop.f32.mrb[0].mxu0
    %1428 = vmatprep.mubr.bf16.mxu0 0
    %1429 = vmatmul.mubr.bf16.gmra.mrb[0].mxu0 %v1338
    %v1430 = vpop.f32.mrb[0].mxu0
    %v1431 = vadd.f32 %v1303, %v1430
    %v1432 = vpop.f32.mrb[0].mxu0
    %v1433 = vpop.f32.mrb[0].mxu0
    %v1434 = vadd.f32 %v1303, %v1433
    %v1435 = vpop.f32.mrb[0].mxu0
    %1436 = vdwg.mxu0
    %v1437 = vmax.f32 %v1375, 0.0
    %v1438 = vmax.f32 %v1378, 0.0
    %v1439 = vmax.f32 %v1383, 0.0
    %v1440 = vmax.f32 %v1386, 0.0
    %v1441 = vmax.f32 %v1391, 0.0
    %v1442 = vmax.f32 %v1394, 0.0
    %v1443 = vmax.f32 %v1399, 0.0
    %v1444 = vmax.f32 %v1402, 0.0
    %v1445 = vmax.f32 %v1407, 0.0
    %v1446 = vmax.f32 %v1410, 0.0
    %v1447 = vmax.f32 %v1415, 0.0
    %v1448 = vmax.f32 %v1418, 0.0
    %v1449 = vmax.f32 %v1423, 0.0
    %v1450 = vmax.f32 %v1426, 0.0
    %v1451 = vmax.f32 %v1431, 0.0
    %v1452 = vmax.f32 %v1434, 0.0
    %v1453 = vld [vmem:[%s9 + $0x1] sm:$0x1]
    %v1454 = vlaneseq
    %v1455 = vshrl.u32 %v1454, 7
    %v1456 = vsub.s32 0, %v1455
    %v1457 = vrot.slane %v1453, %v1456
    %v1458 = vmul.f32 %v1437, %v1457
    %v1459 = vmul.f32 %v1438, %v1457
    %v1460 = vmul.f32 %v1439, %v1457
    %v1461 = vmul.f32 %v1440, %v1457
    %v1462 = vmul.f32 %v1441, %v1457
    %v1463 = vmul.f32 %v1442, %v1457
    %v1464 = vmul.f32 %v1443, %v1457
    %v1465 = vmul.f32 %v1444, %v1457
    %v1466 = vmul.f32 %v1445, %v1457
    %v1467 = vmul.f32 %v1446, %v1457
    %v1468 = vmul.f32 %v1447, %v1457
    %v1469 = vmul.f32 %v1448, %v1457
    %v1470 = vmul.f32 %v1449, %v1457
    %v1471 = vmul.f32 %v1450, %v1457
    %v1472 = vmul.f32 %v1451, %v1457
    %v1473 = vmul.f32 %v1452, %v1457
    %v1474 = vsel %vm478, %v1458, 0.0
    %1475 = vadd.xlane.f32.xlu0 %v1474
    %v1476 = vpop.xlane.xlu0 %1475
    %v1477 = vsel %vm478, %v1459, 0.0
    %1478 = vadd.xlane.f32.xlu0 %v1477
    %v1479 = vpop.xlane.xlu0 %1478
    %v1480 = vsel %vm478, %v1460, 0.0
    %1481 = vadd.xlane.f32.xlu0 %v1480
    %v1482 = vpop.xlane.xlu0 %1481
    %v1483 = vsel %vm478, %v1461, 0.0
    %1484 = vadd.xlane.f32.xlu0 %v1483
    %v1485 = vpop.xlane.xlu0 %1484
    %v1486 = vsel %vm478, %v1462, 0.0
    %1487 = vadd.xlane.f32.xlu0 %v1486
    %v1488 = vpop.xlane.xlu0 %1487
    %v1489 = vsel %vm478, %v1463, 0.0
    %1490 = vadd.xlane.f32.xlu0 %v1489
    %v1491 = vpop.xlane.xlu0 %1490
    %v1492 = vsel %vm478, %v1464, 0.0
    %1493 = vadd.xlane.f32.xlu0 %v1492
    %v1494 = vpop.xlane.xlu0 %1493
    %v1495 = vsel %vm478, %v1465, 0.0
    %1496 = vadd.xlane.f32.xlu0 %v1495
    %v1497 = vpop.xlane.xlu0 %1496
    %v1498 = vsel %vm478, %v1466, 0.0
    %1499 = vadd.xlane.f32.xlu0 %v1498
    %v1500 = vpop.xlane.xlu0 %1499
    %v1501 = vsel %vm478, %v1467, 0.0
    %1502 = vadd.xlane.f32.xlu0 %v1501
    %v1503 = vpop.xlane.xlu0 %1502
    %v1504 = vsel %vm478, %v1468, 0.0
    %1505 = vadd.xlane.f32.xlu0 %v1504
    %v1506 = vpop.xlane.xlu0 %1505
    %v1507 = vsel %vm478, %v1469, 0.0
    %1508 = vadd.xlane.f32.xlu0 %v1507
    %v1509 = vpop.xlane.xlu0 %1508
    %v1510 = vsel %vm478, %v1470, 0.0
    %1511 = vadd.xlane.f32.xlu0 %v1510
    %v1512 = vpop.xlane.xlu0 %1511
    %v1513 = vsel %vm478, %v1471, 0.0
    %1514 = vadd.xlane.f32.xlu0 %v1513
    %v1515 = vpop.xlane.xlu0 %1514
    %v1516 = vsel %vm478, %v1472, 0.0
    %1517 = vadd.xlane.f32.xlu0 %v1516
    %v1518 = vpop.xlane.xlu0 %1517
    %v1519 = vsel %vm478, %v1473, 0.0
    %1520 = vadd.xlane.f32.xlu0 %v1519
    %v1521 = vpop.xlane.xlu0 %1520
    %v1522 = vld [vmem:[%s10 + $0x1] sm:$0x1]
    %1524 = vset.pattern.permute.xlu0 0
    %1525 = vperm.xlu0 %1524, %v1522
    %v1526 = vpop.permute.xlu0 %1525
    %v1527 = vlaneseq
    %v1528 = vshrl.u32 %v1527, 7
    %v1529 = vsub.s32 0, %v1528
    %v1530 = vrot.slane %v1526, %v1529
    %v1532 = vadd.f32 %v1476, %v1530
    %v1533 = vadd.f32 %v1479, %v1530
    %v1534 = vadd.f32 %v1482, %v1530
    %v1535 = vadd.f32 %v1485, %v1530
    %v1536 = vadd.f32 %v1488, %v1530
    %v1537 = vadd.f32 %v1491, %v1530
    %v1538 = vadd.f32 %v1494, %v1530
    %v1539 = vadd.f32 %v1497, %v1530
    %v1540 = vadd.f32 %v1500, %v1530
    %v1541 = vadd.f32 %v1503, %v1530
    %v1542 = vadd.f32 %v1506, %v1530
    %v1543 = vadd.f32 %v1509, %v1530
    %v1544 = vadd.f32 %v1512, %v1530
    %v1545 = vadd.f32 %v1515, %v1530
    %v1546 = vadd.f32 %v1518, %v1530
    %v1547 = vadd.f32 %v1521, %v1530
    %1564 = vset.pattern.permute.xlu0 0
    %1565 = vperm.xlu0 %1564, %v1532
    %v1566 = vpop.permute.xlu0 %1565
    %1567 = vset.pattern.permute.xlu0 0
    %1568 = vperm.xlu0 %1567, %v1533
    %v1569 = vpop.permute.xlu0 %1568
    %1570 = vset.pattern.permute.xlu0 0
    %1571 = vperm.xlu0 %1570, %v1534
    %v1572 = vpop.permute.xlu0 %1571
    %1573 = vset.pattern.permute.xlu0 0
    %1574 = vperm.xlu0 %1573, %v1535
    %v1575 = vpop.permute.xlu0 %1574
    %1576 = vset.pattern.permute.xlu0 0
    %1577 = vperm.xlu0 %1576, %v1536
    %v1578 = vpop.permute.xlu0 %1577
    %1579 = vset.pattern.permute.xlu0 0
    %1580 = vperm.xlu0 %1579, %v1537
    %v1581 = vpop.permute.xlu0 %1580
    %1582 = vset.pattern.permute.xlu0 0
    %1583 = vperm.xlu0 %1582, %v1538
    %v1584 = vpop.permute.xlu0 %1583
    %1585 = vset.pattern.permute.xlu0 0
    %1586 = vperm.xlu0 %1585, %v1539
    %v1587 = vpop.permute.xlu0 %1586
    %1588 = vset.pattern.permute.xlu0 0
    %1589 = vperm.xlu0 %1588, %v1540
    %v1590 = vpop.permute.xlu0 %1589
    %1591 = vset.pattern.permute.xlu0 0
    %1592 = vperm.xlu0 %1591, %v1541
    %v1593 = vpop.permute.xlu0 %1592
    %1594 = vset.pattern.permute.xlu0 0
    %1595 = vperm.xlu0 %1594, %v1542
    %v1596 = vpop.permute.xlu0 %1595
    %1597 = vset.pattern.permute.xlu0 0
    %1598 = vperm.xlu0 %1597, %v1543
    %v1599 = vpop.permute.xlu0 %1598
    %1600 = vset.pattern.permute.xlu0 0
    %1601 = vperm.xlu0 %1600, %v1544
    %v1602 = vpop.permute.xlu0 %1601
    %1603 = vset.pattern.permute.xlu0 0
    %1604 = vperm.xlu0 %1603, %v1545
    %v1605 = vpop.permute.xlu0 %1604
    %1606 = vset.pattern.permute.xlu0 0
    %1607 = vperm.xlu0 %1606, %v1546
    %v1608 = vpop.permute.xlu0 %1607
    %1609 = vset.pattern.permute.xlu0 0
    %1610 = vperm.xlu0 %1609, %v1547
    %v1611 = vpop.permute.xlu0 %1610
    %v1612 = vlaneseq
    %v1613 = vshrl.u32 %v1612, 7
    %v1614 = vsub.s32 %v942, %v1613
    %v1615 = vrot.slane %v1566, %v1614
    %v1616 = vlaneseq
    %v1617 = vshrl.u32 %v1616, 7
    %v1618 = vsub.s32 %v947, %v1617
    %v1619 = vrot.slane %v1569, %v1618
    %v1620 = vsel %vm952, %v1619, %v1615
    %v1621 = vlaneseq
    %v1622 = vshrl.u32 %v1621, 7
    %v1623 = vsub.s32 %v954, %v1622
    %v1624 = vrot.slane %v1572, %v1623
    %v1625 = vsel %vm959, %v1624, %v1620
    %v1626 = vlaneseq
    %v1627 = vshrl.u32 %v1626, 7
    %v1628 = vsub.s32 %v961, %v1627
    %v1629 = vrot.slane %v1575, %v1628
    %v1630 = vsel %vm966, %v1629, %v1625
    %v1631 = vlaneseq
    %v1632 = vshrl.u32 %v1631, 7
    %v1633 = vsub.s32 %v968, %v1632
    %v1634 = vrot.slane %v1578, %v1633
    %v1635 = vsel %vm973, %v1634, %v1630
    %v1636 = vlaneseq
    %v1637 = vshrl.u32 %v1636, 7
    %v1638 = vsub.s32 %v975, %v1637
    %v1639 = vrot.slane %v1581, %v1638
    %v1640 = vsel %vm980, %v1639, %v1635
    %v1641 = vlaneseq
    %v1642 = vshrl.u32 %v1641, 7
    %v1643 = vsub.s32 %v982, %v1642
    %v1644 = vrot.slane %v1584, %v1643
    %v1645 = vsel %vm987, %v1644, %v1640
    %v1646 = vlaneseq
    %v1647 = vshrl.u32 %v1646, 7
    %v1648 = vsub.s32 %v989, %v1647
    %v1649 = vrot.slane %v1587, %v1648
    %v1650 = vsel %vm994, %v1649, %v1645
    %v1651 = vlaneseq
    %v1652 = vshrl.u32 %v1651, 7
    %v1653 = vsub.s32 %v996, %v1652
    %v1654 = vrot.slane %v1590, %v1653
    %v1655 = vsel %vm1001, %v1654, %v1650
    %v1656 = vlaneseq
    %v1657 = vshrl.u32 %v1656, 7
    %v1658 = vsub.s32 %v1003, %v1657
    %v1659 = vrot.slane %v1593, %v1658
    %v1660 = vsel %vm1008, %v1659, %v1655
    %v1661 = vlaneseq
    %v1662 = vshrl.u32 %v1661, 7
    %v1663 = vsub.s32 %v1010, %v1662
    %v1664 = vrot.slane %v1596, %v1663
    %v1665 = vsel %vm1015, %v1664, %v1660
    %v1666 = vlaneseq
    %v1667 = vshrl.u32 %v1666, 7
    %v1668 = vsub.s32 %v1017, %v1667
    %v1669 = vrot.slane %v1599, %v1668
    %v1670 = vsel %vm1022, %v1669, %v1665
    %v1671 = vlaneseq
    %v1672 = vshrl.u32 %v1671, 7
    %v1673 = vsub.s32 %v1024, %v1672
    %v1674 = vrot.slane %v1602, %v1673
    %v1675 = vsel %vm1029, %v1674, %v1670
    %v1676 = vlaneseq
    %v1677 = vshrl.u32 %v1676, 7
    %v1678 = vsub.s32 %v1031, %v1677
    %v1679 = vrot.slane %v1605, %v1678
    %v1680 = vsel %vm1036, %v1679, %v1675
    %v1681 = vlaneseq
    %v1682 = vshrl.u32 %v1681, 7
    %v1683 = vsub.s32 %v1038, %v1682
    %v1684 = vrot.slane %v1608, %v1683
    %v1685 = vsel %vm1043, %v1684, %v1680
    %v1686 = vlaneseq
    %v1687 = vshrl.u32 %v1686, 7
    %v1688 = vsub.s32 %v1045, %v1687
    %v1689 = vrot.slane %v1611, %v1688
    %v1690 = vsel %vm1050, %v1689, %v1685
    %1692 = vst [vmem:[#allocation2 + $0x1] sm:$0x1] %v1690
    %v1693 = vld [vmem:[%s4 + $0x2] sm:$0x1]
    %v1694 = vlaneseq
    %v1695 = vshrl.u32 %v1694, 7
    %v1696 = vsub.s32 0, %v1695
    %v1697 = vrot.slane %v1693, %v1696
    %1699 = vrot.lane.b32.xlu0 %v1697, 64
    %v1700 = vpop.permute.xlu0 %1699
    %v1702 = vadd.f32 %v350, %v1700
    %v1703 = vadd.f32 %v353, %v1700
    %v1704 = vadd.f32 %v358, %v1700
    %v1705 = vadd.f32 %v361, %v1700
    %v1706 = vadd.f32 %v366, %v1700
    %v1707 = vadd.f32 %v369, %v1700
    %v1708 = vadd.f32 %v374, %v1700
    %v1709 = vadd.f32 %v377, %v1700
    %v1710 = vadd.f32 %v382, %v1700
    %v1711 = vadd.f32 %v385, %v1700
    %v1712 = vadd.f32 %v390, %v1700
    %v1713 = vadd.f32 %v393, %v1700
    %v1714 = vadd.f32 %v398, %v1700
    %v1715 = vadd.f32 %v401, %v1700
    %v1716 = vadd.f32 %v406, %v1700
    %v1717 = vadd.f32 %v409, %v1700
    %v1718 = vmax.f32 %v1702, 0.0
    %v1719 = vmax.f32 %v1703, 0.0
    %v1720 = vmax.f32 %v1704, 0.0
    %v1721 = vmax.f32 %v1705, 0.0
    %v1722 = vmax.f32 %v1706, 0.0
    %v1723 = vmax.f32 %v1707, 0.0
    %v1724 = vmax.f32 %v1708, 0.0
    %v1725 = vmax.f32 %v1709, 0.0
    %v1726 = vmax.f32 %v1710, 0.0
    %v1727 = vmax.f32 %v1711, 0.0
    %v1728 = vmax.f32 %v1712, 0.0
    %v1729 = vmax.f32 %v1713, 0.0
    %v1730 = vmax.f32 %v1714, 0.0
    %v1731 = vmax.f32 %v1715, 0.0
    %v1732 = vmax.f32 %v1716, 0.0
    %v1733 = vmax.f32 %v1717, 0.0
    %v1734 = vpack.c.bf16 %v1719, %v1718
    %v1735 = vpack.c.bf16 %v1721, %v1720
    %v1736 = vpack.c.bf16 %v1723, %v1722
    %v1737 = vpack.c.bf16 %v1725, %v1724
    %v1738 = vpack.c.bf16 %v1727, %v1726
    %v1739 = vpack.c.bf16 %v1729, %v1728
    %v1740 = vpack.c.bf16 %v1731, %v1730
    %v1741 = vpack.c.bf16 %v1733, %v1732
    %s1742 = scalar_lea.vmem %s5, 32
    %v1743 = vld [vmem:[%s1742] sm:$0xf]
    %v1744 = vld [vmem:[%s1742 + $0x4] sm:$0xf]
    %v1745 = vld [vmem:[%s1742 + $0x8] sm:$0xf]
    %v1746 = vld [vmem:[%s1742 + $0xc] sm:$0xf]
    %v1747 = vld [vmem:[%s6 + $0x2] sm:$0x1]
    %v1748 = vlaneseq
    %v1749 = vshrl.u32 %v1748, 7
    %v1750 = vsub.s32 0, %v1749
    %v1751 = vrot.slane %v1747, %v1750
    %1760 = vrot.lane.b32.xlu0 %v1734, 64
    %v1761 = vpop.permute.xlu0 %1760
    %1762 = vrot.lane.b32.xlu0 %v1735, 64
    %v1763 = vpop.permute.xlu0 %1762
    %1764 = vrot.lane.b32.xlu0 %v1736, 64
    %v1765 = vpop.permute.xlu0 %1764
    %1766 = vrot.lane.b32.xlu0 %v1737, 64
    %v1767 = vpop.permute.xlu0 %1766
    %1768 = vrot.lane.b32.xlu0 %v1738, 64
    %v1769 = vpop.permute.xlu0 %1768
    %1770 = vrot.lane.b32.xlu0 %v1739, 64
    %v1771 = vpop.permute.xlu0 %1770
    %1772 = vrot.lane.b32.xlu0 %v1740, 64
    %v1773 = vpop.permute.xlu0 %1772
    %1774 = vrot.lane.b32.xlu0 %v1741, 64
    %v1775 = vpop.permute.xlu0 %1774
    %v1780 = vunpack.c.l.b16 %v1743
    %v1781 = vunpack.c.l.b16 %v1744
    %v1782 = vunpack.c.l.b16 %v1745
    %v1783 = vunpack.c.l.b16 %v1746
    %v1784 = vpack.c.b16 %v1781, %v1780
    %v1785 = vpack.c.b16 %v1783, %v1782
    %v1789 = vsel %vm478, %v1761, 0
    %v1792 = vsel %vm478, %v1763, 0
    %v1795 = vsel %vm478, %v1765, 0
    %v1798 = vsel %vm478, %v1767, 0
    %v1801 = vsel %vm478, %v1769, 0
    %v1804 = vsel %vm478, %v1771, 0
    %v1807 = vsel %vm478, %v1773, 0
    %v1810 = vsel %vm478, %v1775, 0
    %1812 = vmatprep.subr.bf16.mxu0 0
    %1813 = vmatpush1.bf16.msra.mxu0 %v1784
    %1814 = vmatprep.subr.bf16.mxu0 0
    %1815 = vmatpush1.bf16.msra.mxu0 %v1785
    %1816 = vmatprep.subr.bf16.mxu0 0
    %1817 = vmatpush1.bf16.msra.mxu0 0
    %1818 = vmatprep.subr.bf16.mxu0 0
    %1819 = vmatpush1.bf16.msra.mxu0 0
    %1820 = vmatprep.subr.bf16.mxu0 0
    %1821 = vmatpush1.bf16.msra.mxu0 0
    %1822 = vmatprep.subr.bf16.mxu0 0
    %1823 = vmatpush1.bf16.msra.mxu0 0
    %1824 = vmatprep.subr.bf16.mxu0 0
    %1825 = vmatpush1.bf16.msra.mxu0 0
    %1826 = vmatprep.subr.bf16.mxu0 0
    %1827 = vmatpush1.bf16.msra.mxu0 0
    %1828 = vmatprep.subr.bf16.mxu0 0
    %1829 = vmatpush1.bf16.msra.mxu0 0
    %1830 = vmatprep.subr.bf16.mxu0 0
    %1831 = vmatpush1.bf16.msra.mxu0 0
    %1832 = vmatprep.subr.bf16.mxu0 0
    %1833 = vmatpush1.bf16.msra.mxu0 0
    %1834 = vmatprep.subr.bf16.mxu0 0
    %1835 = vmatpush1.bf16.msra.mxu0 0
    %1836 = vmatprep.subr.bf16.mxu0 0
    %1837 = vmatpush1.bf16.msra.mxu0 0
    %1838 = vmatprep.subr.bf16.mxu0 0
    %1839 = vmatpush1.bf16.msra.mxu0 0
    %1840 = vmatprep.subr.bf16.mxu0 0
    %1841 = vmatpush1.bf16.msra.mxu0 0
    %1842 = vmatprep.subr.bf16.mxu0 0
    %1843 = vmatpush1.bf16.msra.mxu0 0
    %1844 = vmatprep.mubr.bf16.mxu0 0
    %1845 = vmatmul.mubr.bf16.gmra.mrb[0].mxu0 %v1789
    %v1846 = vpop.f32.mrb[0].mxu0
    %v1847 = vadd.f32 %v1751, %v1846
    %v1848 = vpop.f32.mrb[0].mxu0
    %v1849 = vpop.f32.mrb[0].mxu0
    %v1850 = vadd.f32 %v1751, %v1849
    %v1851 = vpop.f32.mrb[0].mxu0
    %1852 = vmatprep.mubr.bf16.mxu0 0
    %1853 = vmatmul.mubr.bf16.gmra.mrb[0].mxu0 %v1792
    %v1854 = vpop.f32.mrb[0].mxu0
    %v1855 = vadd.f32 %v1751, %v1854
    %v1856 = vpop.f32.mrb[0].mxu0
    %v1857 = vpop.f32.mrb[0].mxu0
    %v1858 = vadd.f32 %v1751, %v1857
    %v1859 = vpop.f32.mrb[0].mxu0
    %1860 = vmatprep.mubr.bf16.mxu0 0
    %1861 = vmatmul.mubr.bf16.gmra.mrb[0].mxu0 %v1795
    %v1862 = vpop.f32.mrb[0].mxu0
    %v1863 = vadd.f32 %v1751, %v1862
    %v1864 = vpop.f32.mrb[0].mxu0
    %v1865 = vpop.f32.mrb[0].mxu0
    %v1866 = vadd.f32 %v1751, %v1865
    %v1867 = vpop.f32.mrb[0].mxu0
    %1868 = vmatprep.mubr.bf16.mxu0 0
    %1869 = vmatmul.mubr.bf16.gmra.mrb[0].mxu0 %v1798
    %v1870 = vpop.f32.mrb[0].mxu0
    %v1871 = vadd.f32 %v1751, %v1870
    %v1872 = vpop.f32.mrb[0].mxu0
    %v1873 = vpop.f32.mrb[0].mxu0
    %v1874 = vadd.f32 %v1751, %v1873
    %v1875 = vpop.f32.mrb[0].mxu0
    %1876 = vmatprep.mubr.bf16.mxu0 0
    %1877 = vmatmul.mubr.bf16.gmra.mrb[0].mxu0 %v1801
    %v1878 = vpop.f32.mrb[0].mxu0
    %v1879 = vadd.f32 %v1751, %v1878
    %v1880 = vpop.f32.mrb[0].mxu0
    %v1881 = vpop.f32.mrb[0].mxu0
    %v1882 = vadd.f32 %v1751, %v1881
    %v1883 = vpop.f32.mrb[0].mxu0
    %1884 = vmatprep.mubr.bf16.mxu0 0
    %1885 = vmatmul.mubr.bf16.gmra.mrb[0].mxu0 %v1804
    %v1886 = vpop.f32.mrb[0].mxu0
    %v1887 = vadd.f32 %v1751, %v1886
    %v1888 = vpop.f32.mrb[0].mxu0
    %v1889 = vpop.f32.mrb[0].mxu0
    %v1890 = vadd.f32 %v1751, %v1889
    %v1891 = vpop.f32.mrb[0].mxu0
    %1892 = vmatprep.mubr.bf16.mxu0 0
    %1893 = vmatmul.mubr.bf16.gmra.mrb[0].mxu0 %v1807
    %v1894 = vpop.f32.mrb[0].mxu0
    %v1895 = vadd.f32 %v1751, %v1894
    %v1896 = vpop.f32.mrb[0].mxu0
    %v1897 = vpop.f32.mrb[0].mxu0
    %v1898 = vadd.f32 %v1751, %v1897
    %v1899 = vpop.f32.mrb[0].mxu0
    %1900 = vmatprep.mubr.bf16.mxu0 0
    %1901 = vmatmul.mubr.bf16.gmra.mrb[0].mxu0 %v1810
    %v1902 = vpop.f32.mrb[0].mxu0
    %v1903 = vadd.f32 %v1751, %v1902
    %v1904 = vpop.f32.mrb[0].mxu0
    %v1905 = vpop.f32.mrb[0].mxu0
    %v1906 = vadd.f32 %v1751, %v1905
    %v1907 = vpop.f32.mrb[0].mxu0
    %1908 = vdwg.mxu0
    %v1909 = vmax.f32 %v1847, 0.0
    %v1910 = vmax.f32 %v1850, 0.0
    %v1911 = vmax.f32 %v1855, 0.0
    %v1912 = vmax.f32 %v1858, 0.0
    %v1913 = vmax.f32 %v1863, 0.0
    %v1914 = vmax.f32 %v1866, 0.0
    %v1915 = vmax.f32 %v1871, 0.0
    %v1916 = vmax.f32 %v1874, 0.0
    %v1917 = vmax.f32 %v1879, 0.0
    %v1918 = vmax.f32 %v1882, 0.0
    %v1919 = vmax.f32 %v1887, 0.0
    %v1920 = vmax.f32 %v1890, 0.0
    %v1921 = vmax.f32 %v1895, 0.0
    %v1922 = vmax.f32 %v1898, 0.0
    %v1923 = vmax.f32 %v1903, 0.0
    %v1924 = vmax.f32 %v1906, 0.0
    %v1925 = vpack.c.bf16 %v1910, %v1909
    %v1926 = vpack.c.bf16 %v1912, %v1911
    %v1927 = vpack.c.bf16 %v1914, %v1913
    %v1928 = vpack.c.bf16 %v1916, %v1915
    %v1929 = vpack.c.bf16 %v1918, %v1917
    %v1930 = vpack.c.bf16 %v1920, %v1919
    %v1931 = vpack.c.bf16 %v1922, %v1921
    %v1932 = vpack.c.bf16 %v1924, %v1923
    %s1933 = scalar_lea.vmem %s7, 32
    %v1934 = vld [vmem:[%s1933] sm:$0xf]
    %v1935 = vld [vmem:[%s1933 + $0x4] sm:$0xf]
    %v1936 = vld [vmem:[%s1933 + $0x8] sm:$0xf]
    %v1937 = vld [vmem:[%s1933 + $0xc] sm:$0xf]
    %v1938 = vld [vmem:[%s8 + $0x2] sm:$0x1]
    %v1939 = vlaneseq
    %v1940 = vshrl.u32 %v1939, 7
    %v1941 = vsub.s32 0, %v1940
    %v1942 = vrot.slane %v1938, %v1941
    %v1947 = vunpack.c.l.b16 %v1934
    %v1948 = vunpack.c.l.b16 %v1935
    %v1949 = vunpack.c.l.b16 %v1936
    %v1950 = vunpack.c.l.b16 %v1937
    %v1951 = vpack.c.b16 %v1948, %v1947
    %v1952 = vpack.c.b16 %v1950, %v1949
    %v1956 = vsel %vm478, %v1925, 0
    %v1959 = vsel %vm478, %v1926, 0
    %v1962 = vsel %vm478, %v1927, 0
    %v1965 = vsel %vm478, %v1928, 0
    %v1968 = vsel %vm478, %v1929, 0
    %v1971 = vsel %vm478, %v1930, 0
    %v1974 = vsel %vm478, %v1931, 0
    %v1977 = vsel %vm478, %v1932, 0
    %1979 = vmatprep.subr.bf16.mxu0 0
    %1980 = vmatpush1.bf16.msra.mxu0 %v1951
    %1981 = vmatprep.subr.bf16.mxu0 0
    %1982 = vmatpush1.bf16.msra.mxu0 %v1952
    %1983 = vmatprep.subr.bf16.mxu0 0
    %1984 = vmatpush1.bf16.msra.mxu0 0
    %1985 = vmatprep.subr.bf16.mxu0 0
    %1986 = vmatpush1.bf16.msra.mxu0 0
    %1987 = vmatprep.subr.bf16.mxu0 0
    %1988 = vmatpush1.bf16.msra.mxu0 0
    %1989 = vmatprep.subr.bf16.mxu0 0
    %1990 = vmatpush1.bf16.msra.mxu0 0
    %1991 = vmatprep.subr.bf16.mxu0 0
    %1992 = vmatpush1.bf16.msra.mxu0 0
    %1993 = vmatprep.subr.bf16.mxu0 0
    %1994 = vmatpush1.bf16.msra.mxu0 0
    %1995 = vmatprep.subr.bf16.mxu0 0
    %1996 = vmatpush1.bf16.msra.mxu0 0
    %1997 = vmatprep.subr.bf16.mxu0 0
    %1998 = vmatpush1.bf16.msra.mxu0 0
    %1999 = vmatprep.subr.bf16.mxu0 0
    %2000 = vmatpush1.bf16.msra.mxu0 0
    %2001 = vmatprep.subr.bf16.mxu0 0
    %2002 = vmatpush1.bf16.msra.mxu0 0
    %2003 = vmatprep.subr.bf16.mxu0 0
    %2004 = vmatpush1.bf16.msra.mxu0 0
    %2005 = vmatprep.subr.bf16.mxu0 0
    %2006 = vmatpush1.bf16.msra.mxu0 0
    %2007 = vmatprep.subr.bf16.mxu0 0
    %2008 = vmatpush1.bf16.msra.mxu0 0
    %2009 = vmatprep.subr.bf16.mxu0 0
    %2010 = vmatpush1.bf16.msra.mxu0 0
    %2011 = vmatprep.mubr.bf16.mxu0 0
    %2012 = vmatmul.mubr.bf16.gmra.mrb[0].mxu0 %v1956
    %v2013 = vpop.f32.mrb[0].mxu0
    %v2014 = vadd.f32 %v1942, %v2013
    %v2015 = vpop.f32.mrb[0].mxu0
    %v2016 = vpop.f32.mrb[0].mxu0
    %v2017 = vadd.f32 %v1942, %v2016
    %v2018 = vpop.f32.mrb[0].mxu0
    %2019 = vmatprep.mubr.bf16.mxu0 0
    %2020 = vmatmul.mubr.bf16.gmra.mrb[0].mxu0 %v1959
    %v2021 = vpop.f32.mrb[0].mxu0
    %v2022 = vadd.f32 %v1942, %v2021
    %v2023 = vpop.f32.mrb[0].mxu0
    %v2024 = vpop.f32.mrb[0].mxu0
    %v2025 = vadd.f32 %v1942, %v2024
    %v2026 = vpop.f32.mrb[0].mxu0
    %2027 = vmatprep.mubr.bf16.mxu0 0
    %2028 = vmatmul.mubr.bf16.gmra.mrb[0].mxu0 %v1962
    %v2029 = vpop.f32.mrb[0].mxu0
    %v2030 = vadd.f32 %v1942, %v2029
    %v2031 = vpop.f32.mrb[0].mxu0
    %v2032 = vpop.f32.mrb[0].mxu0
    %v2033 = vadd.f32 %v1942, %v2032
    %v2034 = vpop.f32.mrb[0].mxu0
    %2035 = vmatprep.mubr.bf16.mxu0 0
    %2036 = vmatmul.mubr.bf16.gmra.mrb[0].mxu0 %v1965
    %v2037 = vpop.f32.mrb[0].mxu0
    %v2038 = vadd.f32 %v1942, %v2037
    %v2039 = vpop.f32.mrb[0].mxu0
    %v2040 = vpop.f32.mrb[0].mxu0
    %v2041 = vadd.f32 %v1942, %v2040
    %v2042 = vpop.f32.mrb[0].mxu0
    %2043 = vmatprep.mubr.bf16.mxu0 0
    %2044 = vmatmul.mubr.bf16.gmra.mrb[0].mxu0 %v1968
    %v2045 = vpop.f32.mrb[0].mxu0
    %v2046 = vadd.f32 %v1942, %v2045
    %v2047 = vpop.f32.mrb[0].mxu0
    %v2048 = vpop.f32.mrb[0].mxu0
    %v2049 = vadd.f32 %v1942, %v2048
    %v2050 = vpop.f32.mrb[0].mxu0
    %2051 = vmatprep.mubr.bf16.mxu0 0
    %2052 = vmatmul.mubr.bf16.gmra.mrb[0].mxu0 %v1971
    %v2053 = vpop.f32.mrb[0].mxu0
    %v2054 = vadd.f32 %v1942, %v2053
    %v2055 = vpop.f32.mrb[0].mxu0
    %v2056 = vpop.f32.mrb[0].mxu0
    %v2057 = vadd.f32 %v1942, %v2056
    %v2058 = vpop.f32.mrb[0].mxu0
    %2059 = vmatprep.mubr.bf16.mxu0 0
    %2060 = vmatmul.mubr.bf16.gmra.mrb[0].mxu0 %v1974
    %v2061 = vpop.f32.mrb[0].mxu0
    %v2062 = vadd.f32 %v1942, %v2061
    %v2063 = vpop.f32.mrb[0].mxu0
    %v2064 = vpop.f32.mrb[0].mxu0
    %v2065 = vadd.f32 %v1942, %v2064
    %v2066 = vpop.f32.mrb[0].mxu0
    %2067 = vmatprep.mubr.bf16.mxu0 0
    %2068 = vmatmul.mubr.bf16.gmra.mrb[0].mxu0 %v1977
    %v2069 = vpop.f32.mrb[0].mxu0
    %v2070 = vadd.f32 %v1942, %v2069
    %v2071 = vpop.f32.mrb[0].mxu0
    %v2072 = vpop.f32.mrb[0].mxu0
    %v2073 = vadd.f32 %v1942, %v2072
    %v2074 = vpop.f32.mrb[0].mxu0
    %2075 = vdwg.mxu0
    %v2076 = vmax.f32 %v2014, 0.0
    %v2077 = vmax.f32 %v2017, 0.0
    %v2078 = vmax.f32 %v2022, 0.0
    %v2079 = vmax.f32 %v2025, 0.0
    %v2080 = vmax.f32 %v2030, 0.0
    %v2081 = vmax.f32 %v2033, 0.0
    %v2082 = vmax.f32 %v2038, 0.0
    %v2083 = vmax.f32 %v2041, 0.0
    %v2084 = vmax.f32 %v2046, 0.0
    %v2085 = vmax.f32 %v2049, 0.0
    %v2086 = vmax.f32 %v2054, 0.0
    %v2087 = vmax.f32 %v2057, 0.0
    %v2088 = vmax.f32 %v2062, 0.0
    %v2089 = vmax.f32 %v2065, 0.0
    %v2090 = vmax.f32 %v2070, 0.0
    %v2091 = vmax.f32 %v2073, 0.0
    %v2092 = vld [vmem:[%s9 + $0x2] sm:$0x1]
    %v2093 = vlaneseq
    %v2094 = vshrl.u32 %v2093, 7
    %v2095 = vsub.s32 0, %v2094
    %v2096 = vrot.slane %v2092, %v2095
    %v2097 = vmul.f32 %v2076, %v2096
    %v2098 = vmul.f32 %v2077, %v2096
    %v2099 = vmul.f32 %v2078, %v2096
    %v2100 = vmul.f32 %v2079, %v2096
    %v2101 = vmul.f32 %v2080, %v2096
    %v2102 = vmul.f32 %v2081, %v2096
    %v2103 = vmul.f32 %v2082, %v2096
    %v2104 = vmul.f32 %v2083, %v2096
    %v2105 = vmul.f32 %v2084, %v2096
    %v2106 = vmul.f32 %v2085, %v2096
    %v2107 = vmul.f32 %v2086, %v2096
    %v2108 = vmul.f32 %v2087, %v2096
    %v2109 = vmul.f32 %v2088, %v2096
    %v2110 = vmul.f32 %v2089, %v2096
    %v2111 = vmul.f32 %v2090, %v2096
    %v2112 = vmul.f32 %v2091, %v2096
    %v2113 = vsel %vm478, %v2097, 0.0
    %2114 = vadd.xlane.f32.xlu0 %v2113
    %v2115 = vpop.xlane.xlu0 %2114
    %v2116 = vsel %vm478, %v2098, 0.0
    %2117 = vadd.xlane.f32.xlu0 %v2116
    %v2118 = vpop.xlane.xlu0 %2117
    %v2119 = vsel %vm478, %v2099, 0.0
    %2120 = vadd.xlane.f32.xlu0 %v2119
    %v2121 = vpop.xlane.xlu0 %2120
    %v2122 = vsel %vm478, %v2100, 0.0
    %2123 = vadd.xlane.f32.xlu0 %v2122
    %v2124 = vpop.xlane.xlu0 %2123
    %v2125 = vsel %vm478, %v2101, 0.0
    %2126 = vadd.xlane.f32.xlu0 %v2125
    %v2127 = vpop.xlane.xlu0 %2126
    %v2128 = vsel %vm478, %v2102, 0.0
    %2129 = vadd.xlane.f32.xlu0 %v2128
    %v2130 = vpop.xlane.xlu0 %2129
    %v2131 = vsel %vm478, %v2103, 0.0
    %2132 = vadd.xlane.f32.xlu0 %v2131
    %v2133 = vpop.xlane.xlu0 %2132
    %v2134 = vsel %vm478, %v2104, 0.0
    %2135 = vadd.xlane.f32.xlu0 %v2134
    %v2136 = vpop.xlane.xlu0 %2135
    %v2137 = vsel %vm478, %v2105, 0.0
    %2138 = vadd.xlane.f32.xlu0 %v2137
    %v2139 = vpop.xlane.xlu0 %2138
    %v2140 = vsel %vm478, %v2106, 0.0
    %2141 = vadd.xlane.f32.xlu0 %v2140
    %v2142 = vpop.xlane.xlu0 %2141
    %v2143 = vsel %vm478, %v2107, 0.0
    %2144 = vadd.xlane.f32.xlu0 %v2143
    %v2145 = vpop.xlane.xlu0 %2144
    %v2146 = vsel %vm478, %v2108, 0.0
    %2147 = vadd.xlane.f32.xlu0 %v2146
    %v2148 = vpop.xlane.xlu0 %2147
    %v2149 = vsel %vm478, %v2109, 0.0
    %2150 = vadd.xlane.f32.xlu0 %v2149
    %v2151 = vpop.xlane.xlu0 %2150
    %v2152 = vsel %vm478, %v2110, 0.0
    %2153 = vadd.xlane.f32.xlu0 %v2152
    %v2154 = vpop.xlane.xlu0 %2153
    %v2155 = vsel %vm478, %v2111, 0.0
    %2156 = vadd.xlane.f32.xlu0 %v2155
    %v2157 = vpop.xlane.xlu0 %2156
    %v2158 = vsel %vm478, %v2112, 0.0
    %2159 = vadd.xlane.f32.xlu0 %v2158
    %v2160 = vpop.xlane.xlu0 %2159
    %v2161 = vld [vmem:[%s10 + $0x2] sm:$0x1]
    %2163 = vset.pattern.permute.xlu0 0
    %2164 = vperm.xlu0 %2163, %v2161
    %v2165 = vpop.permute.xlu0 %2164
    %v2166 = vlaneseq
    %v2167 = vshrl.u32 %v2166, 7
    %v2168 = vsub.s32 0, %v2167
    %v2169 = vrot.slane %v2165, %v2168
    %v2171 = vadd.f32 %v2115, %v2169
    %v2172 = vadd.f32 %v2118, %v2169
    %v2173 = vadd.f32 %v2121, %v2169
    %v2174 = vadd.f32 %v2124, %v2169
    %v2175 = vadd.f32 %v2127, %v2169
    %v2176 = vadd.f32 %v2130, %v2169
    %v2177 = vadd.f32 %v2133, %v2169
    %v2178 = vadd.f32 %v2136, %v2169
    %v2179 = vadd.f32 %v2139, %v2169
    %v2180 = vadd.f32 %v2142, %v2169
    %v2181 = vadd.f32 %v2145, %v2169
    %v2182 = vadd.f32 %v2148, %v2169
    %v2183 = vadd.f32 %v2151, %v2169
    %v2184 = vadd.f32 %v2154, %v2169
    %v2185 = vadd.f32 %v2157, %v2169
    %v2186 = vadd.f32 %v2160, %v2169
    %2203 = vset.pattern.permute.xlu0 0
    %2204 = vperm.xlu0 %2203, %v2171
    %v2205 = vpop.permute.xlu0 %2204
    %2206 = vset.pattern.permute.xlu0 0
    %2207 = vperm.xlu0 %2206, %v2172
    %v2208 = vpop.permute.xlu0 %2207
    %2209 = vset.pattern.permute.xlu0 0
    %2210 = vperm.xlu0 %2209, %v2173
    %v2211 = vpop.permute.xlu0 %2210
    %2212 = vset.pattern.permute.xlu0 0
    %2213 = vperm.xlu0 %2212, %v2174
    %v2214 = vpop.permute.xlu0 %2213
    %2215 = vset.pattern.permute.xlu0 0
    %2216 = vperm.xlu0 %2215, %v2175
    %v2217 = vpop.permute.xlu0 %2216
    %2218 = vset.pattern.permute.xlu0 0
    %2219 = vperm.xlu0 %2218, %v2176
    %v2220 = vpop.permute.xlu0 %2219
    %2221 = vset.pattern.permute.xlu0 0
    %2222 = vperm.xlu0 %2221, %v2177
    %v2223 = vpop.permute.xlu0 %2222
    %2224 = vset.pattern.permute.xlu0 0
    %2225 = vperm.xlu0 %2224, %v2178
    %v2226 = vpop.permute.xlu0 %2225
    %2227 = vset.pattern.permute.xlu0 0
    %2228 = vperm.xlu0 %2227, %v2179
    %v2229 = vpop.permute.xlu0 %2228
    %2230 = vset.pattern.permute.xlu0 0
    %2231 = vperm.xlu0 %2230, %v2180
    %v2232 = vpop.permute.xlu0 %2231
    %2233 = vset.pattern.permute.xlu0 0
    %2234 = vperm.xlu0 %2233, %v2181
    %v2235 = vpop.permute.xlu0 %2234
    %2236 = vset.pattern.permute.xlu0 0
    %2237 = vperm.xlu0 %2236, %v2182
    %v2238 = vpop.permute.xlu0 %2237
    %2239 = vset.pattern.permute.xlu0 0
    %2240 = vperm.xlu0 %2239, %v2183
    %v2241 = vpop.permute.xlu0 %2240
    %2242 = vset.pattern.permute.xlu0 0
    %2243 = vperm.xlu0 %2242, %v2184
    %v2244 = vpop.permute.xlu0 %2243
    %2245 = vset.pattern.permute.xlu0 0
    %2246 = vperm.xlu0 %2245, %v2185
    %v2247 = vpop.permute.xlu0 %2246
    %2248 = vset.pattern.permute.xlu0 0
    %2249 = vperm.xlu0 %2248, %v2186
    %v2250 = vpop.permute.xlu0 %2249
    %v2251 = vlaneseq
    %v2252 = vshrl.u32 %v2251, 7
    %v2253 = vsub.s32 %v942, %v2252
    %v2254 = vrot.slane %v2205, %v2253
    %v2255 = vlaneseq
    %v2256 = vshrl.u32 %v2255, 7
    %v2257 = vsub.s32 %v947, %v2256
    %v2258 = vrot.slane %v2208, %v2257
    %v2259 = vsel %vm952, %v2258, %v2254
    %v2260 = vlaneseq
    %v2261 = vshrl.u32 %v2260, 7
    %v2262 = vsub.s32 %v954, %v2261
    %v2263 = vrot.slane %v2211, %v2262
    %v2264 = vsel %vm959, %v2263, %v2259
    %v2265 = vlaneseq
    %v2266 = vshrl.u32 %v2265, 7
    %v2267 = vsub.s32 %v961, %v2266
    %v2268 = vrot.slane %v2214, %v2267
    %v2269 = vsel %vm966, %v2268, %v2264
    %v2270 = vlaneseq
    %v2271 = vshrl.u32 %v2270, 7
    %v2272 = vsub.s32 %v968, %v2271
    %v2273 = vrot.slane %v2217, %v2272
    %v2274 = vsel %vm973, %v2273, %v2269
    %v2275 = vlaneseq
    %v2276 = vshrl.u32 %v2275, 7
    %v2277 = vsub.s32 %v975, %v2276
    %v2278 = vrot.slane %v2220, %v2277
    %v2279 = vsel %vm980, %v2278, %v2274
    %v2280 = vlaneseq
    %v2281 = vshrl.u32 %v2280, 7
    %v2282 = vsub.s32 %v982, %v2281
    %v2283 = vrot.slane %v2223, %v2282
    %v2284 = vsel %vm987, %v2283, %v2279
    %v2285 = vlaneseq
    %v2286 = vshrl.u32 %v2285, 7
    %v2287 = vsub.s32 %v989, %v2286
    %v2288 = vrot.slane %v2226, %v2287
    %v2289 = vsel %vm994, %v2288, %v2284
    %v2290 = vlaneseq
    %v2291 = vshrl.u32 %v2290, 7
    %v2292 = vsub.s32 %v996, %v2291
    %v2293 = vrot.slane %v2229, %v2292
    %v2294 = vsel %vm1001, %v2293, %v2289
    %v2295 = vlaneseq
    %v2296 = vshrl.u32 %v2295, 7
    %v2297 = vsub.s32 %v1003, %v2296
    %v2298 = vrot.slane %v2232, %v2297
    %v2299 = vsel %vm1008, %v2298, %v2294
    %v2300 = vlaneseq
    %v2301 = vshrl.u32 %v2300, 7
    %v2302 = vsub.s32 %v1010, %v2301
    %v2303 = vrot.slane %v2235, %v2302
    %v2304 = vsel %vm1015, %v2303, %v2299
    %v2305 = vlaneseq
    %v2306 = vshrl.u32 %v2305, 7
    %v2307 = vsub.s32 %v1017, %v2306
    %v2308 = vrot.slane %v2238, %v2307
    %v2309 = vsel %vm1022, %v2308, %v2304
    %v2310 = vlaneseq
    %v2311 = vshrl.u32 %v2310, 7
    %v2312 = vsub.s32 %v1024, %v2311
    %v2313 = vrot.slane %v2241, %v2312
    %v2314 = vsel %vm1029, %v2313, %v2309
    %v2315 = vlaneseq
    %v2316 = vshrl.u32 %v2315, 7
    %v2317 = vsub.s32 %v1031, %v2316
    %v2318 = vrot.slane %v2244, %v2317
    %v2319 = vsel %vm1036, %v2318, %v2314
    %v2320 = vlaneseq
    %v2321 = vshrl.u32 %v2320, 7
    %v2322 = vsub.s32 %v1038, %v2321
    %v2323 = vrot.slane %v2247, %v2322
    %v2324 = vsel %vm1043, %v2323, %v2319
    %v2325 = vlaneseq
    %v2326 = vshrl.u32 %v2325, 7
    %v2327 = vsub.s32 %v1045, %v2326
    %v2328 = vrot.slane %v2250, %v2327
    %v2329 = vsel %vm1050, %v2328, %v2324
    %2331 = vst [vmem:[#allocation2 + $0x2] sm:$0x1] %v2329
    %v2332 = vld [vmem:[%s4 + $0x3] sm:$0x1]
    %v2333 = vlaneseq
    %v2334 = vshrl.u32 %v2333, 7
    %v2335 = vsub.s32 0, %v2334
    %v2336 = vrot.slane %v2332, %v2335
    %2338 = vrot.lane.b32.xlu0 %v2336, 96
    %v2339 = vpop.permute.xlu0 %2338
    %v2341 = vadd.f32 %v350, %v2339
    %v2342 = vadd.f32 %v353, %v2339
    %v2343 = vadd.f32 %v358, %v2339
    %v2344 = vadd.f32 %v361, %v2339
    %v2345 = vadd.f32 %v366, %v2339
    %v2346 = vadd.f32 %v369, %v2339
    %v2347 = vadd.f32 %v374, %v2339
    %v2348 = vadd.f32 %v377, %v2339
    %v2349 = vadd.f32 %v382, %v2339
    %v2350 = vadd.f32 %v385, %v2339
    %v2351 = vadd.f32 %v390, %v2339
    %v2352 = vadd.f32 %v393, %v2339
    %v2353 = vadd.f32 %v398, %v2339
    %v2354 = vadd.f32 %v401, %v2339
    %v2355 = vadd.f32 %v406, %v2339
    %v2356 = vadd.f32 %v409, %v2339
    %v2357 = vmax.f32 %v2341, 0.0
    %v2358 = vmax.f32 %v2342, 0.0
    %v2359 = vmax.f32 %v2343, 0.0
    %v2360 = vmax.f32 %v2344, 0.0
    %v2361 = vmax.f32 %v2345, 0.0
    %v2362 = vmax.f32 %v2346, 0.0
    %v2363 = vmax.f32 %v2347, 0.0
    %v2364 = vmax.f32 %v2348, 0.0
    %v2365 = vmax.f32 %v2349, 0.0
    %v2366 = vmax.f32 %v2350, 0.0
    %v2367 = vmax.f32 %v2351, 0.0
    %v2368 = vmax.f32 %v2352, 0.0
    %v2369 = vmax.f32 %v2353, 0.0
    %v2370 = vmax.f32 %v2354, 0.0
    %v2371 = vmax.f32 %v2355, 0.0
    %v2372 = vmax.f32 %v2356, 0.0
    %v2373 = vpack.c.bf16 %v2358, %v2357
    %v2374 = vpack.c.bf16 %v2360, %v2359
    %v2375 = vpack.c.bf16 %v2362, %v2361
    %v2376 = vpack.c.bf16 %v2364, %v2363
    %v2377 = vpack.c.bf16 %v2366, %v2365
    %v2378 = vpack.c.bf16 %v2368, %v2367
    %v2379 = vpack.c.bf16 %v2370, %v2369
    %v2380 = vpack.c.bf16 %v2372, %v2371
    %s2381 = scalar_lea.vmem %s5, 48
    %v2382 = vld [vmem:[%s2381] sm:$0xf]
    %v2383 = vld [vmem:[%s2381 + $0x4] sm:$0xf]
    %v2384 = vld [vmem:[%s2381 + $0x8] sm:$0xf]
    %v2385 = vld [vmem:[%s2381 + $0xc] sm:$0xf]
    %v2386 = vld [vmem:[%s6 + $0x3] sm:$0x1]
    %v2387 = vlaneseq
    %v2388 = vshrl.u32 %v2387, 7
    %v2389 = vsub.s32 0, %v2388
    %v2390 = vrot.slane %v2386, %v2389
    %2399 = vrot.lane.b32.xlu0 %v2373, 32
    %v2400 = vpop.permute.xlu0 %2399
    %2401 = vrot.lane.b32.xlu0 %v2374, 32
    %v2402 = vpop.permute.xlu0 %2401
    %2403 = vrot.lane.b32.xlu0 %v2375, 32
    %v2404 = vpop.permute.xlu0 %2403
    %2405 = vrot.lane.b32.xlu0 %v2376, 32
    %v2406 = vpop.permute.xlu0 %2405
    %2407 = vrot.lane.b32.xlu0 %v2377, 32
    %v2408 = vpop.permute.xlu0 %2407
    %2409 = vrot.lane.b32.xlu0 %v2378, 32
    %v2410 = vpop.permute.xlu0 %2409
    %2411 = vrot.lane.b32.xlu0 %v2379, 32
    %v2412 = vpop.permute.xlu0 %2411
    %2413 = vrot.lane.b32.xlu0 %v2380, 32
    %v2414 = vpop.permute.xlu0 %2413
    %v2419 = vunpack.c.l.b16 %v2382
    %v2420 = vunpack.c.l.b16 %v2383
    %v2421 = vunpack.c.l.b16 %v2384
    %v2422 = vunpack.c.l.b16 %v2385
    %v2423 = vpack.c.b16 %v2420, %v2419
    %v2424 = vpack.c.b16 %v2422, %v2421
    %v2428 = vsel %vm478, %v2400, 0
    %v2431 = vsel %vm478, %v2402, 0
    %v2434 = vsel %vm478, %v2404, 0
    %v2437 = vsel %vm478, %v2406, 0
    %v2440 = vsel %vm478, %v2408, 0
    %v2443 = vsel %vm478, %v2410, 0
    %v2446 = vsel %vm478, %v2412, 0
    %v2449 = vsel %vm478, %v2414, 0
    %2451 = vmatprep.subr.bf16.mxu0 0
    %2452 = vmatpush1.bf16.msra.mxu0 %v2423
    %2453 = vmatprep.subr.bf16.mxu0 0
    %2454 = vmatpush1.bf16.msra.mxu0 %v2424
    %2455 = vmatprep.subr.bf16.mxu0 0
    %2456 = vmatpush1.bf16.msra.mxu0 0
    %2457 = vmatprep.subr.bf16.mxu0 0
    %2458 = vmatpush1.bf16.msra.mxu0 0
    %2459 = vmatprep.subr.bf16.mxu0 0
    %2460 = vmatpush1.bf16.msra.mxu0 0
    %2461 = vmatprep.subr.bf16.mxu0 0
    %2462 = vmatpush1.bf16.msra.mxu0 0
    %2463 = vmatprep.subr.bf16.mxu0 0
    %2464 = vmatpush1.bf16.msra.mxu0 0
    %2465 = vmatprep.subr.bf16.mxu0 0
    %2466 = vmatpush1.bf16.msra.mxu0 0
    %2467 = vmatprep.subr.bf16.mxu0 0
    %2468 = vmatpush1.bf16.msra.mxu0 0
    %2469 = vmatprep.subr.bf16.mxu0 0
    %2470 = vmatpush1.bf16.msra.mxu0 0
    %2471 = vmatprep.subr.bf16.mxu0 0
    %2472 = vmatpush1.bf16.msra.mxu0 0
    %2473 = vmatprep.subr.bf16.mxu0 0
    %2474 = vmatpush1.bf16.msra.mxu0 0
    %2475 = vmatprep.subr.bf16.mxu0 0
    %2476 = vmatpush1.bf16.msra.mxu0 0
    %2477 = vmatprep.subr.bf16.mxu0 0
    %2478 = vmatpush1.bf16.msra.mxu0 0
    %2479 = vmatprep.subr.bf16.mxu0 0
    %2480 = vmatpush1.bf16.msra.mxu0 0
    %2481 = vmatprep.subr.bf16.mxu0 0
    %2482 = vmatpush1.bf16.msra.mxu0 0
    %2483 = vmatprep.mubr.bf16.mxu0 0
    %2484 = vmatmul.mubr.bf16.gmra.mrb[0].mxu0 %v2428
    %v2485 = vpop.f32.mrb[0].mxu0
    %v2486 = vadd.f32 %v2390, %v2485
    %v2487 = vpop.f32.mrb[0].mxu0
    %v2488 = vpop.f32.mrb[0].mxu0
    %v2489 = vadd.f32 %v2390, %v2488
    %v2490 = vpop.f32.mrb[0].mxu0
    %2491 = vmatprep.mubr.bf16.mxu0 0
    %2492 = vmatmul.mubr.bf16.gmra.mrb[0].mxu0 %v2431
    %v2493 = vpop.f32.mrb[0].mxu0
    %v2494 = vadd.f32 %v2390, %v2493
    %v2495 = vpop.f32.mrb[0].mxu0
    %v2496 = vpop.f32.mrb[0].mxu0
    %v2497 = vadd.f32 %v2390, %v2496
    %v2498 = vpop.f32.mrb[0].mxu0
    %2499 = vmatprep.mubr.bf16.mxu0 0
    %2500 = vmatmul.mubr.bf16.gmra.mrb[0].mxu0 %v2434
    %v2501 = vpop.f32.mrb[0].mxu0
    %v2502 = vadd.f32 %v2390, %v2501
    %v2503 = vpop.f32.mrb[0].mxu0
    %v2504 = vpop.f32.mrb[0].mxu0
    %v2505 = vadd.f32 %v2390, %v2504
    %v2506 = vpop.f32.mrb[0].mxu0
    %2507 = vmatprep.mubr.bf16.mxu0 0
    %2508 = vmatmul.mubr.bf16.gmra.mrb[0].mxu0 %v2437
    %v2509 = vpop.f32.mrb[0].mxu0
    %v2510 = vadd.f32 %v2390, %v2509
    %v2511 = vpop.f32.mrb[0].mxu0
    %v2512 = vpop.f32.mrb[0].mxu0
    %v2513 = vadd.f32 %v2390, %v2512
    %v2514 = vpop.f32.mrb[0].mxu0
    %2515 = vmatprep.mubr.bf16.mxu0 0
    %2516 = vmatmul.mubr.bf16.gmra.mrb[0].mxu0 %v2440
    %v2517 = vpop.f32.mrb[0].mxu0
    %v2518 = vadd.f32 %v2390, %v2517
    %v2519 = vpop.f32.mrb[0].mxu0
    %v2520 = vpop.f32.mrb[0].mxu0
    %v2521 = vadd.f32 %v2390, %v2520
    %v2522 = vpop.f32.mrb[0].mxu0
    %2523 = vmatprep.mubr.bf16.mxu0 0
    %2524 = vmatmul.mubr.bf16.gmra.mrb[0].mxu0 %v2443
    %v2525 = vpop.f32.mrb[0].mxu0
    %v2526 = vadd.f32 %v2390, %v2525
    %v2527 = vpop.f32.mrb[0].mxu0
    %v2528 = vpop.f32.mrb[0].mxu0
    %v2529 = vadd.f32 %v2390, %v2528
    %v2530 = vpop.f32.mrb[0].mxu0
    %2531 = vmatprep.mubr.bf16.mxu0 0
    %2532 = vmatmul.mubr.bf16.gmra.mrb[0].mxu0 %v2446
    %v2533 = vpop.f32.mrb[0].mxu0
    %v2534 = vadd.f32 %v2390, %v2533
    %v2535 = vpop.f32.mrb[0].mxu0
    %v2536 = vpop.f32.mrb[0].mxu0
    %v2537 = vadd.f32 %v2390, %v2536
    %v2538 = vpop.f32.mrb[0].mxu0
    %2539 = vmatprep.mubr.bf16.mxu0 0
    %2540 = vmatmul.mubr.bf16.gmra.mrb[0].mxu0 %v2449
    %v2541 = vpop.f32.mrb[0].mxu0
    %v2542 = vadd.f32 %v2390, %v2541
    %v2543 = vpop.f32.mrb[0].mxu0
    %v2544 = vpop.f32.mrb[0].mxu0
    %v2545 = vadd.f32 %v2390, %v2544
    %v2546 = vpop.f32.mrb[0].mxu0
    %2547 = vdwg.mxu0
    %v2548 = vmax.f32 %v2486, 0.0
    %v2549 = vmax.f32 %v2489, 0.0
    %v2550 = vmax.f32 %v2494, 0.0
    %v2551 = vmax.f32 %v2497, 0.0
    %v2552 = vmax.f32 %v2502, 0.0
    %v2553 = vmax.f32 %v2505, 0.0
    %v2554 = vmax.f32 %v2510, 0.0
    %v2555 = vmax.f32 %v2513, 0.0
    %v2556 = vmax.f32 %v2518, 0.0
    %v2557 = vmax.f32 %v2521, 0.0
    %v2558 = vmax.f32 %v2526, 0.0
    %v2559 = vmax.f32 %v2529, 0.0
    %v2560 = vmax.f32 %v2534, 0.0
    %v2561 = vmax.f32 %v2537, 0.0
    %v2562 = vmax.f32 %v2542, 0.0
    %v2563 = vmax.f32 %v2545, 0.0
    %v2564 = vpack.c.bf16 %v2549, %v2548
    %v2565 = vpack.c.bf16 %v2551, %v2550
    %v2566 = vpack.c.bf16 %v2553, %v2552
    %v2567 = vpack.c.bf16 %v2555, %v2554
    %v2568 = vpack.c.bf16 %v2557, %v2556
    %v2569 = vpack.c.bf16 %v2559, %v2558
    %v2570 = vpack.c.bf16 %v2561, %v2560
    %v2571 = vpack.c.bf16 %v2563, %v2562
    %s2572 = scalar_lea.vmem %s7, 48
    %v2573 = vld [vmem:[%s2572] sm:$0xf]
    %v2574 = vld [vmem:[%s2572 + $0x4] sm:$0xf]
    %v2575 = vld [vmem:[%s2572 + $0x8] sm:$0xf]
    %v2576 = vld [vmem:[%s2572 + $0xc] sm:$0xf]
    %v2577 = vld [vmem:[%s8 + $0x3] sm:$0x1]
    %v2578 = vlaneseq
    %v2579 = vshrl.u32 %v2578, 7
    %v2580 = vsub.s32 0, %v2579
    %v2581 = vrot.slane %v2577, %v2580
    %v2586 = vunpack.c.l.b16 %v2573
    %v2587 = vunpack.c.l.b16 %v2574
    %v2588 = vunpack.c.l.b16 %v2575
    %v2589 = vunpack.c.l.b16 %v2576
    %v2590 = vpack.c.b16 %v2587, %v2586
    %v2591 = vpack.c.b16 %v2589, %v2588
    %v2595 = vsel %vm478, %v2564, 0
    %v2598 = vsel %vm478, %v2565, 0
    %v2601 = vsel %vm478, %v2566, 0
    %v2604 = vsel %vm478, %v2567, 0
    %v2607 = vsel %vm478, %v2568, 0
    %v2610 = vsel %vm478, %v2569, 0
    %v2613 = vsel %vm478, %v2570, 0
    %v2616 = vsel %vm478, %v2571, 0
    %2618 = vmatprep.subr.bf16.mxu0 0
    %2619 = vmatpush1.bf16.msra.mxu0 %v2590
    %2620 = vmatprep.subr.bf16.mxu0 0
    %2621 = vmatpush1.bf16.msra.mxu0 %v2591
    %2622 = vmatprep.subr.bf16.mxu0 0
    %2623 = vmatpush1.bf16.msra.mxu0 0
    %2624 = vmatprep.subr.bf16.mxu0 0
    %2625 = vmatpush1.bf16.msra.mxu0 0
    %2626 = vmatprep.subr.bf16.mxu0 0
    %2627 = vmatpush1.bf16.msra.mxu0 0
    %2628 = vmatprep.subr.bf16.mxu0 0
    %2629 = vmatpush1.bf16.msra.mxu0 0
    %2630 = vmatprep.subr.bf16.mxu0 0
    %2631 = vmatpush1.bf16.msra.mxu0 0
    %2632 = vmatprep.subr.bf16.mxu0 0
    %2633 = vmatpush1.bf16.msra.mxu0 0
    %2634 = vmatprep.subr.bf16.mxu0 0
    %2635 = vmatpush1.bf16.msra.mxu0 0
    %2636 = vmatprep.subr.bf16.mxu0 0
    %2637 = vmatpush1.bf16.msra.mxu0 0
    %2638 = vmatprep.subr.bf16.mxu0 0
    %2639 = vmatpush1.bf16.msra.mxu0 0
    %2640 = vmatprep.subr.bf16.mxu0 0
    %2641 = vmatpush1.bf16.msra.mxu0 0
    %2642 = vmatprep.subr.bf16.mxu0 0
    %2643 = vmatpush1.bf16.msra.mxu0 0
    %2644 = vmatprep.subr.bf16.mxu0 0
    %2645 = vmatpush1.bf16.msra.mxu0 0
    %2646 = vmatprep.subr.bf16.mxu0 0
    %2647 = vmatpush1.bf16.msra.mxu0 0
    %2648 = vmatprep.subr.bf16.mxu0 0
    %2649 = vmatpush1.bf16.msra.mxu0 0
    %2650 = vmatprep.mubr.bf16.mxu0 0
    %2651 = vmatmul.mubr.bf16.gmra.mrb[0].mxu0 %v2595
    %v2652 = vpop.f32.mrb[0].mxu0
    %v2653 = vadd.f32 %v2581, %v2652
    %v2654 = vpop.f32.mrb[0].mxu0
    %v2655 = vpop.f32.mrb[0].mxu0
    %v2656 = vadd.f32 %v2581, %v2655
    %v2657 = vpop.f32.mrb[0].mxu0
    %2658 = vmatprep.mubr.bf16.mxu0 0
    %2659 = vmatmul.mubr.bf16.gmra.mrb[0].mxu0 %v2598
    %v2660 = vpop.f32.mrb[0].mxu0
    %v2661 = vadd.f32 %v2581, %v2660
    %v2662 = vpop.f32.mrb[0].mxu0
    %v2663 = vpop.f32.mrb[0].mxu0
    %v2664 = vadd.f32 %v2581, %v2663
    %v2665 = vpop.f32.mrb[0].mxu0
    %2666 = vmatprep.mubr.bf16.mxu0 0
    %2667 = vmatmul.mubr.bf16.gmra.mrb[0].mxu0 %v2601
    %v2668 = vpop.f32.mrb[0].mxu0
    %v2669 = vadd.f32 %v2581, %v2668
    %v2670 = vpop.f32.mrb[0].mxu0
    %v2671 = vpop.f32.mrb[0].mxu0
    %v2672 = vadd.f32 %v2581, %v2671
    %v2673 = vpop.f32.mrb[0].mxu0
    %2674 = vmatprep.mubr.bf16.mxu0 0
    %2675 = vmatmul.mubr.bf16.gmra.mrb[0].mxu0 %v2604
    %v2676 = vpop.f32.mrb[0].mxu0
    %v2677 = vadd.f32 %v2581, %v2676
    %v2678 = vpop.f32.mrb[0].mxu0
    %v2679 = vpop.f32.mrb[0].mxu0
    %v2680 = vadd.f32 %v2581, %v2679
    %v2681 = vpop.f32.mrb[0].mxu0
    %2682 = vmatprep.mubr.bf16.mxu0 0
    %2683 = vmatmul.mubr.bf16.gmra.mrb[0].mxu0 %v2607
    %v2684 = vpop.f32.mrb[0].mxu0
    %v2685 = vadd.f32 %v2581, %v2684
    %v2686 = vpop.f32.mrb[0].mxu0
    %v2687 = vpop.f32.mrb[0].mxu0
    %v2688 = vadd.f32 %v2581, %v2687
    %v2689 = vpop.f32.mrb[0].mxu0
    %2690 = vmatprep.mubr.bf16.mxu0 0
    %2691 = vmatmul.mubr.bf16.gmra.mrb[0].mxu0 %v2610
    %v2692 = vpop.f32.mrb[0].mxu0
    %v2693 = vadd.f32 %v2581, %v2692
    %v2694 = vpop.f32.mrb[0].mxu0
    %v2695 = vpop.f32.mrb[0].mxu0
    %v2696 = vadd.f32 %v2581, %v2695
    %v2697 = vpop.f32.mrb[0].mxu0
    %2698 = vmatprep.mubr.bf16.mxu0 0
    %2699 = vmatmul.mubr.bf16.gmra.mrb[0].mxu0 %v2613
    %v2700 = vpop.f32.mrb[0].mxu0
    %v2701 = vadd.f32 %v2581, %v2700
    %v2702 = vpop.f32.mrb[0].mxu0
    %v2703 = vpop.f32.mrb[0].mxu0
    %v2704 = vadd.f32 %v2581, %v2703
    %v2705 = vpop.f32.mrb[0].mxu0
    %2706 = vmatprep.mubr.bf16.mxu0 0
    %2707 = vmatmul.mubr.bf16.gmra.mrb[0].mxu0 %v2616
    %v2708 = vpop.f32.mrb[0].mxu0
    %v2709 = vadd.f32 %v2581, %v2708
    %v2710 = vpop.f32.mrb[0].mxu0
    %v2711 = vpop.f32.mrb[0].mxu0
    %v2712 = vadd.f32 %v2581, %v2711
    %v2713 = vpop.f32.mrb[0].mxu0
    %2714 = vdwg.mxu0
    %v2715 = vmax.f32 %v2653, 0.0
    %v2716 = vmax.f32 %v2656, 0.0
    %v2717 = vmax.f32 %v2661, 0.0
    %v2718 = vmax.f32 %v2664, 0.0
    %v2719 = vmax.f32 %v2669, 0.0
    %v2720 = vmax.f32 %v2672, 0.0
    %v2721 = vmax.f32 %v2677, 0.0
    %v2722 = vmax.f32 %v2680, 0.0
    %v2723 = vmax.f32 %v2685, 0.0
    %v2724 = vmax.f32 %v2688, 0.0
    %v2725 = vmax.f32 %v2693, 0.0
    %v2726 = vmax.f32 %v2696, 0.0
    %v2727 = vmax.f32 %v2701, 0.0
    %v2728 = vmax.f32 %v2704, 0.0
    %v2729 = vmax.f32 %v2709, 0.0
    %v2730 = vmax.f32 %v2712, 0.0
    %v2731 = vld [vmem:[%s9 + $0x3] sm:$0x1]
    %v2732 = vlaneseq
    %v2733 = vshrl.u32 %v2732, 7
    %v2734 = vsub.s32 0, %v2733
    %v2735 = vrot.slane %v2731, %v2734
    %v2736 = vmul.f32 %v2715, %v2735
    %v2737 = vmul.f32 %v2716, %v2735
    %v2738 = vmul.f32 %v2717, %v2735
    %v2739 = vmul.f32 %v2718, %v2735
    %v2740 = vmul.f32 %v2719, %v2735
    %v2741 = vmul.f32 %v2720, %v2735
    %v2742 = vmul.f32 %v2721, %v2735
    %v2743 = vmul.f32 %v2722, %v2735
    %v2744 = vmul.f32 %v2723, %v2735
    %v2745 = vmul.f32 %v2724, %v2735
    %v2746 = vmul.f32 %v2725, %v2735
    %v2747 = vmul.f32 %v2726, %v2735
    %v2748 = vmul.f32 %v2727, %v2735
    %v2749 = vmul.f32 %v2728, %v2735
    %v2750 = vmul.f32 %v2729, %v2735
    %v2751 = vmul.f32 %v2730, %v2735
    %v2752 = vsel %vm478, %v2736, 0.0
    %2753 = vadd.xlane.f32.xlu0 %v2752
    %v2754 = vpop.xlane.xlu0 %2753
    %v2755 = vsel %vm478, %v2737, 0.0
    %2756 = vadd.xlane.f32.xlu0 %v2755
    %v2757 = vpop.xlane.xlu0 %2756
    %v2758 = vsel %vm478, %v2738, 0.0
    %2759 = vadd.xlane.f32.xlu0 %v2758
    %v2760 = vpop.xlane.xlu0 %2759
    %v2761 = vsel %vm478, %v2739, 0.0
    %2762 = vadd.xlane.f32.xlu0 %v2761
    %v2763 = vpop.xlane.xlu0 %2762
    %v2764 = vsel %vm478, %v2740, 0.0
    %2765 = vadd.xlane.f32.xlu0 %v2764
    %v2766 = vpop.xlane.xlu0 %2765
    %v2767 = vsel %vm478, %v2741, 0.0
    %2768 = vadd.xlane.f32.xlu0 %v2767
    %v2769 = vpop.xlane.xlu0 %2768
    %v2770 = vsel %vm478, %v2742, 0.0
    %2771 = vadd.xlane.f32.xlu0 %v2770
    %v2772 = vpop.xlane.xlu0 %2771
    %v2773 = vsel %vm478, %v2743, 0.0
    %2774 = vadd.xlane.f32.xlu0 %v2773
    %v2775 = vpop.xlane.xlu0 %2774
    %v2776 = vsel %vm478, %v2744, 0.0
    %2777 = vadd.xlane.f32.xlu0 %v2776
    %v2778 = vpop.xlane.xlu0 %2777
    %v2779 = vsel %vm478, %v2745, 0.0
    %2780 = vadd.xlane.f32.xlu0 %v2779
    %v2781 = vpop.xlane.xlu0 %2780
    %v2782 = vsel %vm478, %v2746, 0.0
    %2783 = vadd.xlane.f32.xlu0 %v2782
    %v2784 = vpop.xlane.xlu0 %2783
    %v2785 = vsel %vm478, %v2747, 0.0
    %2786 = vadd.xlane.f32.xlu0 %v2785
    %v2787 = vpop.xlane.xlu0 %2786
    %v2788 = vsel %vm478, %v2748, 0.0
    %2789 = vadd.xlane.f32.xlu0 %v2788
    %v2790 = vpop.xlane.xlu0 %2789
    %v2791 = vsel %vm478, %v2749, 0.0
    %2792 = vadd.xlane.f32.xlu0 %v2791
    %v2793 = vpop.xlane.xlu0 %2792
    %v2794 = vsel %vm478, %v2750, 0.0
    %2795 = vadd.xlane.f32.xlu0 %v2794
    %v2796 = vpop.xlane.xlu0 %2795
    %v2797 = vsel %vm478, %v2751, 0.0
    %2798 = vadd.xlane.f32.xlu0 %v2797
    %v2799 = vpop.xlane.xlu0 %2798
    %v2800 = vld [vmem:[%s10 + $0x3] sm:$0x1]
    %2802 = vset.pattern.permute.xlu0 0
    %2803 = vperm.xlu0 %2802, %v2800
    %v2804 = vpop.permute.xlu0 %2803
    %v2805 = vlaneseq
    %v2806 = vshrl.u32 %v2805, 7
    %v2807 = vsub.s32 0, %v2806
    %v2808 = vrot.slane %v2804, %v2807
    %v2810 = vadd.f32 %v2754, %v2808
    %v2811 = vadd.f32 %v2757, %v2808
    %v2812 = vadd.f32 %v2760, %v2808
    %v2813 = vadd.f32 %v2763, %v2808
    %v2814 = vadd.f32 %v2766, %v2808
    %v2815 = vadd.f32 %v2769, %v2808
    %v2816 = vadd.f32 %v2772, %v2808
    %v2817 = vadd.f32 %v2775, %v2808
    %v2818 = vadd.f32 %v2778, %v2808
    %v2819 = vadd.f32 %v2781, %v2808
    %v2820 = vadd.f32 %v2784, %v2808
    %v2821 = vadd.f32 %v2787, %v2808
    %v2822 = vadd.f32 %v2790, %v2808
    %v2823 = vadd.f32 %v2793, %v2808
    %v2824 = vadd.f32 %v2796, %v2808
    %v2825 = vadd.f32 %v2799, %v2808
    %2842 = vset.pattern.permute.xlu0 0
    %2843 = vperm.xlu0 %2842, %v2810
    %v2844 = vpop.permute.xlu0 %2843
    %2845 = vset.pattern.permute.xlu0 0
    %2846 = vperm.xlu0 %2845, %v2811
    %v2847 = vpop.permute.xlu0 %2846
    %2848 = vset.pattern.permute.xlu0 0
    %2849 = vperm.xlu0 %2848, %v2812
    %v2850 = vpop.permute.xlu0 %2849
    %2851 = vset.pattern.permute.xlu0 0
    %2852 = vperm.xlu0 %2851, %v2813
    %v2853 = vpop.permute.xlu0 %2852
    %2854 = vset.pattern.permute.xlu0 0
    %2855 = vperm.xlu0 %2854, %v2814
    %v2856 = vpop.permute.xlu0 %2855
    %2857 = vset.pattern.permute.xlu0 0
    %2858 = vperm.xlu0 %2857, %v2815
    %v2859 = vpop.permute.xlu0 %2858
    %2860 = vset.pattern.permute.xlu0 0
    %2861 = vperm.xlu0 %2860, %v2816
    %v2862 = vpop.permute.xlu0 %2861
    %2863 = vset.pattern.permute.xlu0 0
    %2864 = vperm.xlu0 %2863, %v2817
    %v2865 = vpop.permute.xlu0 %2864
    %2866 = vset.pattern.permute.xlu0 0
    %2867 = vperm.xlu0 %2866, %v2818
    %v2868 = vpop.permute.xlu0 %2867
    %2869 = vset.pattern.permute.xlu0 0
    %2870 = vperm.xlu0 %2869, %v2819
    %v2871 = vpop.permute.xlu0 %2870
    %2872 = vset.pattern.permute.xlu0 0
    %2873 = vperm.xlu0 %2872, %v2820
    %v2874 = vpop.permute.xlu0 %2873
    %2875 = vset.pattern.permute.xlu0 0
    %2876 = vperm.xlu0 %2875, %v2821
    %v2877 = vpop.permute.xlu0 %2876
    %2878 = vset.pattern.permute.xlu0 0
    %2879 = vperm.xlu0 %2878, %v2822
    %v2880 = vpop.permute.xlu0 %2879
    %2881 = vset.pattern.permute.xlu0 0
    %2882 = vperm.xlu0 %2881, %v2823
    %v2883 = vpop.permute.xlu0 %2882
    %2884 = vset.pattern.permute.xlu0 0
    %2885 = vperm.xlu0 %2884, %v2824
    %v2886 = vpop.permute.xlu0 %2885
    %2887 = vset.pattern.permute.xlu0 0
    %2888 = vperm.xlu0 %2887, %v2825
    %v2889 = vpop.permute.xlu0 %2888
    %v2890 = vlaneseq
    %v2891 = vshrl.u32 %v2890, 7
    %v2892 = vsub.s32 %v942, %v2891
    %v2893 = vrot.slane %v2844, %v2892
    %v2894 = vlaneseq
    %v2895 = vshrl.u32 %v2894, 7
    %v2896 = vsub.s32 %v947, %v2895
    %v2897 = vrot.slane %v2847, %v2896
    %v2898 = vsel %vm952, %v2897, %v2893
    %v2899 = vlaneseq
    %v2900 = vshrl.u32 %v2899, 7
    %v2901 = vsub.s32 %v954, %v2900
    %v2902 = vrot.slane %v2850, %v2901
    %v2903 = vsel %vm959, %v2902, %v2898
    %v2904 = vlaneseq
    %v2905 = vshrl.u32 %v2904, 7
    %v2906 = vsub.s32 %v961, %v2905
    %v2907 = vrot.slane %v2853, %v2906
    %v2908 = vsel %vm966, %v2907, %v2903
    %v2909 = vlaneseq
    %v2910 = vshrl.u32 %v2909, 7
    %v2911 = vsub.s32 %v968, %v2910
    %v2912 = vrot.slane %v2856, %v2911
    %v2913 = vsel %vm973, %v2912, %v2908
    %v2914 = vlaneseq
    %v2915 = vshrl.u32 %v2914, 7
    %v2916 = vsub.s32 %v975, %v2915
    %v2917 = vrot.slane %v2859, %v2916
    %v2918 = vsel %vm980, %v2917, %v2913
    %v2919 = vlaneseq
    %v2920 = vshrl.u32 %v2919, 7
    %v2921 = vsub.s32 %v982, %v2920
    %v2922 = vrot.slane %v2862, %v2921
    %v2923 = vsel %vm987, %v2922, %v2918
    %v2924 = vlaneseq
    %v2925 = vshrl.u32 %v2924, 7
    %v2926 = vsub.s32 %v989, %v2925
    %v2927 = vrot.slane %v2865, %v2926
    %v2928 = vsel %vm994, %v2927, %v2923
    %v2929 = vlaneseq
    %v2930 = vshrl.u32 %v2929, 7
    %v2931 = vsub.s32 %v996, %v2930
    %v2932 = vrot.slane %v2868, %v2931
    %v2933 = vsel %vm1001, %v2932, %v2928
    %v2934 = vlaneseq
    %v2935 = vshrl.u32 %v2934, 7
    %v2936 = vsub.s32 %v1003, %v2935
    %v2937 = vrot.slane %v2871, %v2936
    %v2938 = vsel %vm1008, %v2937, %v2933
    %v2939 = vlaneseq
    %v2940 = vshrl.u32 %v2939, 7
    %v2941 = vsub.s32 %v1010, %v2940
    %v2942 = vrot.slane %v2874, %v2941
    %v2943 = vsel %vm1015, %v2942, %v2938
    %v2944 = vlaneseq
    %v2945 = vshrl.u32 %v2944, 7
    %v2946 = vsub.s32 %v1017, %v2945
    %v2947 = vrot.slane %v2877, %v2946
    %v2948 = vsel %vm1022, %v2947, %v2943
    %v2949 = vlaneseq
    %v2950 = vshrl.u32 %v2949, 7
    %v2951 = vsub.s32 %v1024, %v2950
    %v2952 = vrot.slane %v2880, %v2951
    %v2953 = vsel %vm1029, %v2952, %v2948
    %v2954 = vlaneseq
    %v2955 = vshrl.u32 %v2954, 7
    %v2956 = vsub.s32 %v1031, %v2955
    %v2957 = vrot.slane %v2883, %v2956
    %v2958 = vsel %vm1036, %v2957, %v2953
    %v2959 = vlaneseq
    %v2960 = vshrl.u32 %v2959, 7
    %v2961 = vsub.s32 %v1038, %v2960
    %v2962 = vrot.slane %v2886, %v2961
    %v2963 = vsel %vm1043, %v2962, %v2958
    %v2964 = vlaneseq
    %v2965 = vshrl.u32 %v2964, 7
    %v2966 = vsub.s32 %v1045, %v2965
    %v2967 = vrot.slane %v2889, %v2966
    %v2968 = vsel %vm1050, %v2967, %v2963
    %2970 = vst [vmem:[#allocation2 + $0x3] sm:$0x1] %v2968
    // Predicated region
    $region46: #{tpu_custom_call.1} parent=1 // pred_check
      _
    $region47: #{tpu_custom_call.1} parent=1 // pred_check_branch
      %2972 = sbr.rel (0) target = $region49
    $region48: #{tpu_custom_call.1} parent=1 // pred_region
      %s2974 = ssub.s32 64, 64
      %2975 = vsyncadd [#allocation3], %s2974
      %s2977 = sshll.u32 [#allocation2], 4
      %s2978 = int_to_ptr.vmem [resolvable:$true] %s2977
      %2980 = dma.vmem_to_hbm [thread:$0]  %s2978, 64, %s11, [#allocation3]
    $region49: #{tpu_custom_call.1} parent=1 // pred_fallthru
      _
    // Predicated region
    $region50: #{tpu_custom_call.1} parent=1 // pred_check
      _
    $region51: #{tpu_custom_call.1} parent=1 // pred_check_branch
      %2982 = sbr.rel (0) target = $region53
    $region52: #{tpu_custom_call.1} parent=1 // pred_region
      %2983 = dma.done [#allocation3], 64
    $region53: #{tpu_custom_call.1} parent=1 // pred_fallthru
      _
    %2984 = vsyncpa [#allocation3], 1

</llo_original>
